<compile_context>
chip_gen: v6e
topology: v6e:2x2x1
jax: 0.10.0
libtpu: 0.0.40
codegen_flags: <defaults>
</compile_context>

<pallas_src>
import functools
import math

import jax
import jax.numpy as jnp
from jax import lax
from jax.experimental import pallas as pl
from jax.experimental.pallas import tpu as pltpu

LN_EPS = 1e-5                 # torch.nn.LayerNorm default
CDT = jnp.bfloat16            # MXU operand dtype (accumulation stays f32)
NEG_INF = -1e30               # additive key mask for padded rows


def _vmem_limit_bytes():
    """Generation-aware scoped-VMEM budget (~75% of physical, capped)."""
    cap = 128 * 1024 * 1024
    try:
        info = pltpu.get_tpu_info()
        cap = int(getattr(info, "vmem_capacity_bytes", cap))
    except Exception:
        pass
    return min((cap * 3) // 4, 112 * 1024 * 1024)   # 96 MiB v5e/v6e, 48 MiB v7x


# ----------------------------------------------------------------------------
# in-kernel helpers
# ----------------------------------------------------------------------------
def _layernorm(x, g, b):
    """LayerNorm over the last axis in float32 (matches the fp32-upcasting
    LayerNorm subclass in the PyTorch module)."""
    x32 = x.astype(jnp.float32)
    mu = jnp.mean(x32, axis=-1, keepdims=True)
    var = jnp.mean((x32 - mu) ** 2, axis=-1, keepdims=True)
    y = (x32 - mu) * lax.rsqrt(var + LN_EPS)
    return y * g.astype(jnp.float32) + b.astype(jnp.float32)


# ----------------------------------------------------------------------------
# Pallas kernels
# ----------------------------------------------------------------------------
def embed_prep_kernel(p_ref, w_ref, cls_ref, pos_cls_ref, pos_pat_ref,
                      g_ref, b_ref, o_ref, *, n_patch, seq_len, pad_len):
    """Patch embedding (Conv2d k=s=patch, no bias) + CLS prepend + positional
    embedding + ln_pre.  One LayerNorm over all Bt*N patch rows and a single
    aligned full-slab store."""
    N, L, Lp = n_patch, seq_len, pad_len
    Bt = p_ref.shape[0] // N
    D = w_ref.shape[1]

    emb = jnp.dot(p_ref[...].astype(CDT), w_ref[...],
                  preferred_element_type=jnp.float32)                 # [Bt*N, D]
    pos = jnp.tile(pos_pat_ref[...].astype(jnp.float32), (Bt, 1))     # [Bt*N, D]
    g = g_ref[...]
    b = b_ref[...]
    rows = _layernorm(emb + pos, g, b).astype(o_ref.dtype)            # [Bt*N, D]
    cls_row = _layernorm(
        cls_ref[...].astype(jnp.float32) + pos_cls_ref[...].astype(jnp.float32),
        g, b).astype(o_ref.dtype)                                     # [1, D]

    pad = jnp.zeros((Lp - L, D), o_ref.dtype) if Lp > L else None
    pieces = []
    for bi in range(Bt):
        pieces.append(cls_row)
        pieces.append(rows[bi * N:(bi + 1) * N, :])
        if pad is not None:
            pieces.append(pad)
    o_ref[...] = jnp.concatenate(pieces, axis=0)                      # one store


def transformer_kernel(x_ref, ln1_g, ln1_b, w_qkv, b_qkv, w_out, b_out,
                       ln2_g, ln2_b, w_fc, b_fc, w_pr, b_pr, lnf_g, lnf_b,
                       o_ref, qkv_sc, attn_sc,
                       *, n_head, seq_len, pad_len, mlp_chunk):
    """All residual attention blocks fused: grid axis 1 walks the layers while
    the residual slab stays resident in the (revisited) output window."""
    l = pl.program_id(1)
    n_layers = pl.num_programs(1)
    L, Lp, H = seq_len, pad_len, n_head
    M, D = o_ref.shape
    Bt = M // Lp
    dh = D // H
    scale = dh ** -0.5

    # layer 0: initialize the resident residual slab from the embed output
    @pl.when(l == 0)
    def _():
        o_ref[...] = x_ref[...]

    x = o_ref[...].astype(jnp.float32)                                # [M, D]

    # ---- attention: LN1 -> QKV (full-slab, deep-M matmul into scratch) ----
    h1 = _layernorm(x, ln1_g[...], ln1_b[...])
    qkv_sc[...] = (jnp.dot(h1.astype(CDT), w_qkv[...],
                           preferred_element_type=jnp.float32)
                   + b_qkv[...].astype(jnp.float32))                  # [M, 3D]

    col = lax.broadcasted_iota(jnp.int32, (1, Lp), 1)
    key_mask = jnp.where(col < L, 0.0, NEG_INF).astype(jnp.float32)   # [1, Lp]
    w_out_v = w_out[...]
    b_out_v = b_out[...].astype(jnp.float32)

    def attn_body(bi, carry):
        r0 = pl.multiple_of(bi * Lp, 8)
        qkv_b = qkv_sc[pl.ds(r0, Lp), :]                              # [Lp, 3D]
        q = qkv_b[:, 0:D] * scale
        k = qkv_b[:, D:2 * D]
        v = qkv_b[:, 2 * D:3 * D]
        parts = []
        for hd in range(H):                                           # small static loop
            c = slice(hd * dh, (hd + 1) * dh)
            s = lax.dot_general(q[:, c].astype(CDT), k[:, c].astype(CDT),
                                (((1,), (1,)), ((), ())),
                                preferred_element_type=jnp.float32)   # [Lp, Lp]
            s = s + key_mask
            s = s - jnp.max(s, axis=-1, keepdims=True)
            e = jnp.exp(s)
            p = e * pl.reciprocal(jnp.sum(e, axis=-1, keepdims=True), approx=True)
            parts.append(jnp.dot(p.astype(CDT), v[:, c].astype(CDT),
                                 preferred_element_type=jnp.float32))  # [Lp, dh]
        ctx = jnp.concatenate(parts, axis=-1)                         # [Lp, D] lane-dense
        attn_sc[pl.ds(r0, Lp), :] = (
            jnp.dot(ctx.astype(CDT), w_out_v,                         # D-deep out-proj
                    preferred_element_type=jnp.float32) + b_out_v)
        return carry

    lax.fori_loop(0, Bt, attn_body, 0)

    x = x + attn_sc[...]                                              # post-attn residual

    # ---- MLP: c_fc -> QuickGELU -> c_proj, hidden dim tiled ----
    h2 = _layernorm(x, ln2_g[...], ln2_b[...]).astype(CDT)
    d4 = w_fc.shape[1]
    for c0 in range(0, d4, mlp_chunk):
        f = (jnp.dot(h2, w_fc[:, c0:c0 + mlp_chunk],
                     preferred_element_type=jnp.float32)
             + b_fc[:, c0:c0 + mlp_chunk].astype(jnp.float32))        # [M, chunk]
        f = f * jax.nn.sigmoid(1.702 * f)                             # QuickGELU (f32)
        x = x + jnp.dot(f.astype(CDT), w_pr[c0:c0 + mlp_chunk, :],
                        preferred_element_type=jnp.float32)
    x = x + b_pr[...].astype(jnp.float32)

    # ---- write residual back; fuse ln_post on the last layer ----
    @pl.when(l < n_layers - 1)
    def _():
        o_ref[...] = x.astype(o_ref.dtype)

    @pl.when(l == n_layers - 1)
    def _():
        o_ref[...] = _layernorm(x, lnf_g[...], lnf_b[...]).astype(o_ref.dtype)


# ----------------------------------------------------------------------------
# pallas_call wrappers
# ----------------------------------------------------------------------------
def _const_spec(arr):
    nd = arr.ndim
    return pl.BlockSpec(arr.shape, lambda *idx, _nd=nd: (0,) * _nd)


def _layer_spec(arr):
    """Stacked-per-layer array: squeeze the layer dim, index it by grid axis 1."""
    tail = arr.shape[1:]
    n = len(tail)
    return pl.BlockSpec((None,) + tail, lambda b, l, _n=n: (l,) + (0,) * _n)


def embed_prep(patches2d, conv_w, cls_emb, pos_cls, pos_pat, ln_g, ln_b, *,
               batch, batch_tile, n_patch, seq_len, pad_len, vmem_limit):
    _, K = patches2d.shape
    D = conv_w.shape[1]
    Bt = batch_tile
    kern = functools.partial(embed_prep_kernel, n_patch=n_patch,
                             seq_len=seq_len, pad_len=pad_len)
    return pl.pallas_call(
        kern,
        out_shape=jax.ShapeDtypeStruct((batch * pad_len, D), jnp.float32),
        grid=(batch // Bt,),
        in_specs=[pl.BlockSpec((Bt * n_patch, K), lambda i: (i, 0))]
        + [_const_spec(a) for a in (conv_w, cls_emb, pos_cls, pos_pat, ln_g, ln_b)],
        out_specs=pl.BlockSpec((Bt * pad_len, D), lambda i: (i, 0)),
        compiler_params=pltpu.CompilerParams(
            dimension_semantics=("parallel",), vmem_limit_bytes=vmem_limit),
    )(patches2d, conv_w, cls_emb, pos_cls, pos_pat, ln_g, ln_b)


def transformer_fused(x2d, lw, lnf_g, lnf_b, *, n_head, batch, batch_tile,
                      seq_len, pad_len, vmem_limit):
    M, D = x2d.shape
    Bt = batch_tile
    n_layers = lw["w_qkv"].shape[0]
    d4 = lw["w_fc"].shape[2]
    mlp_chunk = 512 if (d4 > 512 and d4 % 512 == 0) else d4
    kern = functools.partial(transformer_kernel, n_head=n_head, seq_len=seq_len,
                             pad_len=pad_len, mlp_chunk=mlp_chunk)
    layer_inputs = [lw["ln1_g"], lw["ln1_b"], lw["w_qkv"], lw["b_qkv"],
                    lw["w_out"], lw["b_out"], lw["ln2_g"], lw["ln2_b"],
                    lw["w_fc"], lw["b_fc"], lw["w_pr"], lw["b_pr"]]
    inputs = [x2d] + layer_inputs + [lnf_g, lnf_b]
    in_specs = ([pl.BlockSpec((Bt * pad_len, D), lambda b, l: (b, 0))]
                + [_layer_spec(a) for a in layer_inputs]
                + [_const_spec(a) for a in (lnf_g, lnf_b)])
    return pl.pallas_call(
        kern,
        out_shape=jax.ShapeDtypeStruct((M, D), x2d.dtype),
        grid=(batch // Bt, n_layers),
        in_specs=in_specs,
        out_specs=pl.BlockSpec((Bt * pad_len, D), lambda b, l: (b, 0)),
        scratch_shapes=[pltpu.VMEM((Bt * pad_len, 3 * D), jnp.float32),
                        pltpu.VMEM((Bt * pad_len, D), jnp.float32)],
        input_output_aliases={0: 0},          # residual stream updated in place
        compiler_params=pltpu.CompilerParams(
            dimension_semantics=("parallel", "arbitrary"),
            vmem_limit_bytes=vmem_limit),
    )(*inputs)


def layernorm2d(x2d, g, b, *, batch, batch_tile, pad_len, vmem_limit):
    """Standalone ln_post fallback (only used when the transformer has zero
    residual blocks, i.e. layers == 1)."""
    M, D = x2d.shape
    Bt = batch_tile

    def kern(x_ref, g_ref, b_ref, o_ref):
        o_ref[...] = _layernorm(x_ref[...], g_ref[...], b_ref[...]).astype(o_ref.dtype)

    return pl.pallas_call(
        kern,
        out_shape=jax.ShapeDtypeStruct((M, D), x2d.dtype),
        grid=(batch // Bt,),
        in_specs=[pl.BlockSpec((Bt * pad_len, D), lambda i: (i, 0)),
                  _const_spec(g), _const_spec(b)],
        out_specs=pl.BlockSpec((Bt * pad_len, D), lambda i: (i, 0)),
        compiler_params=pltpu.CompilerParams(
            dimension_semantics=("parallel",), vmem_limit_bytes=vmem_limit),
    )(x2d, g, b)


# ----------------------------------------------------------------------------
# parameter construction (deterministic, synthetic)
# ----------------------------------------------------------------------------
def make_params(key, *, width, patch_size, resolution_after, layers, heads):
    D = width
    n_tok = (resolution_after // patch_size) ** 2 + 1
    scale = D ** (-0.5)
    n_blocks = max(layers - 1, 0)         # Transformer builds (layers-1) blocks

    keys = jax.random.split(key, 3 + 8 * max(n_blocks, 1))
    ki = iter(keys)

    conv = jax.random.normal(next(ki), (D, 3, patch_size, patch_size), jnp.float32) * 0.02
    params = {
        # Conv2d(3, width, p, p, bias=False) -> matmul weight [3*p*p, width] (bf16)
        "conv_w": conv.reshape(D, 3 * patch_size * patch_size).T.astype(CDT),
        "class_embedding": scale * jax.random.normal(next(ki), (1, D), jnp.float32),
        "positional_embedding": scale * jax.random.normal(next(ki), (n_tok, D), jnp.float32),
        "ln_pre_g": jnp.ones((1, D), jnp.float32),
        "ln_pre_b": jnp.zeros((1, D), jnp.float32),
        "ln_post_g": jnp.ones((1, D), jnp.float32),
        "ln_post_b": jnp.zeros((1, D), jnp.float32),
        "layers": None,
    }
    if n_blocks == 0:
        return params

    acc = {k: [] for k in ("ln1_g", "ln1_b", "w_qkv", "b_qkv", "w_out", "b_out",
                           "ln2_g", "ln2_b", "w_fc", "b_fc", "w_pr", "b_pr")}
    for _ in range(n_blocks):
        in_proj_w = jax.random.normal(next(ki), (3 * D, D), jnp.float32) * 0.02
        in_proj_b = jax.random.normal(next(ki), (3 * D,), jnp.float32) * 0.02
        out_w = jax.random.normal(next(ki), (D, D), jnp.float32) * 0.02
        out_b = jax.random.normal(next(ki), (D,), jnp.float32) * 0.02
        fc_w = jax.random.normal(next(ki), (4 * D, D), jnp.float32) * 0.02
        fc_b = jax.random.normal(next(ki), (4 * D,), jnp.float32) * 0.02
        pr_w = jax.random.normal(next(ki), (D, 4 * D), jnp.float32) * 0.02
        pr_b = jax.random.normal(next(ki), (D,), jnp.float32) * 0.02
        acc["ln1_g"].append(jnp.ones((1, D), jnp.float32))
        acc["ln1_b"].append(jnp.zeros((1, D), jnp.float32))
        acc["w_qkv"].append(in_proj_w.T.astype(CDT))          # [D, 3D]   (x @ W_in^T)
        acc["b_qkv"].append(in_proj_b.reshape(1, 3 * D))
        acc["w_out"].append(out_w.T.astype(CDT))              # [D, D]    (ctx @ W_out^T)
        acc["b_out"].append(out_b.reshape(1, D))
        acc["ln2_g"].append(jnp.ones((1, D), jnp.float32))
        acc["ln2_b"].append(jnp.zeros((1, D), jnp.float32))
        acc["w_fc"].append(fc_w.T.astype(CDT))                # [D, 4D]
        acc["b_fc"].append(fc_b.reshape(1, 4 * D))
        acc["w_pr"].append(pr_w.T.astype(CDT))                # [4D, D]
        acc["b_pr"].append(pr_b.reshape(1, D))
    params["layers"] = {k: jnp.stack(v, axis=0) for k, v in acc.items()}
    return params


# ----------------------------------------------------------------------------
# batch-tile heuristic (VMEM- and shape-aware, >= 2 grid steps for megacore)
# ----------------------------------------------------------------------------
def _pick_batch_tile(batch, *, pad_len, width, vmem_budget):
    D, Lp = width, pad_len
    d4 = 4 * D
    ck = 512 if (d4 > 512 and d4 % 512 == 0) else d4
    wbytes = 2 * 2 * (D * 3 * D + D * D + D * d4 + d4 * D)   # bf16, double-buffered
    budget = (vmem_budget * 7) // 10
    best = 1
    for bt in range(1, batch + 1):
        if batch % bt:
            continue
        if batch > 1 and batch // bt < 2:
            continue                # keep >= 2 batch grid steps (v7x dual-TC)
        rows = bt * Lp
        act = rows * D * 4 * 3      # residual value + resident output window + slack
        qkv = rows * 3 * D * 4
        attn = rows * D * 4
        mlp = rows * ck * 4 * 2 + rows * D * 4
        if act + qkv + attn + mlp + wbytes + (2 << 20) <= budget:
            best = bt
    return best


# ----------------------------------------------------------------------------
# full forward pass (matches VisualTransformer.forward, x_mask=None)
# ----------------------------------------------------------------------------
def visual_transformer_forward(x, params, *, patch_size, heads):
    # TODO(synk): key_padding_mask (x_mask) support not implemented; the test
    # path uses x_mask=None, matching the module default.
    B, C, R, _ = x.shape
    p = patch_size
    Hp = R // p
    N = Hp * Hp
    D = params["class_embedding"].shape[-1]
    L = N + 1
    Lp = ((L + 7) // 8) * 8               # pad seq so row blocks are 8-aligned
    assert D % heads == 0
    vmem_limit = _vmem_limit_bytes()
    Bt = _pick_batch_tile(B, pad_len=Lp, width=D, vmem_budget=vmem_limit)

    # conv1 as patchify (host glue) + Pallas matmul fused with CLS prepend,
    # positional-embedding add and ln_pre.
    patches = (
        x.reshape(B, C, Hp, p, Hp, p)
        .transpose(0, 2, 4, 1, 3, 5)
        .reshape(B * N, C * p * p)
    )
    pe = params["positional_embedding"]
    xs = embed_prep(
        patches, params["conv_w"], params["class_embedding"],
        pe[0:1, :], pe[1:, :], params["ln_pre_g"], params["ln_pre_b"],
        batch=B, batch_tile=Bt, n_patch=N, seq_len=L, pad_len=Lp,
        vmem_limit=vmem_limit,
    )                                      # [B*Lp, D], padded rows zeroed

    # transformer: torch permutes to [L, B, D]; per-token math is identical,
    # so we keep a flat [B*Lp, D] row slab and walk the layers on grid axis 1.
    if params["layers"] is None:
        xs = layernorm2d(xs, params["ln_post_g"], params["ln_post_b"],
                         batch=B, batch_tile=Bt, pad_len=Lp, vmem_limit=vmem_limit)
    else:
        xs = transformer_fused(
            xs, params["layers"], params["ln_post_g"], params["ln_post_b"],
            n_head=heads, batch=B, batch_tile=Bt, seq_len=L, pad_len=Lp,
            vmem_limit=vmem_limit,
        )

    return xs.reshape(B, Lp, D)[:, :L, :]  # drop the pad rows -> [B, N+1, D]


# ----------------------------------------------------------------------------
if __name__ == "__main__":
    # Small shapes consistent with the module's forward
    input_resolution = 16
    patch_size = 4
    width = 32
    layers = 3          # -> 2 residual attention blocks
    heads = 4
    output_dim = 64     # unused in forward()
    resolution_after = 16
    batch = 2

    key = jax.random.PRNGKey(0)
    k_x, k_p = jax.random.split(key)

    x = jax.random.normal(
        k_x, (batch, 3, input_resolution, input_resolution), jnp.float32
    )
    params = make_params(
        k_p,
        width=width,
        patch_size=patch_size,
        resolution_after=resolution_after,
        layers=layers,
        heads=heads,
    )

    fwd = jax.jit(functools.partial(visual_transformer_forward,
                                    patch_size=patch_size, heads=heads))
    out = jax.block_until_ready(fwd(x, params))

    n_tok = (input_resolution // patch_size) ** 2 + 1
    assert out.shape == (batch, n_tok, width), out.shape
    assert bool(jnp.all(jnp.isfinite(out)))
    print("KERNEL_OK")
</pallas_src>

<mosaic_0001>
module attributes {stable_mosaic.version = 11 : i64} {
  func.func @embed_prep_kernel(%arg0: i32, %arg1: memref<16x48xf32, #tpu.memory_space<vmem>>, %arg2: memref<48x32xbf16, #tpu.memory_space<vmem>>, %arg3: memref<1x32xf32, #tpu.memory_space<vmem>>, %arg4: memref<1x32xf32, #tpu.memory_space<vmem>>, %arg5: memref<16x32xf32, #tpu.memory_space<vmem>>, %arg6: memref<1x32xf32, #tpu.memory_space<vmem>>, %arg7: memref<1x32xf32, #tpu.memory_space<vmem>>, %arg8: memref<24x32xf32, #tpu.memory_space<vmem>>) attributes {dimension_semantics = [#tpu.dimension_semantics<parallel>], iteration_bounds = array<i64: 2>, scalar_prefetch = 0 : i64, scratch_operands = 0 : i64, tpu.core_type = #tpu.core_type<tc>, window_params = [{transform_indices = @transform_0, window_bounds = array<i64: 16, 48>}, {pipeline_mode = #tpu.pipeline_mode<synchronous>, transform_indices = @transform_1, window_bounds = array<i64: 48, 32>}, {pipeline_mode = #tpu.pipeline_mode<synchronous>, transform_indices = @transform_2, window_bounds = array<i64: 1, 32>}, {pipeline_mode = #tpu.pipeline_mode<synchronous>, transform_indices = @transform_3, window_bounds = array<i64: 1, 32>}, {pipeline_mode = #tpu.pipeline_mode<synchronous>, transform_indices = @transform_4, window_bounds = array<i64: 16, 32>}, {pipeline_mode = #tpu.pipeline_mode<synchronous>, transform_indices = @transform_5, window_bounds = array<i64: 1, 32>}, {pipeline_mode = #tpu.pipeline_mode<synchronous>, transform_indices = @transform_6, window_bounds = array<i64: 1, 32>}, {transform_indices = @transform_7, window_bounds = array<i64: 24, 32>}]} {
    %c0 = arith.constant 0 : index
    %c0_0 = arith.constant 0 : index
    %0 = vector.load %arg1[%c0, %c0_0] : memref<16x48xf32, #tpu.memory_space<vmem>>, vector<16x48xf32>
    %1 = arith.truncf %0 : vector<16x48xf32> to vector<16x48xbf16>
    %c0_1 = arith.constant 0 : index
    %c0_2 = arith.constant 0 : index
    %2 = vector.load %arg2[%c0_1, %c0_2] : memref<48x32xbf16, #tpu.memory_space<vmem>>, vector<48x32xbf16>
    %cst = arith.constant dense<0.000000e+00> : vector<16x32xf32>
    %3 = tpu.matmul %1, %2, %cst {dimension_numbers = #tpu.dot_dimension_numbers<[1], [0], [0], [1], [0, 0, 1, 1], [], []>} : vector<16x48xbf16>, vector<48x32xbf16>, vector<16x32xf32> -> vector<16x32xf32>
    %c0_3 = arith.constant 0 : index
    %c0_4 = arith.constant 0 : index
    %4 = vector.load %arg5[%c0_3, %c0_4] : memref<16x32xf32, #tpu.memory_space<vmem>>, vector<16x32xf32>
    %c0_5 = arith.constant 0 : index
    %c0_6 = arith.constant 0 : index
    %5 = vector.load %arg6[%c0_5, %c0_6] : memref<1x32xf32, #tpu.memory_space<vmem>>, vector<1x32xf32>
    %c0_7 = arith.constant 0 : index
    %c0_8 = arith.constant 0 : index
    %6 = vector.load %arg7[%c0_7, %c0_8] : memref<1x32xf32, #tpu.memory_space<vmem>>, vector<1x32xf32>
    %7 = arith.addf %3, %4 : vector<16x32xf32>
    %cst_9 = arith.constant dense<0.000000e+00> : vector<16xf32>
    %8 = vector.multi_reduction <add>, %7, %cst_9 [1] : vector<16x32xf32> to vector<16xf32>
    %9 = vector.shape_cast %8 : vector<16xf32> to vector<16x1xf32>
    %cst_10 = arith.constant 3.200000e+01 : f32
    %10 = vector.broadcast %cst_10 : f32 to vector<16x1xf32>
    %11 = arith.divf %9, %10 : vector<16x1xf32>
    %12 = vector.broadcast %11 : vector<16x1xf32> to vector<16x32xf32>
    %13 = arith.subf %7, %12 : vector<16x32xf32>
    %14 = arith.mulf %13, %13 : vector<16x32xf32>
    %cst_11 = arith.constant dense<0.000000e+00> : vector<16xf32>
    %15 = vector.multi_reduction <add>, %14, %cst_11 [1] : vector<16x32xf32> to vector<16xf32>
    %16 = vector.shape_cast %15 : vector<16xf32> to vector<16x1xf32>
    %cst_12 = arith.constant 3.200000e+01 : f32
    %17 = vector.broadcast %cst_12 : f32 to vector<16x1xf32>
    %18 = arith.divf %16, %17 : vector<16x1xf32>
    %19 = vector.broadcast %11 : vector<16x1xf32> to vector<16x32xf32>
    %20 = arith.subf %7, %19 : vector<16x32xf32>
    %cst_13 = arith.constant 9.99999974E-6 : f32
    %21 = vector.broadcast %cst_13 : f32 to vector<16x1xf32>
    %22 = arith.addf %18, %21 : vector<16x1xf32>
    %23 = math.rsqrt %22 : vector<16x1xf32>
    %24 = vector.broadcast %23 : vector<16x1xf32> to vector<16x32xf32>
    %25 = arith.mulf %20, %24 : vector<16x32xf32>
    %26 = vector.broadcast %5 : vector<1x32xf32> to vector<16x32xf32>
    %27 = arith.mulf %25, %26 : vector<16x32xf32>
    %28 = vector.broadcast %6 : vector<1x32xf32> to vector<16x32xf32>
    %29 = arith.addf %27, %28 : vector<16x32xf32>
    %c0_14 = arith.constant 0 : index
    %c0_15 = arith.constant 0 : index
    %30 = vector.load %arg3[%c0_14, %c0_15] : memref<1x32xf32, #tpu.memory_space<vmem>>, vector<1x32xf32>
    %c0_16 = arith.constant 0 : index
    %c0_17 = arith.constant 0 : index
    %31 = vector.load %arg4[%c0_16, %c0_17] : memref<1x32xf32, #tpu.memory_space<vmem>>, vector<1x32xf32>
    %32 = arith.addf %30, %31 : vector<1x32xf32>
    %cst_18 = arith.constant dense<0.000000e+00> : vector<1xf32>
    %33 = vector.multi_reduction <add>, %32, %cst_18 [1] : vector<1x32xf32> to vector<1xf32>
    %34 = vector.shape_cast %33 : vector<1xf32> to vector<1x1xf32>
    %cst_19 = arith.constant 3.200000e+01 : f32
    %35 = vector.broadcast %cst_19 : f32 to vector<1x1xf32>
    %36 = arith.divf %34, %35 : vector<1x1xf32>
    %37 = vector.broadcast %36 : vector<1x1xf32> to vector<1x32xf32>
    %38 = arith.subf %32, %37 : vector<1x32xf32>
    %39 = arith.mulf %38, %38 : vector<1x32xf32>
    %cst_20 = arith.constant dense<0.000000e+00> : vector<1xf32>
    %40 = vector.multi_reduction <add>, %39, %cst_20 [1] : vector<1x32xf32> to vector<1xf32>
    %41 = vector.shape_cast %40 : vector<1xf32> to vector<1x1xf32>
    %cst_21 = arith.constant 3.200000e+01 : f32
    %42 = vector.broadcast %cst_21 : f32 to vector<1x1xf32>
    %43 = arith.divf %41, %42 : vector<1x1xf32>
    %44 = vector.broadcast %36 : vector<1x1xf32> to vector<1x32xf32>
    %45 = arith.subf %32, %44 : vector<1x32xf32>
    %cst_22 = arith.constant 9.99999974E-6 : f32
    %46 = vector.broadcast %cst_22 : f32 to vector<1x1xf32>
    %47 = arith.addf %43, %46 : vector<1x1xf32>
    %48 = math.rsqrt %47 : vector<1x1xf32>
    %49 = vector.broadcast %48 : vector<1x1xf32> to vector<1x32xf32>
    %50 = arith.mulf %45, %49 : vector<1x32xf32>
    %51 = arith.mulf %50, %5 : vector<1x32xf32>
    %52 = arith.addf %51, %6 : vector<1x32xf32>
    %cst_23 = arith.constant 0.000000e+00 : f32
    %53 = vector.broadcast %cst_23 : f32 to vector<7x32xf32>
    %54 = tpu.concatenate %52, %29, %53 in 0 : vector<1x32xf32>, vector<16x32xf32>, vector<7x32xf32> -> vector<24x32xf32>
    %c0_24 = arith.constant 0 : index
    %c0_25 = arith.constant 0 : index
    %55 = vector.load %arg8[%c0_24, %c0_25] : memref<24x32xf32, #tpu.memory_space<vmem>>, vector<24x32xf32>
    tpu.vector_store %arg8[%c0_24, %c0_25], %54 {strides = array<i32>} : memref<24x32xf32, #tpu.memory_space<vmem>>, vector<24x32xf32>,
    return
  }
  func.func @transform_0(%arg0: i32) -> (i32, i32) {
    %c0_i32 = arith.constant 0 : i32
    %c0_i32_0 = arith.constant 0 : i32
    return %arg0, %c0_i32 : i32, i32
  }
  func.func @transform_1(%arg0: i32) -> (i32, i32) {
    %c0_i32 = arith.constant 0 : i32
    %c0_i32_0 = arith.constant 0 : i32
    %c0_i32_1 = arith.constant 0 : i32
    return %c0_i32, %c0_i32_0 : i32, i32
  }
  func.func @transform_2(%arg0: i32) -> (i32, i32) {
    %c0_i32 = arith.constant 0 : i32
    %c0_i32_0 = arith.constant 0 : i32
    %c0_i32_1 = arith.constant 0 : i32
    return %c0_i32, %c0_i32_0 : i32, i32
  }
  func.func @transform_3(%arg0: i32) -> (i32, i32) {
    %c0_i32 = arith.constant 0 : i32
    %c0_i32_0 = arith.constant 0 : i32
    %c0_i32_1 = arith.constant 0 : i32
    return %c0_i32, %c0_i32_0 : i32, i32
  }
  func.func @transform_4(%arg0: i32) -> (i32, i32) {
    %c0_i32 = arith.constant 0 : i32
    %c0_i32_0 = arith.constant 0 : i32
    %c0_i32_1 = arith.constant 0 : i32
    return %c0_i32, %c0_i32_0 : i32, i32
  }
  func.func @transform_5(%arg0: i32) -> (i32, i32) {
    %c0_i32 = arith.constant 0 : i32
    %c0_i32_0 = arith.constant 0 : i32
    %c0_i32_1 = arith.constant 0 : i32
    return %c0_i32, %c0_i32_0 : i32, i32
  }
  func.func @transform_6(%arg0: i32) -> (i32, i32) {
    %c0_i32 = arith.constant 0 : i32
    %c0_i32_0 = arith.constant 0 : i32
    %c0_i32_1 = arith.constant 0 : i32
    return %c0_i32, %c0_i32_0 : i32, i32
  }
  func.func @transform_7(%arg0: i32) -> (i32, i32) {
    %c0_i32 = arith.constant 0 : i32
    %c0_i32_0 = arith.constant 0 : i32
    return %arg0, %c0_i32 : i32, i32
  }
}

module attributes {stable_mosaic.version = 11 : i64} {
  func.func @transformer_kernel(%arg0: i32, %arg1: i32, %arg2: memref<24x32xf32, #tpu.memory_space<vmem>>, %arg3: memref<1x1x32xf32, #tpu.memory_space<vmem>>, %arg4: memref<1x1x32xf32, #tpu.memory_space<vmem>>, %arg5: memref<1x32x96xbf16, #tpu.memory_space<vmem>>, %arg6: memref<1x1x96xf32, #tpu.memory_space<vmem>>, %arg7: memref<1x32x32xbf16, #tpu.memory_space<vmem>>, %arg8: memref<1x1x32xf32, #tpu.memory_space<vmem>>, %arg9: memref<1x1x32xf32, #tpu.memory_space<vmem>>, %arg10: memref<1x1x32xf32, #tpu.memory_space<vmem>>, %arg11: memref<1x32x128xbf16, #tpu.memory_space<vmem>>, %arg12: memref<1x1x128xf32, #tpu.memory_space<vmem>>, %arg13: memref<1x128x32xbf16, #tpu.memory_space<vmem>>, %arg14: memref<1x1x32xf32, #tpu.memory_space<vmem>>, %arg15: memref<1x32xf32, #tpu.memory_space<vmem>>, %arg16: memref<1x32xf32, #tpu.memory_space<vmem>>, %arg17: memref<24x32xf32, #tpu.memory_space<vmem>>, %arg18: memref<24x96xf32, #tpu.memory_space<vmem>>, %arg19: memref<24x32xf32, #tpu.memory_space<vmem>>) attributes {dimension_semantics = [#tpu.dimension_semantics<parallel>, #tpu.dimension_semantics<arbitrary>], iteration_bounds = array<i64: 2, 2>, scalar_prefetch = 0 : i64, scratch_operands = 2 : i64, tpu.core_type = #tpu.core_type<tc>, window_params = [{transform_indices = @transform_0, window_bounds = array<i64: 24, 32>}, {transform_indices = @transform_1, window_bounds = array<i64: 1, 1, 32>}, {transform_indices = @transform_2, window_bounds = array<i64: 1, 1, 32>}, {transform_indices = @transform_3, window_bounds = array<i64: 1, 32, 96>}, {transform_indices = @transform_4, window_bounds = array<i64: 1, 1, 96>}, {transform_indices = @transform_5, window_bounds = array<i64: 1, 32, 32>}, {transform_indices = @transform_6, window_bounds = array<i64: 1, 1, 32>}, {transform_indices = @transform_7, window_bounds = array<i64: 1, 1, 32>}, {transform_indices = @transform_8, window_bounds = array<i64: 1, 1, 32>}, {transform_indices = @transform_9, window_bounds = array<i64: 1, 32, 128>}, {transform_indices = @transform_10, window_bounds = array<i64: 1, 1, 128>}, {transform_indices = @transform_11, window_bounds = array<i64: 1, 128, 32>}, {transform_indices = @transform_12, window_bounds = array<i64: 1, 1, 32>}, {pipeline_mode = #tpu.pipeline_mode<synchronous>, transform_indices = @transform_13, window_bounds = array<i64: 1, 32>}, {pipeline_mode = #tpu.pipeline_mode<synchronous>, transform_indices = @transform_14, window_bounds = array<i64: 1, 32>}, {transform_indices = @transform_15, window_bounds = array<i64: 24, 32>}]} {
    %c0_i32 = arith.constant 0 : i32
    %0 = arith.cmpi eq, %arg1, %c0_i32 : i32
    %1 = arith.extui %0 : i1 to i32
    %c0_i32_0 = arith.constant 0 : i32
    %2 = arith.cmpi ne, %1, %c0_i32_0 : i32
    scf.if %2 {
      %c0_83 = arith.constant 0 : index
      %c0_84 = arith.constant 0 : index
      %208 = vector.load %arg2[%c0_83, %c0_84] : memref<24x32xf32, #tpu.memory_space<vmem>>, vector<24x32xf32>
      %c0_85 = arith.constant 0 : index
      %c0_86 = arith.constant 0 : index
      %209 = vector.load %arg17[%c0_85, %c0_86] : memref<24x32xf32, #tpu.memory_space<vmem>>, vector<24x32xf32>
      tpu.vector_store %arg17[%c0_85, %c0_86], %208 {strides = array<i32>} : memref<24x32xf32, #tpu.memory_space<vmem>>, vector<24x32xf32>,
    } else {
    }
    %c0 = arith.constant 0 : index
    %c0_1 = arith.constant 0 : index
    %3 = vector.load %arg17[%c0, %c0_1] : memref<24x32xf32, #tpu.memory_space<vmem>>, vector<24x32xf32>
    %c0_2 = arith.constant 0 : index
    %c0_3 = arith.constant 0 : index
    %c0_4 = arith.constant 0 : index
    %4 = vector.load %arg3[%c0_2, %c0_3, %c0_4] : memref<1x1x32xf32, #tpu.memory_space<vmem>>, vector<1x1x32xf32>
    %5 = vector.shape_cast %4 : vector<1x1x32xf32> to vector<1x32xf32>
    %c0_5 = arith.constant 0 : index
    %c0_6 = arith.constant 0 : index
    %c0_7 = arith.constant 0 : index
    %6 = vector.load %arg4[%c0_5, %c0_6, %c0_7] : memref<1x1x32xf32, #tpu.memory_space<vmem>>, vector<1x1x32xf32>
    %7 = vector.shape_cast %6 : vector<1x1x32xf32> to vector<1x32xf32>
    %cst = arith.constant dense<0.000000e+00> : vector<24xf32>
    %8 = vector.multi_reduction <add>, %3, %cst [1] : vector<24x32xf32> to vector<24xf32>
    %9 = vector.shape_cast %8 : vector<24xf32> to vector<24x1xf32>
    %cst_8 = arith.constant 3.200000e+01 : f32
    %10 = vector.broadcast %cst_8 : f32 to vector<24x1xf32>
    %11 = arith.divf %9, %10 : vector<24x1xf32>
    %12 = vector.broadcast %11 : vector<24x1xf32> to vector<24x32xf32>
    %13 = arith.subf %3, %12 : vector<24x32xf32>
    %14 = arith.mulf %13, %13 : vector<24x32xf32>
    %cst_9 = arith.constant dense<0.000000e+00> : vector<24xf32>
    %15 = vector.multi_reduction <add>, %14, %cst_9 [1] : vector<24x32xf32> to vector<24xf32>
    %16 = vector.shape_cast %15 : vector<24xf32> to vector<24x1xf32>
    %cst_10 = arith.constant 3.200000e+01 : f32
    %17 = vector.broadcast %cst_10 : f32 to vector<24x1xf32>
    %18 = arith.divf %16, %17 : vector<24x1xf32>
    %19 = vector.broadcast %11 : vector<24x1xf32> to vector<24x32xf32>
    %20 = arith.subf %3, %19 : vector<24x32xf32>
    %cst_11 = arith.constant 9.99999974E-6 : f32
    %21 = vector.broadcast %cst_11 : f32 to vector<24x1xf32>
    %22 = arith.addf %18, %21 : vector<24x1xf32>
    %23 = math.rsqrt %22 : vector<24x1xf32>
    %24 = vector.broadcast %23 : vector<24x1xf32> to vector<24x32xf32>
    %25 = arith.mulf %20, %24 : vector<24x32xf32>
    %26 = vector.broadcast %5 : vector<1x32xf32> to vector<24x32xf32>
    %27 = arith.mulf %25, %26 : vector<24x32xf32>
    %28 = vector.broadcast %7 : vector<1x32xf32> to vector<24x32xf32>
    %29 = arith.addf %27, %28 : vector<24x32xf32>
    %30 = arith.truncf %29 : vector<24x32xf32> to vector<24x32xbf16>
    %c0_12 = arith.constant 0 : index
    %c0_13 = arith.constant 0 : index
    %c0_14 = arith.constant 0 : index
    %31 = vector.load %arg5[%c0_12, %c0_13, %c0_14] : memref<1x32x96xbf16, #tpu.memory_space<vmem>>, vector<1x32x96xbf16>
    %32 = vector.shape_cast %31 : vector<1x32x96xbf16> to vector<32x96xbf16>
    %cst_15 = arith.constant dense<0.000000e+00> : vector<24x96xf32>
    %33 = tpu.matmul %30, %32, %cst_15 {dimension_numbers = #tpu.dot_dimension_numbers<[1], [0], [0], [1], [0, 0, 1, 1], [], []>} : vector<24x32xbf16>, vector<32x96xbf16>, vector<24x96xf32> -> vector<24x96xf32>
    %c0_16 = arith.constant 0 : index
    %c0_17 = arith.constant 0 : index
    %c0_18 = arith.constant 0 : index
    %34 = vector.load %arg6[%c0_16, %c0_17, %c0_18] : memref<1x1x96xf32, #tpu.memory_space<vmem>>, vector<1x1x96xf32>
    %35 = vector.shape_cast %34 : vector<1x1x96xf32> to vector<1x96xf32>
    %36 = vector.broadcast %35 : vector<1x96xf32> to vector<24x96xf32>
    %37 = arith.addf %33, %36 : vector<24x96xf32>
    %c0_19 = arith.constant 0 : index
    %c0_20 = arith.constant 0 : index
    %38 = vector.load %arg18[%c0_19, %c0_20] : memref<24x96xf32, #tpu.memory_space<vmem>>, vector<24x96xf32>
    tpu.vector_store %arg18[%c0_19, %c0_20], %37 {strides = array<i32>} : memref<24x96xf32, #tpu.memory_space<vmem>>, vector<24x96xf32>,
    %39 = tpu.iota {dimensions = array<i32: 1>} : vector<1x24xi32>
    %c17_i32 = arith.constant 17 : i32
    %40 = vector.broadcast %c17_i32 : i32 to vector<1x24xi32>
    %41 = arith.cmpi slt, %39, %40 : vector<1x24xi32>
    %cst_21 = arith.constant 0.000000e+00 : f32
    %cst_22 = arith.constant -1.000000e+30 : f32
    %42 = vector.broadcast %cst_21 : f32 to vector<1x24xf32>
    %43 = vector.broadcast %cst_22 : f32 to vector<1x24xf32>
    %44 = arith.select %41, %42, %43 : vector<1x24xi1>, vector<1x24xf32>
    %c0_23 = arith.constant 0 : index
    %c0_24 = arith.constant 0 : index
    %c0_25 = arith.constant 0 : index
    %45 = vector.load %arg7[%c0_23, %c0_24, %c0_25] : memref<1x32x32xbf16, #tpu.memory_space<vmem>>, vector<1x32x32xbf16>
    %46 = vector.shape_cast %45 : vector<1x32x32xbf16> to vector<32x32xbf16>
    %c0_26 = arith.constant 0 : index
    %c0_27 = arith.constant 0 : index
    %c0_28 = arith.constant 0 : index
    %47 = vector.load %arg8[%c0_26, %c0_27, %c0_28] : memref<1x1x32xf32, #tpu.memory_space<vmem>>, vector<1x1x32xf32>
    %48 = vector.shape_cast %47 : vector<1x1x32xf32> to vector<1x32xf32>
    %c0_i32_29 = arith.constant 0 : i32
    %c24_i32 = arith.constant 24 : i32
    %49 = arith.muli %c0_i32_29, %c24_i32 : i32
    %50 = tpu.assume_multiple %49, 8 : i32
    %51 = arith.index_cast %50 : i32 to index
    %c0_30 = arith.constant 0 : index
    %52 = vector.load %arg18[%51, %c0_30] : memref<24x96xf32, #tpu.memory_space<vmem>>, vector<24x96xf32>
    %53 = vector.extract_strided_slice %52 {offsets = [0, 0], sizes = [24, 32], strides = [1, 1]} : vector<24x96xf32> to vector<24x32xf32>
    %cst_31 = arith.constant 0.353553385 : f32
    %54 = vector.broadcast %cst_31 : f32 to vector<24x32xf32>
    %55 = arith.mulf %53, %54 : vector<24x32xf32>
    %56 = vector.extract_strided_slice %52 {offsets = [0, 32], sizes = [24, 32], strides = [1, 1]} : vector<24x96xf32> to vector<24x32xf32>
    %57 = vector.extract_strided_slice %52 {offsets = [0, 64], sizes = [24, 32], strides = [1, 1]} : vector<24x96xf32> to vector<24x32xf32>
    %58 = vector.extract_strided_slice %55 {offsets = [0, 0], sizes = [24, 8], strides = [1, 1]} : vector<24x32xf32> to vector<24x8xf32>
    %59 = arith.truncf %58 : vector<24x8xf32> to vector<24x8xbf16>
    %60 = vector.extract_strided_slice %56 {offsets = [0, 0], sizes = [24, 8], strides = [1, 1]} : vector<24x32xf32> to vector<24x8xf32>
    %61 = arith.truncf %60 : vector<24x8xf32> to vector<24x8xbf16>
    %cst_32 = arith.constant dense<0.000000e+00> : vector<24x24xf32>
    %62 = tpu.matmul %59, %61, %cst_32 {dimension_numbers = #tpu.dot_dimension_numbers<[1], [1], [0], [0], [0, 0, 1, 0], [], []>} : vector<24x8xbf16>, vector<24x8xbf16>, vector<24x24xf32> -> vector<24x24xf32>
    %63 = vector.broadcast %44 : vector<1x24xf32> to vector<24x24xf32>
    %64 = arith.addf %62, %63 : vector<24x24xf32>
    %cst_33 = arith.constant dense<0xFF800000> : vector<24xf32>
    %65 = vector.multi_reduction <maximumf>, %64, %cst_33 [1] : vector<24x24xf32> to vector<24xf32>
    %66 = vector.shape_cast %65 : vector<24xf32> to vector<24x1xf32>
    %67 = vector.broadcast %66 : vector<24x1xf32> to vector<24x24xf32>
    %68 = arith.subf %64, %67 : vector<24x24xf32>
    %69 = math.exp %68 : vector<24x24xf32>
    %cst_34 = arith.constant dense<0.000000e+00> : vector<24xf32>
    %70 = vector.multi_reduction <add>, %69, %cst_34 [1] : vector<24x24xf32> to vector<24xf32>
    %71 = vector.shape_cast %70 : vector<24xf32> to vector<24x1xf32>
    %72 = tpu.reciprocal %71 {approx = true} : vector<24x1xf32> -> vector<24x1xf32>
    %73 = vector.broadcast %72 : vector<24x1xf32> to vector<24x24xf32>
    %74 = arith.mulf %69, %73 : vector<24x24xf32>
    %75 = arith.truncf %74 : vector<24x24xf32> to vector<24x24xbf16>
    %76 = vector.extract_strided_slice %57 {offsets = [0, 0], sizes = [24, 8], strides = [1, 1]} : vector<24x32xf32> to vector<24x8xf32>
    %77 = arith.truncf %76 : vector<24x8xf32> to vector<24x8xbf16>
    %cst_35 = arith.constant dense<0.000000e+00> : vector<24x8xf32>
    %78 = tpu.matmul %75, %77, %cst_35 {dimension_numbers = #tpu.dot_dimension_numbers<[1], [0], [0], [1], [0, 0, 1, 1], [], []>} : vector<24x24xbf16>, vector<24x8xbf16>, vector<24x8xf32> -> vector<24x8xf32>
    %79 = vector.extract_strided_slice %55 {offsets = [0, 8], sizes = [24, 8], strides = [1, 1]} : vector<24x32xf32> to vector<24x8xf32>
    %80 = arith.truncf %79 : vector<24x8xf32> to vector<24x8xbf16>
    %81 = vector.extract_strided_slice %56 {offsets = [0, 8], sizes = [24, 8], strides = [1, 1]} : vector<24x32xf32> to vector<24x8xf32>
    %82 = arith.truncf %81 : vector<24x8xf32> to vector<24x8xbf16>
    %cst_36 = arith.constant dense<0.000000e+00> : vector<24x24xf32>
    %83 = tpu.matmul %80, %82, %cst_36 {dimension_numbers = #tpu.dot_dimension_numbers<[1], [1], [0], [0], [0, 0, 1, 0], [], []>} : vector<24x8xbf16>, vector<24x8xbf16>, vector<24x24xf32> -> vector<24x24xf32>
    %84 = vector.broadcast %44 : vector<1x24xf32> to vector<24x24xf32>
    %85 = arith.addf %83, %84 : vector<24x24xf32>
    %cst_37 = arith.constant dense<0xFF800000> : vector<24xf32>
    %86 = vector.multi_reduction <maximumf>, %85, %cst_37 [1] : vector<24x24xf32> to vector<24xf32>
    %87 = vector.shape_cast %86 : vector<24xf32> to vector<24x1xf32>
    %88 = vector.broadcast %87 : vector<24x1xf32> to vector<24x24xf32>
    %89 = arith.subf %85, %88 : vector<24x24xf32>
    %90 = math.exp %89 : vector<24x24xf32>
    %cst_38 = arith.constant dense<0.000000e+00> : vector<24xf32>
    %91 = vector.multi_reduction <add>, %90, %cst_38 [1] : vector<24x24xf32> to vector<24xf32>
    %92 = vector.shape_cast %91 : vector<24xf32> to vector<24x1xf32>
    %93 = tpu.reciprocal %92 {approx = true} : vector<24x1xf32> -> vector<24x1xf32>
    %94 = vector.broadcast %93 : vector<24x1xf32> to vector<24x24xf32>
    %95 = arith.mulf %90, %94 : vector<24x24xf32>
    %96 = arith.truncf %95 : vector<24x24xf32> to vector<24x24xbf16>
    %97 = vector.extract_strided_slice %57 {offsets = [0, 8], sizes = [24, 8], strides = [1, 1]} : vector<24x32xf32> to vector<24x8xf32>
    %98 = arith.truncf %97 : vector<24x8xf32> to vector<24x8xbf16>
    %cst_39 = arith.constant dense<0.000000e+00> : vector<24x8xf32>
    %99 = tpu.matmul %96, %98, %cst_39 {dimension_numbers = #tpu.dot_dimension_numbers<[1], [0], [0], [1], [0, 0, 1, 1], [], []>} : vector<24x24xbf16>, vector<24x8xbf16>, vector<24x8xf32> -> vector<24x8xf32>
    %100 = vector.extract_strided_slice %55 {offsets = [0, 16], sizes = [24, 8], strides = [1, 1]} : vector<24x32xf32> to vector<24x8xf32>
    %101 = arith.truncf %100 : vector<24x8xf32> to vector<24x8xbf16>
    %102 = vector.extract_strided_slice %56 {offsets = [0, 16], sizes = [24, 8], strides = [1, 1]} : vector<24x32xf32> to vector<24x8xf32>
    %103 = arith.truncf %102 : vector<24x8xf32> to vector<24x8xbf16>
    %cst_40 = arith.constant dense<0.000000e+00> : vector<24x24xf32>
    %104 = tpu.matmul %101, %103, %cst_40 {dimension_numbers = #tpu.dot_dimension_numbers<[1], [1], [0], [0], [0, 0, 1, 0], [], []>} : vector<24x8xbf16>, vector<24x8xbf16>, vector<24x24xf32> -> vector<24x24xf32>
    %105 = vector.broadcast %44 : vector<1x24xf32> to vector<24x24xf32>
    %106 = arith.addf %104, %105 : vector<24x24xf32>
    %cst_41 = arith.constant dense<0xFF800000> : vector<24xf32>
    %107 = vector.multi_reduction <maximumf>, %106, %cst_41 [1] : vector<24x24xf32> to vector<24xf32>
    %108 = vector.shape_cast %107 : vector<24xf32> to vector<24x1xf32>
    %109 = vector.broadcast %108 : vector<24x1xf32> to vector<24x24xf32>
    %110 = arith.subf %106, %109 : vector<24x24xf32>
    %111 = math.exp %110 : vector<24x24xf32>
    %cst_42 = arith.constant dense<0.000000e+00> : vector<24xf32>
    %112 = vector.multi_reduction <add>, %111, %cst_42 [1] : vector<24x24xf32> to vector<24xf32>
    %113 = vector.shape_cast %112 : vector<24xf32> to vector<24x1xf32>
    %114 = tpu.reciprocal %113 {approx = true} : vector<24x1xf32> -> vector<24x1xf32>
    %115 = vector.broadcast %114 : vector<24x1xf32> to vector<24x24xf32>
    %116 = arith.mulf %111, %115 : vector<24x24xf32>
    %117 = arith.truncf %116 : vector<24x24xf32> to vector<24x24xbf16>
    %118 = vector.extract_strided_slice %57 {offsets = [0, 16], sizes = [24, 8], strides = [1, 1]} : vector<24x32xf32> to vector<24x8xf32>
    %119 = arith.truncf %118 : vector<24x8xf32> to vector<24x8xbf16>
    %cst_43 = arith.constant dense<0.000000e+00> : vector<24x8xf32>
    %120 = tpu.matmul %117, %119, %cst_43 {dimension_numbers = #tpu.dot_dimension_numbers<[1], [0], [0], [1], [0, 0, 1, 1], [], []>} : vector<24x24xbf16>, vector<24x8xbf16>, vector<24x8xf32> -> vector<24x8xf32>
    %121 = vector.extract_strided_slice %55 {offsets = [0, 24], sizes = [24, 8], strides = [1, 1]} : vector<24x32xf32> to vector<24x8xf32>
    %122 = arith.truncf %121 : vector<24x8xf32> to vector<24x8xbf16>
    %123 = vector.extract_strided_slice %56 {offsets = [0, 24], sizes = [24, 8], strides = [1, 1]} : vector<24x32xf32> to vector<24x8xf32>
    %124 = arith.truncf %123 : vector<24x8xf32> to vector<24x8xbf16>
    %cst_44 = arith.constant dense<0.000000e+00> : vector<24x24xf32>
    %125 = tpu.matmul %122, %124, %cst_44 {dimension_numbers = #tpu.dot_dimension_numbers<[1], [1], [0], [0], [0, 0, 1, 0], [], []>} : vector<24x8xbf16>, vector<24x8xbf16>, vector<24x24xf32> -> vector<24x24xf32>
    %126 = vector.broadcast %44 : vector<1x24xf32> to vector<24x24xf32>
    %127 = arith.addf %125, %126 : vector<24x24xf32>
    %cst_45 = arith.constant dense<0xFF800000> : vector<24xf32>
    %128 = vector.multi_reduction <maximumf>, %127, %cst_45 [1] : vector<24x24xf32> to vector<24xf32>
    %129 = vector.shape_cast %128 : vector<24xf32> to vector<24x1xf32>
    %130 = vector.broadcast %129 : vector<24x1xf32> to vector<24x24xf32>
    %131 = arith.subf %127, %130 : vector<24x24xf32>
    %132 = math.exp %131 : vector<24x24xf32>
    %cst_46 = arith.constant dense<0.000000e+00> : vector<24xf32>
    %133 = vector.multi_reduction <add>, %132, %cst_46 [1] : vector<24x24xf32> to vector<24xf32>
    %134 = vector.shape_cast %133 : vector<24xf32> to vector<24x1xf32>
    %135 = tpu.reciprocal %134 {approx = true} : vector<24x1xf32> -> vector<24x1xf32>
    %136 = vector.broadcast %135 : vector<24x1xf32> to vector<24x24xf32>
    %137 = arith.mulf %132, %136 : vector<24x24xf32>
    %138 = arith.truncf %137 : vector<24x24xf32> to vector<24x24xbf16>
    %139 = vector.extract_strided_slice %57 {offsets = [0, 24], sizes = [24, 8], strides = [1, 1]} : vector<24x32xf32> to vector<24x8xf32>
    %140 = arith.truncf %139 : vector<24x8xf32> to vector<24x8xbf16>
    %cst_47 = arith.constant dense<0.000000e+00> : vector<24x8xf32>
    %141 = tpu.matmul %138, %140, %cst_47 {dimension_numbers = #tpu.dot_dimension_numbers<[1], [0], [0], [1], [0, 0, 1, 1], [], []>} : vector<24x24xbf16>, vector<24x8xbf16>, vector<24x8xf32> -> vector<24x8xf32>
    %142 = tpu.concatenate %78, %99, %120, %141 in 1 : vector<24x8xf32>, vector<24x8xf32>, vector<24x8xf32>, vector<24x8xf32> -> vector<24x32xf32>
    %143 = arith.truncf %142 : vector<24x32xf32> to vector<24x32xbf16>
    %cst_48 = arith.constant dense<0.000000e+00> : vector<24x32xf32>
    %144 = tpu.matmul %143, %46, %cst_48 {dimension_numbers = #tpu.dot_dimension_numbers<[1], [0], [0], [1], [0, 0, 1, 1], [], []>} : vector<24x32xbf16>, vector<32x32xbf16>, vector<24x32xf32> -> vector<24x32xf32>
    %145 = vector.broadcast %48 : vector<1x32xf32> to vector<24x32xf32>
    %146 = arith.addf %144, %145 : vector<24x32xf32>
    %147 = arith.index_cast %50 : i32 to index
    %c0_49 = arith.constant 0 : index
    %148 = vector.load %arg19[%147, %c0_49] : memref<24x32xf32, #tpu.memory_space<vmem>>, vector<24x32xf32>
    tpu.vector_store %arg19[%147, %c0_49], %146 {strides = array<i32>} : memref<24x32xf32, #tpu.memory_space<vmem>>, vector<24x32xf32>,
    %c1_i32 = arith.constant 1 : i32
    %c0_50 = arith.constant 0 : index
    %c0_51 = arith.constant 0 : index
    %149 = vector.load %arg19[%c0_50, %c0_51] : memref<24x32xf32, #tpu.memory_space<vmem>>, vector<24x32xf32>
    %150 = arith.addf %3, %149 : vector<24x32xf32>
    %c0_52 = arith.constant 0 : index
    %c0_53 = arith.constant 0 : index
    %c0_54 = arith.constant 0 : index
    %151 = vector.load %arg9[%c0_52, %c0_53, %c0_54] : memref<1x1x32xf32, #tpu.memory_space<vmem>>, vector<1x1x32xf32>
    %152 = vector.shape_cast %151 : vector<1x1x32xf32> to vector<1x32xf32>
    %c0_55 = arith.constant 0 : index
    %c0_56 = arith.constant 0 : index
    %c0_57 = arith.constant 0 : index
    %153 = vector.load %arg10[%c0_55, %c0_56, %c0_57] : memref<1x1x32xf32, #tpu.memory_space<vmem>>, vector<1x1x32xf32>
    %154 = vector.shape_cast %153 : vector<1x1x32xf32> to vector<1x32xf32>
    %cst_58 = arith.constant dense<0.000000e+00> : vector<24xf32>
    %155 = vector.multi_reduction <add>, %150, %cst_58 [1] : vector<24x32xf32> to vector<24xf32>
    %156 = vector.shape_cast %155 : vector<24xf32> to vector<24x1xf32>
    %cst_59 = arith.constant 3.200000e+01 : f32
    %157 = vector.broadcast %cst_59 : f32 to vector<24x1xf32>
    %158 = arith.divf %156, %157 : vector<24x1xf32>
    %159 = vector.broadcast %158 : vector<24x1xf32> to vector<24x32xf32>
    %160 = arith.subf %150, %159 : vector<24x32xf32>
    %161 = arith.mulf %160, %160 : vector<24x32xf32>
    %cst_60 = arith.constant dense<0.000000e+00> : vector<24xf32>
    %162 = vector.multi_reduction <add>, %161, %cst_60 [1] : vector<24x32xf32> to vector<24xf32>
    %163 = vector.shape_cast %162 : vector<24xf32> to vector<24x1xf32>
    %cst_61 = arith.constant 3.200000e+01 : f32
    %164 = vector.broadcast %cst_61 : f32 to vector<24x1xf32>
    %165 = arith.divf %163, %164 : vector<24x1xf32>
    %166 = vector.broadcast %158 : vector<24x1xf32> to vector<24x32xf32>
    %167 = arith.subf %150, %166 : vector<24x32xf32>
    %cst_62 = arith.constant 9.99999974E-6 : f32
    %168 = vector.broadcast %cst_62 : f32 to vector<24x1xf32>
    %169 = arith.addf %165, %168 : vector<24x1xf32>
    %170 = math.rsqrt %169 : vector<24x1xf32>
    %171 = vector.broadcast %170 : vector<24x1xf32> to vector<24x32xf32>
    %172 = arith.mulf %167, %171 : vector<24x32xf32>
    %173 = vector.broadcast %152 : vector<1x32xf32> to vector<24x32xf32>
    %174 = arith.mulf %172, %173 : vector<24x32xf32>
    %175 = vector.broadcast %154 : vector<1x32xf32> to vector<24x32xf32>
    %176 = arith.addf %174, %175 : vector<24x32xf32>
    %177 = arith.truncf %176 : vector<24x32xf32> to vector<24x32xbf16>
    %c0_63 = arith.constant 0 : index
    %c0_64 = arith.constant 0 : index
    %c0_65 = arith.constant 0 : index
    %178 = vector.load %arg11[%c0_63, %c0_64, %c0_65] : memref<1x32x128xbf16, #tpu.memory_space<vmem>>, vector<1x32x128xbf16>
    %179 = vector.shape_cast %178 : vector<1x32x128xbf16> to vector<32x128xbf16>
    %cst_66 = arith.constant dense<0.000000e+00> : vector<24x128xf32>
    %180 = tpu.matmul %177, %179, %cst_66 {dimension_numbers = #tpu.dot_dimension_numbers<[1], [0], [0], [1], [0, 0, 1, 1], [], []>} : vector<24x32xbf16>, vector<32x128xbf16>, vector<24x128xf32> -> vector<24x128xf32>
    %c0_67 = arith.constant 0 : index
    %c0_68 = arith.constant 0 : index
    %c0_69 = arith.constant 0 : index
    %181 = vector.load %arg12[%c0_67, %c0_68, %c0_69] : memref<1x1x128xf32, #tpu.memory_space<vmem>>, vector<1x1x128xf32>
    %182 = vector.shape_cast %181 : vector<1x1x128xf32> to vector<1x128xf32>
    %183 = vector.broadcast %182 : vector<1x128xf32> to vector<24x128xf32>
    %184 = arith.addf %180, %183 : vector<24x128xf32>
    %cst_70 = arith.constant 1.702000e+00 : f32
    %185 = vector.broadcast %cst_70 : f32 to vector<24x128xf32>
    %186 = arith.mulf %185, %184 : vector<24x128xf32>
    %187 = arith.negf %186 : vector<24x128xf32>
    %188 = math.exp %187 : vector<24x128xf32>
    %cst_71 = arith.constant 1.000000e+00 : f32
    %189 = vector.broadcast %cst_71 : f32 to vector<24x128xf32>
    %190 = arith.addf %189, %188 : vector<24x128xf32>
    %191 = arith.divf %189, %190 : vector<24x128xf32>
    %192 = arith.mulf %184, %191 : vector<24x128xf32>
    %193 = arith.truncf %192 : vector<24x128xf32> to vector<24x128xbf16>
    %c0_72 = arith.constant 0 : index
    %c0_73 = arith.constant 0 : index
    %c0_74 = arith.constant 0 : index
    %194 = vector.load %arg13[%c0_72, %c0_73, %c0_74] : memref<1x128x32xbf16, #tpu.memory_space<vmem>>, vector<1x128x32xbf16>
    %195 = vector.shape_cast %194 : vector<1x128x32xbf16> to vector<128x32xbf16>
    %cst_75 = arith.constant dense<0.000000e+00> : vector<24x32xf32>
    %196 = tpu.matmul %193, %195, %cst_75 {dimension_numbers = #tpu.dot_dimension_numbers<[1], [0], [0], [1], [0, 0, 1, 1], [], []>} : vector<24x128xbf16>, vector<128x32xbf16>, vector<24x32xf32> -> vector<24x32xf32>
    %197 = arith.addf %150, %196 : vector<24x32xf32>
    %c0_76 = arith.constant 0 : index
    %c0_77 = arith.constant 0 : index
    %c0_78 = arith.constant 0 : index
    %198 = vector.load %arg14[%c0_76, %c0_77, %c0_78] : memref<1x1x32xf32, #tpu.memory_space<vmem>>, vector<1x1x32xf32>
    %199 = vector.shape_cast %198 : vector<1x1x32xf32> to vector<1x32xf32>
    %200 = vector.broadcast %199 : vector<1x32xf32> to vector<24x32xf32>
    %201 = arith.addf %197, %200 : vector<24x32xf32>
    %c1_i32_79 = arith.constant 1 : i32
    %202 = arith.cmpi slt, %arg1, %c1_i32_79 : i32
    %203 = arith.extui %202 : i1 to i32
    %c0_i32_80 = arith.constant 0 : i32
    %204 = arith.cmpi ne, %203, %c0_i32_80 : i32
    scf.if %204 {
      %c0_83 = arith.constant 0 : index
      %c0_84 = arith.constant 0 : index
      %208 = vector.load %arg17[%c0_83, %c0_84] : memref<24x32xf32, #tpu.memory_space<vmem>>, vector<24x32xf32>
      tpu.vector_store %arg17[%c0_83, %c0_84], %201 {strides = array<i32>} : memref<24x32xf32, #tpu.memory_space<vmem>>, vector<24x32xf32>,
    } else {
    }
    %c1_i32_81 = arith.constant 1 : i32
    %205 = arith.cmpi eq, %arg1, %c1_i32_81 : i32
    %206 = arith.extui %205 : i1 to i32
    %c0_i32_82 = arith.constant 0 : i32
    %207 = arith.cmpi ne, %206, %c0_i32_82 : i32
    scf.if %207 {
      %c0_83 = arith.constant 0 : index
      %c0_84 = arith.constant 0 : index
      %208 = vector.load %arg15[%c0_83, %c0_84] : memref<1x32xf32, #tpu.memory_space<vmem>>, vector<1x32xf32>
      %c0_85 = arith.constant 0 : index
      %c0_86 = arith.constant 0 : index
      %209 = vector.load %arg16[%c0_85, %c0_86] : memref<1x32xf32, #tpu.memory_space<vmem>>, vector<1x32xf32>
      %cst_87 = arith.constant dense<0.000000e+00> : vector<24xf32>
      %210 = vector.multi_reduction <add>, %201, %cst_87 [1] : vector<24x32xf32> to vector<24xf32>
      %211 = vector.shape_cast %210 : vector<24xf32> to vector<24x1xf32>
      %cst_88 = arith.constant 3.200000e+01 : f32
      %212 = vector.broadcast %cst_88 : f32 to vector<24x1xf32>
      %213 = arith.divf %211, %212 : vector<24x1xf32>
      %214 = vector.broadcast %213 : vector<24x1xf32> to vector<24x32xf32>
      %215 = arith.subf %201, %214 : vector<24x32xf32>
      %216 = arith.mulf %215, %215 : vector<24x32xf32>
      %cst_89 = arith.constant dense<0.000000e+00> : vector<24xf32>
      %217 = vector.multi_reduction <add>, %216, %cst_89 [1] : vector<24x32xf32> to vector<24xf32>
      %218 = vector.shape_cast %217 : vector<24xf32> to vector<24x1xf32>
      %cst_90 = arith.constant 3.200000e+01 : f32
      %219 = vector.broadcast %cst_90 : f32 to vector<24x1xf32>
      %220 = arith.divf %218, %219 : vector<24x1xf32>
      %221 = vector.broadcast %213 : vector<24x1xf32> to vector<24x32xf32>
      %222 = arith.subf %201, %221 : vector<24x32xf32>
      %cst_91 = arith.constant 9.99999974E-6 : f32
      %223 = vector.broadcast %cst_91 : f32 to vector<24x1xf32>
      %224 = arith.addf %220, %223 : vector<24x1xf32>
      %225 = math.rsqrt %224 : vector<24x1xf32>
      %226 = vector.broadcast %225 : vector<24x1xf32> to vector<24x32xf32>
      %227 = arith.mulf %222, %226 : vector<24x32xf32>
      %228 = vector.broadcast %208 : vector<1x32xf32> to vector<24x32xf32>
      %229 = arith.mulf %227, %228 : vector<24x32xf32>
      %230 = vector.broadcast %209 : vector<1x32xf32> to vector<24x32xf32>
      %231 = arith.addf %229, %230 : vector<24x32xf32>
      %c0_92 = arith.constant 0 : index
      %c0_93 = arith.constant 0 : index
      %232 = vector.load %arg17[%c0_92, %c0_93] : memref<24x32xf32, #tpu.memory_space<vmem>>, vector<24x32xf32>
      tpu.vector_store %arg17[%c0_92, %c0_93], %231 {strides = array<i32>} : memref<24x32xf32, #tpu.memory_space<vmem>>, vector<24x32xf32>,
    } else {
    }
    return
  }
  func.func @transform_0(%arg0: i32, %arg1: i32) -> (i32, i32) {
    %c0_i32 = arith.constant 0 : i32
    %c0_i32_0 = arith.constant 0 : i32
    return %arg0, %c0_i32 : i32, i32
  }
  func.func @transform_1(%arg0: i32, %arg1: i32) -> (i32, i32, i32) {
    %c0_i32 = arith.constant 0 : i32
    %c0_i32_0 = arith.constant 0 : i32
    %c0_i32_1 = arith.constant 0 : i32
    return %arg1, %c0_i32, %c0_i32_0 : i32, i32, i32
  }
  func.func @transform_2(%arg0: i32, %arg1: i32) -> (i32, i32, i32) {
    %c0_i32 = arith.constant 0 : i32
    %c0_i32_0 = arith.constant 0 : i32
    %c0_i32_1 = arith.constant 0 : i32
    return %arg1, %c0_i32, %c0_i32_0 : i32, i32, i32
  }
  func.func @transform_3(%arg0: i32, %arg1: i32) -> (i32, i32, i32) {
    %c0_i32 = arith.constant 0 : i32
    %c0_i32_0 = arith.constant 0 : i32
    %c0_i32_1 = arith.constant 0 : i32
    return %arg1, %c0_i32, %c0_i32_0 : i32, i32, i32
  }
  func.func @transform_4(%arg0: i32, %arg1: i32) -> (i32, i32, i32) {
    %c0_i32 = arith.constant 0 : i32
    %c0_i32_0 = arith.constant 0 : i32
    %c0_i32_1 = arith.constant 0 : i32
    return %arg1, %c0_i32, %c0_i32_0 : i32, i32, i32
  }
  func.func @transform_5(%arg0: i32, %arg1: i32) -> (i32, i32, i32) {
    %c0_i32 = arith.constant 0 : i32
    %c0_i32_0 = arith.constant 0 : i32
    %c0_i32_1 = arith.constant 0 : i32
    return %arg1, %c0_i32, %c0_i32_0 : i32, i32, i32
  }
  func.func @transform_6(%arg0: i32, %arg1: i32) -> (i32, i32, i32) {
    %c0_i32 = arith.constant 0 : i32
    %c0_i32_0 = arith.constant 0 : i32
    %c0_i32_1 = arith.constant 0 : i32
    return %arg1, %c0_i32, %c0_i32_0 : i32, i32, i32
  }
  func.func @transform_7(%arg0: i32, %arg1: i32) -> (i32, i32, i32) {
    %c0_i32 = arith.constant 0 : i32
    %c0_i32_0 = arith.constant 0 : i32
    %c0_i32_1 = arith.constant 0 : i32
    return %arg1, %c0_i32, %c0_i32_0 : i32, i32, i32
  }
  func.func @transform_8(%arg0: i32, %arg1: i32) -> (i32, i32, i32) {
    %c0_i32 = arith.constant 0 : i32
    %c0_i32_0 = arith.constant 0 : i32
    %c0_i32_1 = arith.constant 0 : i32
    return %arg1, %c0_i32, %c0_i32_0 : i32, i32, i32
  }
  func.func @transform_9(%arg0: i32, %arg1: i32) -> (i32, i32, i32) {
    %c0_i32 = arith.constant 0 : i32
    %c0_i32_0 = arith.constant 0 : i32
    %c0_i32_1 = arith.constant 0 : i32
    return %arg1, %c0_i32, %c0_i32_0 : i32, i32, i32
  }
  func.func @transform_10(%arg0: i32, %arg1: i32) -> (i32, i32, i32) {
    %c0_i32 = arith.constant 0 : i32
    %c0_i32_0 = arith.constant 0 : i32
    %c0_i32_1 = arith.constant 0 : i32
    return %arg1, %c0_i32, %c0_i32_0 : i32, i32, i32
  }
  func.func @transform_11(%arg0: i32, %arg1: i32) -> (i32, i32, i32) {
    %c0_i32 = arith.constant 0 : i32
    %c0_i32_0 = arith.constant 0 : i32
    %c0_i32_1 = arith.constant 0 : i32
    return %arg1, %c0_i32, %c0_i32_0 : i32, i32, i32
  }
  func.func @transform_12(%arg0: i32, %arg1: i32) -> (i32, i32, i32) {
    %c0_i32 = arith.constant 0 : i32
    %c0_i32_0 = arith.constant 0 : i32
    %c0_i32_1 = arith.constant 0 : i32
    return %arg1, %c0_i32, %c0_i32_0 : i32, i32, i32
  }
  func.func @transform_13(%arg0: i32, %arg1: i32) -> (i32, i32) {
    %c0_i32 = arith.constant 0 : i32
    %c0_i32_0 = arith.constant 0 : i32
    %c0_i32_1 = arith.constant 0 : i32
    return %c0_i32, %c0_i32_0 : i32, i32
  }
  func.func @transform_14(%arg0: i32, %arg1: i32) -> (i32, i32) {
    %c0_i32 = arith.constant 0 : i32
    %c0_i32_0 = arith.constant 0 : i32
    %c0_i32_1 = arith.constant 0 : i32
    return %c0_i32, %c0_i32_0 : i32, i32
  }
  func.func @transform_15(%arg0: i32, %arg1: i32) -> (i32, i32) {
    %c0_i32 = arith.constant 0 : i32
    %c0_i32_0 = arith.constant 0 : i32
    return %arg0, %c0_i32 : i32, i32
  }
}

</mosaic_0001>

<llo_original>
// kernel: visual_transformer_forward.2
$region0: #{visual_transformer_forward.2}
  #allocation0 [shape = 'u32[]', space=smem, size = 0x4, offset = 0x4, fixed_abs, tag = 'smem constant byte address 0x4 - core index']
  #allocation1 [shape = 'u32[144,128]{1,0:T(1,128)}', space=vmem, size = 0x12000, scoped, tag = 'internal scratch']
  %s0 = inlined_call_operand.vmem [shape: f32[32,48], index: 0, kind: input, shape index: {}]
  %s1 = inlined_call_operand.vmem [shape: bf16[48,32], index: 1, kind: input, shape index: {}]
  %s2 = inlined_call_operand.vmem [shape: f32[1,32], index: 2, kind: input, shape index: {}]
  %s3 = inlined_call_operand.vmem [shape: f32[1,32], index: 3, kind: input, shape index: {}]
  %s4 = inlined_call_operand.vmem [shape: f32[16,32], index: 4, kind: input, shape index: {}]
  %s5 = inlined_call_operand.vmem [shape: f32[1,32], index: 5, kind: input, shape index: {}]
  %s6 = inlined_call_operand.vmem [shape: f32[1,32], index: 6, kind: input, shape index: {}]
  %s7 = inlined_call_operand.vmem [shape: f32[48,32], index: 7, kind: output, shape index: {}]
  %s8 = sld [smem:[#allocation0]]
  $region61: #{visual_transformer_forward.2} parent=0
    _
  %s10 = ssub.s32 1, %s8
  %s11 = scalar_select 0, %s10, %s8
  loop: start=0, step=1, limit=4
  $region2: #{visual_transformer_forward.2} parent=0 // loop_pre_header
    _
  $region3: #{visual_transformer_forward.2} parent=0 // loop_header
    %s13 = sphi 0, %s17
    %p14 = scmp.ge.s32.totalorder %s13, 4
    %s23 = sphi 0, %s25
    %s26 = sphi 0, %s23
    %s27 = sphi 0, %s26
    %s43 = sphi 0, %s27
    %s47 = sphi 0, %s47
    %s49 = sphi 0, %s47
    %s50 = sphi 0, %s49
    %s64 = sphi 0, %s50
    %s68 = sphi 0, %s68
    %s70 = sphi 0, %s68
    %s71 = sphi 0, %s70
    %s85 = sphi 0, %s71
    %s89 = sphi 0, %s89
    %s91 = sphi 0, %s89
    %s92 = sphi 0, %s91
    %s106 = sphi 0, %s92
    %s110 = sphi 0, %s110
    %s112 = sphi 0, %s110
    %s113 = sphi 0, %s112
    %s127 = sphi 0, %s113
    %s131 = sphi 0, %s131
    %s133 = sphi 0, %s131
    %s134 = sphi 0, %s133
    %s148 = sphi 0, %s134
    %s152 = sphi 0, %s152
    %s154 = sphi 0, %s152
    %s155 = sphi 0, %s154
    %s169 = sphi 0, %s155
    %s175 = sphi 0, %s177
    %s178 = sphi 0, %s175
    %s179 = sphi 0, %s178
    %s195 = sphi 0, %s179
  $region4: #{visual_transformer_forward.2} parent=0 // loop_header_branch
    %16 = sbr.rel (%p14) target = $region8
  $region5: #{visual_transformer_forward.2} parent=0 // loop_body
    %s18 = ssub.s32 %s13, 1
    %s19 = ssub.s32 %s13, 2
    %s20 = sadd.s32 %s13, 1
    %s21 = ssub.s32 %s13, %s20
    %p22 = scmp.eq.s32.totalorder %s21, 0
    %s24 = sadd.s32 %s23, 1
    %s25 = scalar_select %p22, %s23, %s24
    %p28 = pneg %p22
    %p29 = scmp.eq.s32.totalorder %s13, 1
    %p30 = por %p28, %p29
    %p31 = scmp.ne.s32.totalorder %s23, %s26
    %p32 = scmp.eq.s32.totalorder %s13, 0
    %p33 = por %p31, %p32
    %p34 = scmp.ne.s32.totalorder %s23, %s26
    %p35 = scmp.eq.s32.totalorder %s18, 1
    %p36 = por %p34, %p35
    %p37 = scmp.ne.s32.totalorder %s26, %s27
    %p38 = scmp.eq.s32.totalorder %s18, 0
    %p39 = por %p37, %p38
    %p40 = scmp.ne.s32.totalorder %s26, %s27
    %p41 = scmp.eq.s32.totalorder %s19, 1
    %p42 = por %p40, %p41
    %p44 = scmp.ne.s32.totalorder %s27, %s43
    %p45 = scmp.eq.s32.totalorder %s19, 0
    %p46 = por %p44, %p45
    %s48 = sadd.s32 %s47, 1
    %p51 = scmp.eq.s32.totalorder %s13, 1
    %p52 = scmp.ne.s32.totalorder %s47, %s49
    %p53 = scmp.eq.s32.totalorder %s13, 0
    %p54 = por %p52, %p53
    %p55 = scmp.ne.s32.totalorder %s47, %s49
    %p56 = scmp.eq.s32.totalorder %s18, 1
    %p57 = por %p55, %p56
    %p58 = scmp.ne.s32.totalorder %s49, %s50
    %p59 = scmp.eq.s32.totalorder %s18, 0
    %p60 = por %p58, %p59
    %p61 = scmp.ne.s32.totalorder %s49, %s50
    %p62 = scmp.eq.s32.totalorder %s19, 1
    %p63 = por %p61, %p62
    %p65 = scmp.ne.s32.totalorder %s50, %s64
    %p66 = scmp.eq.s32.totalorder %s19, 0
    %p67 = por %p65, %p66
    %s69 = sadd.s32 %s68, 1
    %p72 = scmp.eq.s32.totalorder %s13, 1
    %p73 = scmp.ne.s32.totalorder %s68, %s70
    %p74 = scmp.eq.s32.totalorder %s13, 0
    %p75 = por %p73, %p74
    %p76 = scmp.ne.s32.totalorder %s68, %s70
    %p77 = scmp.eq.s32.totalorder %s18, 1
    %p78 = por %p76, %p77
    %p79 = scmp.ne.s32.totalorder %s70, %s71
    %p80 = scmp.eq.s32.totalorder %s18, 0
    %p81 = por %p79, %p80
    %p82 = scmp.ne.s32.totalorder %s70, %s71
    %p83 = scmp.eq.s32.totalorder %s19, 1
    %p84 = por %p82, %p83
    %p86 = scmp.ne.s32.totalorder %s71, %s85
    %p87 = scmp.eq.s32.totalorder %s19, 0
    %p88 = por %p86, %p87
    %s90 = sadd.s32 %s89, 1
    %p93 = scmp.eq.s32.totalorder %s13, 1
    %p94 = scmp.ne.s32.totalorder %s89, %s91
    %p95 = scmp.eq.s32.totalorder %s13, 0
    %p96 = por %p94, %p95
    %p97 = scmp.ne.s32.totalorder %s89, %s91
    %p98 = scmp.eq.s32.totalorder %s18, 1
    %p99 = por %p97, %p98
    %p100 = scmp.ne.s32.totalorder %s91, %s92
    %p101 = scmp.eq.s32.totalorder %s18, 0
    %p102 = por %p100, %p101
    %p103 = scmp.ne.s32.totalorder %s91, %s92
    %p104 = scmp.eq.s32.totalorder %s19, 1
    %p105 = por %p103, %p104
    %p107 = scmp.ne.s32.totalorder %s92, %s106
    %p108 = scmp.eq.s32.totalorder %s19, 0
    %p109 = por %p107, %p108
    %s111 = sadd.s32 %s110, 1
    %p114 = scmp.eq.s32.totalorder %s13, 1
    %p115 = scmp.ne.s32.totalorder %s110, %s112
    %p116 = scmp.eq.s32.totalorder %s13, 0
    %p117 = por %p115, %p116
    %p118 = scmp.ne.s32.totalorder %s110, %s112
    %p119 = scmp.eq.s32.totalorder %s18, 1
    %p120 = por %p118, %p119
    %p121 = scmp.ne.s32.totalorder %s112, %s113
    %p122 = scmp.eq.s32.totalorder %s18, 0
    %p123 = por %p121, %p122
    %p124 = scmp.ne.s32.totalorder %s112, %s113
    %p125 = scmp.eq.s32.totalorder %s19, 1
    %p126 = por %p124, %p125
    %p128 = scmp.ne.s32.totalorder %s113, %s127
    %p129 = scmp.eq.s32.totalorder %s19, 0
    %p130 = por %p128, %p129
    %s132 = sadd.s32 %s131, 1
    %p135 = scmp.eq.s32.totalorder %s13, 1
    %p136 = scmp.ne.s32.totalorder %s131, %s133
    %p137 = scmp.eq.s32.totalorder %s13, 0
    %p138 = por %p136, %p137
    %p139 = scmp.ne.s32.totalorder %s131, %s133
    %p140 = scmp.eq.s32.totalorder %s18, 1
    %p141 = por %p139, %p140
    %p142 = scmp.ne.s32.totalorder %s133, %s134
    %p143 = scmp.eq.s32.totalorder %s18, 0
    %p144 = por %p142, %p143
    %p145 = scmp.ne.s32.totalorder %s133, %s134
    %p146 = scmp.eq.s32.totalorder %s19, 1
    %p147 = por %p145, %p146
    %p149 = scmp.ne.s32.totalorder %s134, %s148
    %p150 = scmp.eq.s32.totalorder %s19, 0
    %p151 = por %p149, %p150
    %s153 = sadd.s32 %s152, 1
    %p156 = scmp.eq.s32.totalorder %s13, 1
    %p157 = scmp.ne.s32.totalorder %s152, %s154
    %p158 = scmp.eq.s32.totalorder %s13, 0
    %p159 = por %p157, %p158
    %p160 = scmp.ne.s32.totalorder %s152, %s154
    %p161 = scmp.eq.s32.totalorder %s18, 1
    %p162 = por %p160, %p161
    %p163 = scmp.ne.s32.totalorder %s154, %s155
    %p164 = scmp.eq.s32.totalorder %s18, 0
    %p165 = por %p163, %p164
    %p166 = scmp.ne.s32.totalorder %s154, %s155
    %p167 = scmp.eq.s32.totalorder %s19, 1
    %p168 = por %p166, %p167
    %p170 = scmp.ne.s32.totalorder %s155, %s169
    %p171 = scmp.eq.s32.totalorder %s19, 0
    %p172 = por %p170, %p171
    %s173 = ssub.s32 %s13, %s20
    %p174 = scmp.eq.s32.totalorder %s173, 0
    %s176 = sadd.s32 %s175, 1
    %s177 = scalar_select %p174, %s175, %s176
    %p180 = pneg %p174
    %p181 = scmp.eq.s32.totalorder %s13, 1
    %p182 = por %p180, %p181
    %p183 = scmp.ne.s32.totalorder %s175, %s178
    %p184 = scmp.eq.s32.totalorder %s13, 0
    %p185 = por %p183, %p184
    %p186 = scmp.ne.s32.totalorder %s175, %s178
    %p187 = scmp.eq.s32.totalorder %s18, 1
    %p188 = por %p186, %p187
    %p189 = scmp.ne.s32.totalorder %s178, %s179
    %p190 = scmp.eq.s32.totalorder %s18, 0
    %p191 = por %p189, %p190
    %p192 = scmp.ne.s32.totalorder %s178, %s179
    %p193 = scmp.eq.s32.totalorder %s19, 1
    %p194 = por %p192, %p193
    %p196 = scmp.ne.s32.totalorder %s179, %s195
    %p197 = scmp.eq.s32.totalorder %s19, 0
    %p198 = por %p196, %p197
    %p199 = scmp.le.s32.totalorder 1, %s13
    %p200 = scmp.lt.s32.totalorder %s13, 3
    %p201 = pnand %p199, %p200
    %p202 = pneg %p201
    // Predicated region
    $region9: #{visual_transformer_forward.2} parent=5 // pred_check
      _
    $region10: #{visual_transformer_forward.2} parent=5 // pred_check_branch
      %204 = sbr.rel (%p201) target = $region12
    $region11: #{visual_transformer_forward.2} parent=5 // pred_region
      %s205 = ssub.s32 %s13, 1
      // Predicated region
      $region13: #{visual_transformer_forward.2} parent=11 // pred_check
        %p206 = pneg %p60
      $region14: #{visual_transformer_forward.2} parent=11 // pred_check_branch
        %208 = sbr.rel (%p206) target = $region16
      $region15: #{visual_transformer_forward.2} parent=11 // pred_region
        _
      $region16: #{visual_transformer_forward.2} parent=11 // pred_fallthru
        _
      // Predicated region
      $region17: #{visual_transformer_forward.2} parent=11 // pred_check
        %p209 = pneg %p81
      $region18: #{visual_transformer_forward.2} parent=11 // pred_check_branch
        %211 = sbr.rel (%p209) target = $region20
      $region19: #{visual_transformer_forward.2} parent=11 // pred_region
        _
      $region20: #{visual_transformer_forward.2} parent=11 // pred_fallthru
        _
      // Predicated region
      $region21: #{visual_transformer_forward.2} parent=11 // pred_check
        %p212 = pneg %p102
      $region22: #{visual_transformer_forward.2} parent=11 // pred_check_branch
        %214 = sbr.rel (%p212) target = $region24
      $region23: #{visual_transformer_forward.2} parent=11 // pred_region
        _
      $region24: #{visual_transformer_forward.2} parent=11 // pred_fallthru
        _
      // Predicated region
      $region25: #{visual_transformer_forward.2} parent=11 // pred_check
        %p215 = pneg %p123
      $region26: #{visual_transformer_forward.2} parent=11 // pred_check_branch
        %217 = sbr.rel (%p215) target = $region28
      $region27: #{visual_transformer_forward.2} parent=11 // pred_region
        _
      $region28: #{visual_transformer_forward.2} parent=11 // pred_fallthru
        _
      // Predicated region
      $region29: #{visual_transformer_forward.2} parent=11 // pred_check
        %p218 = pneg %p144
      $region30: #{visual_transformer_forward.2} parent=11 // pred_check_branch
        %220 = sbr.rel (%p218) target = $region32
      $region31: #{visual_transformer_forward.2} parent=11 // pred_region
        _
      $region32: #{visual_transformer_forward.2} parent=11 // pred_fallthru
        _
      // Predicated region
      $region33: #{visual_transformer_forward.2} parent=11 // pred_check
        %p221 = pneg %p165
      $region34: #{visual_transformer_forward.2} parent=11 // pred_check_branch
        %223 = sbr.rel (%p221) target = $region36
      $region35: #{visual_transformer_forward.2} parent=11 // pred_region
        _
      $region36: #{visual_transformer_forward.2} parent=11 // pred_fallthru
        _
    $region12: #{visual_transformer_forward.2} parent=5 // pred_fallthru
      _
    %p224 = scmp.lt.s32.totalorder %s13, 2
    // Predicated region
    $region37: #{visual_transformer_forward.2} parent=5 // pred_check
      %p225 = pneg %p224
    $region38: #{visual_transformer_forward.2} parent=5 // pred_check_branch
      %227 = sbr.rel (%p225) target = $region40
    $region39: #{visual_transformer_forward.2} parent=5 // pred_region
      // Predicated region
      $region41: #{visual_transformer_forward.2} parent=39 // pred_check
        %p228 = pneg %p33
      $region42: #{visual_transformer_forward.2} parent=39 // pred_check_branch
        %230 = sbr.rel (%p228) target = $region44
      $region43: #{visual_transformer_forward.2} parent=39 // pred_region
        %s231 = smul.u32 2, %s13
        %p232 = scmp.lt.s32.totalorder %s231, 3
        %s233 = scalar_select %p232, %s231, 3
        %s234 = smul.addr %s233, 8
        %s235 = scalar_lea.vmem %s0, %s234
        %s236 = smul.u32 2, %s13
      $region44: #{visual_transformer_forward.2} parent=39 // pred_fallthru
        _
    $region40: #{visual_transformer_forward.2} parent=5 // pred_fallthru
      _
    %p237 = scmp.le.s32.totalorder 1, %s13
    %p238 = scmp.lt.s32.totalorder %s13, 3
    %p239 = pnand %p237, %p238
    %p240 = pneg %p239
    // Predicated region
    $region45: #{visual_transformer_forward.2} parent=5 // pred_check
      _
    $region46: #{visual_transformer_forward.2} parent=5 // pred_check_branch
      %242 = sbr.rel (%p239) target = $region48
    $region47: #{visual_transformer_forward.2} parent=5 // pred_region
      %s243 = ssub.s32 %s13, 1
      %s244 = smul.u32 2, %s18
      %p245 = scmp.lt.s32.totalorder %s244, 3
      %s246 = scalar_select %p245, %s244, 3
      %s247 = smul.addr %s246, 8
      %s248 = scalar_lea.vmem %s0, %s247
      %p249 = pneg %p39
      %p250 = pneg %p36
      %p251 = pneg %p60
      %p252 = pneg %p57
      %p253 = pneg %p81
      %p254 = pneg %p78
      %p255 = pneg %p102
      %p256 = pneg %p99
      %p257 = pneg %p123
      %p258 = pneg %p120
      %p259 = pneg %p144
      %p260 = pneg %p141
      %p261 = pneg %p165
      %p262 = pneg %p162
      %p263 = pneg %p191
      %p264 = pneg %p188
      %s265 = smul.u32 3, %s18
      %p266 = scmp.lt.s32.totalorder %s265, 5
      %s267 = scalar_select %p266, %s265, 5
      %s268 = smul.addr %s267, 8
      %s269 = scalar_lea.vmem %s7, %s268
      %s270 = smul.u32 2, %s18
      %p271 = scmp.lt.s32.totalorder %s270, 3
      %s272 = scalar_select %p271, %s270, 3
      %s273 = smul.addr %s272, 8
      %s274 = scalar_lea.vmem %s0, %s273
      %s275 = smul.u32 2, %s18
      %s276 = smul.u32 3, %s18
      %p277 = scmp.lt.s32.totalorder %s276, 5
      %s278 = scalar_select %p277, %s276, 5
      %s279 = smul.addr %s278, 8
      %s280 = scalar_lea.vmem %s7, %s279
      %s281 = smul.u32 3, %s18
      %v283 = vld [vmem:[%s274] sm:$0xff]
      %v284 = vld [vmem:[%s274 + $0x8] sm:$0xff]
      %v285 = vpack.c.bf16 %v284, %v283
      %v286 = vld [vmem:[%s1] sm:$0xf]
      %v287 = vld [vmem:[%s1 + $0x4] sm:$0xf]
      %v288 = vld [vmem:[%s1 + $0x8] sm:$0xf]
      %v289 = vld [vmem:[%s1 + $0xc] sm:$0xf]
      %v290 = vld [vmem:[%s1 + $0x10] sm:$0xf]
      %v291 = vld [vmem:[%s1 + $0x14] sm:$0xf]
      %v292 = vld [vmem:[%s4] sm:$0xff]
      %v293 = vld [vmem:[%s4 + $0x8] sm:$0xff]
      %v294 = vld [vmem:[%s5] sm:$0x1]
      %v295 = vld [vmem:[%s6] sm:$0x1]
      %v302 = vunpack.c.l.b16 %v286
      %v303 = vunpack.c.l.b16 %v287
      %v304 = vunpack.c.l.b16 %v288
      %v305 = vunpack.c.l.b16 %v289
      %v306 = vunpack.c.l.b16 %v290
      %v307 = vunpack.c.l.b16 %v291
      %v308 = vpack.c.b16 %v303, %v302
      %v309 = vpack.c.b16 %v305, %v304
      %v310 = vpack.c.b16 %v307, %v306
      %vm314 = vcmask 392192
      %v316 = vsel %vm314, %v285, 0
      %318 = vmatprep.subr.bf16.mxu0 0
      %319 = vmatpush1.bf16.msra.mxu0 0
      %320 = vmatprep.subr.bf16.mxu0 0
      %321 = vmatpush1.bf16.msra.mxu0 0
      %322 = vmatprep.subr.bf16.mxu0 0
      %323 = vmatpush1.bf16.msra.mxu0 0
      %324 = vmatprep.subr.bf16.mxu0 0
      %325 = vmatpush1.bf16.msra.mxu0 0
      %326 = vmatprep.subr.bf16.mxu0 0
      %327 = vmatpush1.bf16.msra.mxu0 0
      %328 = vmatprep.subr.bf16.mxu0 0
      %329 = vmatpush1.bf16.msra.mxu0 %v310
      %330 = vmatprep.subr.bf16.mxu0 0
      %331 = vmatpush1.bf16.msra.mxu0 %v309
      %332 = vmatprep.subr.bf16.mxu0 0
      %333 = vmatpush1.bf16.msra.mxu0 %v308
      %334 = vmatprep.subr.bf16.mxu0 0
      %335 = vmatpush2.bf16.msra.mxu0 0
      %336 = vmatprep.subr.bf16.mxu0 0
      %337 = vmatpush2.bf16.msra.mxu0 0
      %338 = vmatprep.subr.bf16.mxu0 0
      %339 = vmatpush2.bf16.msra.mxu0 0
      %340 = vmatprep.subr.bf16.mxu0 0
      %341 = vmatpush2.bf16.msra.mxu0 0
      %342 = vmatprep.subr.bf16.mxu0 0
      %343 = vmatpush2.bf16.msra.mxu0 0
      %344 = vmatprep.subr.bf16.mxu0 0
      %345 = vmatpush2.bf16.msra.mxu0 0
      %346 = vmatprep.subr.bf16.mxu0 0
      %347 = vmatpush2.bf16.msra.mxu0 0
      %348 = vmatprep.subr.bf16.mxu0 0
      %349 = vmatpush2.bf16.msra.mxu0 0
      %350 = vmatprep.mubr.bf16.mxu0 0
      %351 = vmatmul.mubr.bf16.gmra.mxu0 %v316
      %v352 = vpop.f32.mrf.mxu0
      %v353 = vadd.f32 %v292, %v352
      %v354 = vpop.f32.mrf.mxu0
      %v355 = vpop.f32.mrf.mxu0
      %v356 = vadd.f32 %v293, %v355
      %v357 = vpop.f32.mrf.mxu0
      %358 = vdwg.mxu0
      %vm359 = vcmask 261120
      %v360 = vsel %vm359, %v353, 0.0
      %361 = vadd.xlane.f32.xlu0 %v360
      %v362 = vpop.xlane.xlu0 %361
      %v363 = vsel %vm359, %v356, 0.0
      %364 = vadd.xlane.f32.xlu0 %v363
      %v365 = vpop.xlane.xlu0 %364
      %v366 = vrcp.pop 32.0
      %v367 = vmul.f32 %v362, %v366
      %v368 = vmul.f32 %v365, %v366
      %v369 = vsub.f32 %v353, %v367
      %v370 = vsub.f32 %v356, %v368
      %v371 = vmul.f32 %v369, %v369
      %v372 = vmul.f32 %v370, %v370
      %v373 = vsel %vm359, %v371, 0.0
      %374 = vadd.xlane.f32.xlu0 %v373
      %v375 = vpop.xlane.xlu0 %374
      %v376 = vsel %vm359, %v372, 0.0
      %377 = vadd.xlane.f32.xlu0 %v376
      %v378 = vpop.xlane.xlu0 %377
      %v379 = vmul.f32 %v375, %v366
      %v380 = vmul.f32 %v378, %v366
      %v381 = vadd.f32 %v379, 1e-05
      %v382 = vadd.f32 %v380, 1e-05
      %v383 = vrsqrt.pop %v381
      %v384 = vrsqrt.pop %v382
      %v385 = vmul.f32 %v369, %v383
      %v386 = vmul.f32 %v370, %v384
      %v388 = vlaneseq
      %v389 = vshrl.u32 %v388, 7
      %v390 = vsub.s32 0, %v389
      %v391 = vrot.slane %v294, %v390
      %v393 = vmul.f32 %v385, %v391
      %v394 = vmul.f32 %v386, %v391
      %v396 = vlaneseq
      %v397 = vshrl.u32 %v396, 7
      %v398 = vsub.s32 0, %v397
      %v399 = vrot.slane %v295, %v398
      %v401 = vadd.f32 %v393, %v399
      %v402 = vadd.f32 %v394, %v399
      %v403 = vld [vmem:[%s2] sm:$0x1]
      %v404 = vld [vmem:[%s3] sm:$0x1]
      %v405 = vadd.f32 %v403, %v404
      %vm406 = vcmask 253952
      %v407 = vsel %vm406, %v405, 0.0
      %408 = vadd.xlane.f32.xlu0 %v407
      %v409 = vpop.xlane.xlu0 %408
      %v410 = vmul.f32 %v409, %v366
      %v411 = vsub.f32 %v405, %v410
      %v412 = vmul.f32 %v411, %v411
      %v413 = vsel %vm406, %v412, 0.0
      %414 = vadd.xlane.f32.xlu0 %v413
      %v415 = vpop.xlane.xlu0 %414
      %v416 = vmul.f32 %v415, %v366
      %v417 = vadd.f32 %v416, 1e-05
      %v418 = vrsqrt.pop %v417
      %v419 = vmul.f32 %v411, %v418
      %v420 = vmul.f32 %v419, %v294
      %v421 = vadd.f32 %v420, %v295
      %vm424 = vcmask 1040384
      %v425 = vrot.slane %v401, 7
      %v426 = vrot.slane %v402, 7
      %v427 = vsel %vm424, %v425, %v426
      %v431 = vsel %vm424, %v421, %v425
      %v432 = vsel %vm424, %v426, 0.0
      %433 = vst.msk [vmem:[%s280] sm:$0xff] %vm359, %v431
      %434 = vst.msk [vmem:[%s280 + $0x8] sm:$0xff] %vm359, %v427
      %435 = vst.msk [vmem:[%s280 + $0x10] sm:$0xff] %vm359, %v432
      %s436 = smul.u32 3, %s18
      %p437 = scmp.lt.s32.totalorder %s436, 5
      %s438 = scalar_select %p437, %s436, 5
      %s439 = smul.addr %s438, 8
      %s440 = scalar_lea.vmem %s7, %s439
      // Predicated region
      $region49: #{visual_transformer_forward.2} parent=47 // pred_check
        %p441 = pneg %p188
      $region50: #{visual_transformer_forward.2} parent=47 // pred_check_branch
        %443 = sbr.rel (%p441) target = $region52
      $region51: #{visual_transformer_forward.2} parent=47 // pred_region
        %s444 = smul.u32 3, %s18
      $region52: #{visual_transformer_forward.2} parent=47 // pred_fallthru
        _
    $region48: #{visual_transformer_forward.2} parent=5 // pred_fallthru
      _
    %p445 = scmp.le.s32.totalorder 2, %s13
    // Predicated region
    $region53: #{visual_transformer_forward.2} parent=5 // pred_check
      %p446 = pneg %p445
    $region54: #{visual_transformer_forward.2} parent=5 // pred_check_branch
      %448 = sbr.rel (%p446) target = $region56
    $region55: #{visual_transformer_forward.2} parent=5 // pred_region
      %s449 = ssub.s32 %s13, 2
      // Predicated region
      $region57: #{visual_transformer_forward.2} parent=55 // pred_check
        %p450 = pneg %p194
      $region58: #{visual_transformer_forward.2} parent=55 // pred_check_branch
        %452 = sbr.rel (%p450) target = $region60
      $region59: #{visual_transformer_forward.2} parent=55 // pred_region
        %s453 = smul.u32 3, %s19
        %p454 = scmp.lt.s32.totalorder %s453, 5
        %s455 = scalar_select %p454, %s453, 5
        %s456 = smul.addr %s455, 8
        %s457 = scalar_lea.vmem %s7, %s456
      $region60: #{visual_transformer_forward.2} parent=55 // pred_fallthru
        _
    $region56: #{visual_transformer_forward.2} parent=5 // pred_fallthru
      _
  $region6: #{visual_transformer_forward.2} parent=0 // loop_footer
    %s17 = sadd.s32 1, %s13
  $region7: #{visual_transformer_forward.2} parent=0 // loop_footer_branch
    %12 = sbr.rel target = $region3
  $region8: #{visual_transformer_forward.2} parent=0 // loop_exit
    _

// kernel: visual_transformer_forward.3
$region0: #{visual_transformer_forward.3}
  #allocation0 [shape = 'u32[]', space=smem, size = 0x4, offset = 0x4, fixed_abs, tag = 'smem constant byte address 0x4 - core index']
  #allocation1 [shape = 'u32[144,128]{1,0:T(1,128)}', space=vmem, size = 0x12000, scoped, tag = 'internal scratch']
  #allocation2 [shape = 'f32[24,96]{1,0:T(8,128)}', space=vmem, size = 0x3000, scoped, tag = 'scratch operand']
  #allocation3 [shape = 'f32[24,32]{1,0:T(8,128)}', space=vmem, size = 0x3000, scoped, tag = 'scratch operand']
  %s0 = inlined_call_operand.vmem [shape: f32[48,32], index: 0, kind: input, shape index: {}, may-alias: {0,15}]
  %s1 = inlined_call_operand.vmem [shape: f32[2,1,32], index: 1, kind: input, shape index: {}]
  %s2 = inlined_call_operand.vmem [shape: f32[2,1,32], index: 2, kind: input, shape index: {}]
  %s3 = inlined_call_operand.vmem [shape: bf16[2,32,96], index: 3, kind: input, shape index: {}]
  %s4 = inlined_call_operand.vmem [shape: f32[2,1,96], index: 4, kind: input, shape index: {}]
  %s5 = inlined_call_operand.vmem [shape: bf16[2,32,32], index: 5, kind: input, shape index: {}]
  %s6 = inlined_call_operand.vmem [shape: f32[2,1,32], index: 6, kind: input, shape index: {}]
  %s7 = inlined_call_operand.vmem [shape: f32[2,1,32], index: 7, kind: input, shape index: {}]
  %s8 = inlined_call_operand.vmem [shape: f32[2,1,32], index: 8, kind: input, shape index: {}]
  %s9 = inlined_call_operand.vmem [shape: bf16[2,32,128], index: 9, kind: input, shape index: {}]
  %s10 = inlined_call_operand.vmem [shape: f32[2,1,128], index: 10, kind: input, shape index: {}]
  %s11 = inlined_call_operand.vmem [shape: bf16[2,128,32], index: 11, kind: input, shape index: {}]
  %s12 = inlined_call_operand.vmem [shape: f32[2,1,32], index: 12, kind: input, shape index: {}]
  %s13 = inlined_call_operand.vmem [shape: f32[1,32], index: 13, kind: input, shape index: {}]
  %s14 = inlined_call_operand.vmem [shape: f32[1,32], index: 14, kind: input, shape index: {}]
  %s15 = inlined_call_operand.vmem [shape: f32[48,32], index: 15, kind: output, shape index: {}, may-alias: {0,15}]
  %s16 = sld [smem:[#allocation0]]
  $region105: #{visual_transformer_forward.3} parent=0
    _
  %s18 = ssub.s32 1, %s16
  %s19 = scalar_select 0, %s18, %s16
  loop: start=0, step=1, limit=6
  $region2: #{visual_transformer_forward.3} parent=0 // loop_pre_header
    _
  $region3: #{visual_transformer_forward.3} parent=0 // loop_header
    %s21 = sphi 0, %s25
    %p22 = scmp.ge.s32.totalorder %s21, 6
    %s28 = sphi 0, %s40
    %s29 = sphi 0, %s36
    %s30 = sphi 0, %s28
    %s31 = sphi 0, %s29
    %s32 = sphi 0, %s30
    %s33 = sphi 0, %s31
    %s43 = sphi 0, %s45
    %s46 = sphi 0, %s43
    %s47 = sphi 0, %s46
    %s63 = sphi 0, %s47
    %s69 = sphi 0, %s71
    %s72 = sphi 0, %s69
    %s73 = sphi 0, %s72
    %s89 = sphi 0, %s73
    %s95 = sphi 0, %s97
    %s98 = sphi 0, %s95
    %s99 = sphi 0, %s98
    %s115 = sphi 0, %s99
    %s121 = sphi 0, %s123
    %s124 = sphi 0, %s121
    %s125 = sphi 0, %s124
    %s141 = sphi 0, %s125
    %s147 = sphi 0, %s149
    %s150 = sphi 0, %s147
    %s151 = sphi 0, %s150
    %s167 = sphi 0, %s151
    %s173 = sphi 0, %s175
    %s176 = sphi 0, %s173
    %s177 = sphi 0, %s176
    %s193 = sphi 0, %s177
    %s199 = sphi 0, %s201
    %s202 = sphi 0, %s199
    %s203 = sphi 0, %s202
    %s219 = sphi 0, %s203
    %s225 = sphi 0, %s227
    %s228 = sphi 0, %s225
    %s229 = sphi 0, %s228
    %s245 = sphi 0, %s229
    %s251 = sphi 0, %s253
    %s254 = sphi 0, %s251
    %s255 = sphi 0, %s254
    %s271 = sphi 0, %s255
    %s277 = sphi 0, %s279
    %s280 = sphi 0, %s277
    %s281 = sphi 0, %s280
    %s297 = sphi 0, %s281
    %s303 = sphi 0, %s305
    %s306 = sphi 0, %s303
    %s307 = sphi 0, %s306
    %s323 = sphi 0, %s307
    %s329 = sphi 0, %s331
    %s332 = sphi 0, %s329
    %s333 = sphi 0, %s332
    %s349 = sphi 0, %s333
    %s355 = sphi 0, %s357
    %s358 = sphi 0, %s355
    %s359 = sphi 0, %s358
    %s375 = sphi 0, %s359
    %s379 = sphi 0, %s379
    %s381 = sphi 0, %s379
    %s382 = sphi 0, %s381
    %s396 = sphi 0, %s382
    %s400 = sphi 0, %s400
    %s402 = sphi 0, %s400
    %s403 = sphi 0, %s402
    %s417 = sphi 0, %s403
    %s423 = sphi 0, %s425
    %s426 = sphi 0, %s423
    %s427 = sphi 0, %s426
    %s443 = sphi 0, %s427
  $region4: #{visual_transformer_forward.3} parent=0 // loop_header_branch
    %24 = sbr.rel (%p22) target = $region8
  $region5: #{visual_transformer_forward.3} parent=0 // loop_body
    %s26 = ssub.s32 %s21, 1
    %s27 = ssub.s32 %s21, 2
    %s34 = sadd.s32 1, %s29
    %p35 = scmp.ge.s32.totalorder %s34, 2
    %s36 = scalar_select %p35, 0, %s34
    %s37 = sadd.s32 1, %s28
    %s38 = scalar_select %p35, %s37, %s28
    %p39 = scmp.ge.s32.totalorder %s38, 2
    %s40 = scalar_select %p39, 0, %s38
    %s41 = ssub.s32 %s28, %s40
    %p42 = scmp.eq.s32.totalorder %s41, 0
    %s44 = sadd.s32 %s43, 1
    %s45 = scalar_select %p42, %s43, %s44
    %p48 = pneg %p42
    %p49 = scmp.eq.s32.totalorder %s21, 3
    %p50 = por %p48, %p49
    %p51 = scmp.ne.s32.totalorder %s43, %s46
    %p52 = scmp.eq.s32.totalorder %s21, 0
    %p53 = por %p51, %p52
    %p54 = scmp.ne.s32.totalorder %s43, %s46
    %p55 = scmp.eq.s32.totalorder %s26, 3
    %p56 = por %p54, %p55
    %p57 = scmp.ne.s32.totalorder %s46, %s47
    %p58 = scmp.eq.s32.totalorder %s26, 0
    %p59 = por %p57, %p58
    %p60 = scmp.ne.s32.totalorder %s46, %s47
    %p61 = scmp.eq.s32.totalorder %s27, 3
    %p62 = por %p60, %p61
    %p64 = scmp.ne.s32.totalorder %s47, %s63
    %p65 = scmp.eq.s32.totalorder %s27, 0
    %p66 = por %p64, %p65
    %s67 = ssub.s32 %s29, %s36
    %p68 = scmp.eq.s32.totalorder %s67, 0
    %s70 = sadd.s32 %s69, 1
    %s71 = scalar_select %p68, %s69, %s70
    %p74 = pneg %p68
    %p75 = scmp.eq.s32.totalorder %s21, 3
    %p76 = por %p74, %p75
    %p77 = scmp.ne.s32.totalorder %s69, %s72
    %p78 = scmp.eq.s32.totalorder %s21, 0
    %p79 = por %p77, %p78
    %p80 = scmp.ne.s32.totalorder %s69, %s72
    %p81 = scmp.eq.s32.totalorder %s26, 3
    %p82 = por %p80, %p81
    %p83 = scmp.ne.s32.totalorder %s72, %s73
    %p84 = scmp.eq.s32.totalorder %s26, 0
    %p85 = por %p83, %p84
    %p86 = scmp.ne.s32.totalorder %s72, %s73
    %p87 = scmp.eq.s32.totalorder %s27, 3
    %p88 = por %p86, %p87
    %p90 = scmp.ne.s32.totalorder %s73, %s89
    %p91 = scmp.eq.s32.totalorder %s27, 0
    %p92 = por %p90, %p91
    %s93 = ssub.s32 %s29, %s36
    %p94 = scmp.eq.s32.totalorder %s93, 0
    %s96 = sadd.s32 %s95, 1
    %s97 = scalar_select %p94, %s95, %s96
    %p100 = pneg %p94
    %p101 = scmp.eq.s32.totalorder %s21, 3
    %p102 = por %p100, %p101
    %p103 = scmp.ne.s32.totalorder %s95, %s98
    %p104 = scmp.eq.s32.totalorder %s21, 0
    %p105 = por %p103, %p104
    %p106 = scmp.ne.s32.totalorder %s95, %s98
    %p107 = scmp.eq.s32.totalorder %s26, 3
    %p108 = por %p106, %p107
    %p109 = scmp.ne.s32.totalorder %s98, %s99
    %p110 = scmp.eq.s32.totalorder %s26, 0
    %p111 = por %p109, %p110
    %p112 = scmp.ne.s32.totalorder %s98, %s99
    %p113 = scmp.eq.s32.totalorder %s27, 3
    %p114 = por %p112, %p113
    %p116 = scmp.ne.s32.totalorder %s99, %s115
    %p117 = scmp.eq.s32.totalorder %s27, 0
    %p118 = por %p116, %p117
    %s119 = ssub.s32 %s29, %s36
    %p120 = scmp.eq.s32.totalorder %s119, 0
    %s122 = sadd.s32 %s121, 1
    %s123 = scalar_select %p120, %s121, %s122
    %p126 = pneg %p120
    %p127 = scmp.eq.s32.totalorder %s21, 3
    %p128 = por %p126, %p127
    %p129 = scmp.ne.s32.totalorder %s121, %s124
    %p130 = scmp.eq.s32.totalorder %s21, 0
    %p131 = por %p129, %p130
    %p132 = scmp.ne.s32.totalorder %s121, %s124
    %p133 = scmp.eq.s32.totalorder %s26, 3
    %p134 = por %p132, %p133
    %p135 = scmp.ne.s32.totalorder %s124, %s125
    %p136 = scmp.eq.s32.totalorder %s26, 0
    %p137 = por %p135, %p136
    %p138 = scmp.ne.s32.totalorder %s124, %s125
    %p139 = scmp.eq.s32.totalorder %s27, 3
    %p140 = por %p138, %p139
    %p142 = scmp.ne.s32.totalorder %s125, %s141
    %p143 = scmp.eq.s32.totalorder %s27, 0
    %p144 = por %p142, %p143
    %s145 = ssub.s32 %s29, %s36
    %p146 = scmp.eq.s32.totalorder %s145, 0
    %s148 = sadd.s32 %s147, 1
    %s149 = scalar_select %p146, %s147, %s148
    %p152 = pneg %p146
    %p153 = scmp.eq.s32.totalorder %s21, 3
    %p154 = por %p152, %p153
    %p155 = scmp.ne.s32.totalorder %s147, %s150
    %p156 = scmp.eq.s32.totalorder %s21, 0
    %p157 = por %p155, %p156
    %p158 = scmp.ne.s32.totalorder %s147, %s150
    %p159 = scmp.eq.s32.totalorder %s26, 3
    %p160 = por %p158, %p159
    %p161 = scmp.ne.s32.totalorder %s150, %s151
    %p162 = scmp.eq.s32.totalorder %s26, 0
    %p163 = por %p161, %p162
    %p164 = scmp.ne.s32.totalorder %s150, %s151
    %p165 = scmp.eq.s32.totalorder %s27, 3
    %p166 = por %p164, %p165
    %p168 = scmp.ne.s32.totalorder %s151, %s167
    %p169 = scmp.eq.s32.totalorder %s27, 0
    %p170 = por %p168, %p169
    %s171 = ssub.s32 %s29, %s36
    %p172 = scmp.eq.s32.totalorder %s171, 0
    %s174 = sadd.s32 %s173, 1
    %s175 = scalar_select %p172, %s173, %s174
    %p178 = pneg %p172
    %p179 = scmp.eq.s32.totalorder %s21, 3
    %p180 = por %p178, %p179
    %p181 = scmp.ne.s32.totalorder %s173, %s176
    %p182 = scmp.eq.s32.totalorder %s21, 0
    %p183 = por %p181, %p182
    %p184 = scmp.ne.s32.totalorder %s173, %s176
    %p185 = scmp.eq.s32.totalorder %s26, 3
    %p186 = por %p184, %p185
    %p187 = scmp.ne.s32.totalorder %s176, %s177
    %p188 = scmp.eq.s32.totalorder %s26, 0
    %p189 = por %p187, %p188
    %p190 = scmp.ne.s32.totalorder %s176, %s177
    %p191 = scmp.eq.s32.totalorder %s27, 3
    %p192 = por %p190, %p191
    %p194 = scmp.ne.s32.totalorder %s177, %s193
    %p195 = scmp.eq.s32.totalorder %s27, 0
    %p196 = por %p194, %p195
    %s197 = ssub.s32 %s29, %s36
    %p198 = scmp.eq.s32.totalorder %s197, 0
    %s200 = sadd.s32 %s199, 1
    %s201 = scalar_select %p198, %s199, %s200
    %p204 = pneg %p198
    %p205 = scmp.eq.s32.totalorder %s21, 3
    %p206 = por %p204, %p205
    %p207 = scmp.ne.s32.totalorder %s199, %s202
    %p208 = scmp.eq.s32.totalorder %s21, 0
    %p209 = por %p207, %p208
    %p210 = scmp.ne.s32.totalorder %s199, %s202
    %p211 = scmp.eq.s32.totalorder %s26, 3
    %p212 = por %p210, %p211
    %p213 = scmp.ne.s32.totalorder %s202, %s203
    %p214 = scmp.eq.s32.totalorder %s26, 0
    %p215 = por %p213, %p214
    %p216 = scmp.ne.s32.totalorder %s202, %s203
    %p217 = scmp.eq.s32.totalorder %s27, 3
    %p218 = por %p216, %p217
    %p220 = scmp.ne.s32.totalorder %s203, %s219
    %p221 = scmp.eq.s32.totalorder %s27, 0
    %p222 = por %p220, %p221
    %s223 = ssub.s32 %s29, %s36
    %p224 = scmp.eq.s32.totalorder %s223, 0
    %s226 = sadd.s32 %s225, 1
    %s227 = scalar_select %p224, %s225, %s226
    %p230 = pneg %p224
    %p231 = scmp.eq.s32.totalorder %s21, 3
    %p232 = por %p230, %p231
    %p233 = scmp.ne.s32.totalorder %s225, %s228
    %p234 = scmp.eq.s32.totalorder %s21, 0
    %p235 = por %p233, %p234
    %p236 = scmp.ne.s32.totalorder %s225, %s228
    %p237 = scmp.eq.s32.totalorder %s26, 3
    %p238 = por %p236, %p237
    %p239 = scmp.ne.s32.totalorder %s228, %s229
    %p240 = scmp.eq.s32.totalorder %s26, 0
    %p241 = por %p239, %p240
    %p242 = scmp.ne.s32.totalorder %s228, %s229
    %p243 = scmp.eq.s32.totalorder %s27, 3
    %p244 = por %p242, %p243
    %p246 = scmp.ne.s32.totalorder %s229, %s245
    %p247 = scmp.eq.s32.totalorder %s27, 0
    %p248 = por %p246, %p247
    %s249 = ssub.s32 %s29, %s36
    %p250 = scmp.eq.s32.totalorder %s249, 0
    %s252 = sadd.s32 %s251, 1
    %s253 = scalar_select %p250, %s251, %s252
    %p256 = pneg %p250
    %p257 = scmp.eq.s32.totalorder %s21, 3
    %p258 = por %p256, %p257
    %p259 = scmp.ne.s32.totalorder %s251, %s254
    %p260 = scmp.eq.s32.totalorder %s21, 0
    %p261 = por %p259, %p260
    %p262 = scmp.ne.s32.totalorder %s251, %s254
    %p263 = scmp.eq.s32.totalorder %s26, 3
    %p264 = por %p262, %p263
    %p265 = scmp.ne.s32.totalorder %s254, %s255
    %p266 = scmp.eq.s32.totalorder %s26, 0
    %p267 = por %p265, %p266
    %p268 = scmp.ne.s32.totalorder %s254, %s255
    %p269 = scmp.eq.s32.totalorder %s27, 3
    %p270 = por %p268, %p269
    %p272 = scmp.ne.s32.totalorder %s255, %s271
    %p273 = scmp.eq.s32.totalorder %s27, 0
    %p274 = por %p272, %p273
    %s275 = ssub.s32 %s29, %s36
    %p276 = scmp.eq.s32.totalorder %s275, 0
    %s278 = sadd.s32 %s277, 1
    %s279 = scalar_select %p276, %s277, %s278
    %p282 = pneg %p276
    %p283 = scmp.eq.s32.totalorder %s21, 3
    %p284 = por %p282, %p283
    %p285 = scmp.ne.s32.totalorder %s277, %s280
    %p286 = scmp.eq.s32.totalorder %s21, 0
    %p287 = por %p285, %p286
    %p288 = scmp.ne.s32.totalorder %s277, %s280
    %p289 = scmp.eq.s32.totalorder %s26, 3
    %p290 = por %p288, %p289
    %p291 = scmp.ne.s32.totalorder %s280, %s281
    %p292 = scmp.eq.s32.totalorder %s26, 0
    %p293 = por %p291, %p292
    %p294 = scmp.ne.s32.totalorder %s280, %s281
    %p295 = scmp.eq.s32.totalorder %s27, 3
    %p296 = por %p294, %p295
    %p298 = scmp.ne.s32.totalorder %s281, %s297
    %p299 = scmp.eq.s32.totalorder %s27, 0
    %p300 = por %p298, %p299
    %s301 = ssub.s32 %s29, %s36
    %p302 = scmp.eq.s32.totalorder %s301, 0
    %s304 = sadd.s32 %s303, 1
    %s305 = scalar_select %p302, %s303, %s304
    %p308 = pneg %p302
    %p309 = scmp.eq.s32.totalorder %s21, 3
    %p310 = por %p308, %p309
    %p311 = scmp.ne.s32.totalorder %s303, %s306
    %p312 = scmp.eq.s32.totalorder %s21, 0
    %p313 = por %p311, %p312
    %p314 = scmp.ne.s32.totalorder %s303, %s306
    %p315 = scmp.eq.s32.totalorder %s26, 3
    %p316 = por %p314, %p315
    %p317 = scmp.ne.s32.totalorder %s306, %s307
    %p318 = scmp.eq.s32.totalorder %s26, 0
    %p319 = por %p317, %p318
    %p320 = scmp.ne.s32.totalorder %s306, %s307
    %p321 = scmp.eq.s32.totalorder %s27, 3
    %p322 = por %p320, %p321
    %p324 = scmp.ne.s32.totalorder %s307, %s323
    %p325 = scmp.eq.s32.totalorder %s27, 0
    %p326 = por %p324, %p325
    %s327 = ssub.s32 %s29, %s36
    %p328 = scmp.eq.s32.totalorder %s327, 0
    %s330 = sadd.s32 %s329, 1
    %s331 = scalar_select %p328, %s329, %s330
    %p334 = pneg %p328
    %p335 = scmp.eq.s32.totalorder %s21, 3
    %p336 = por %p334, %p335
    %p337 = scmp.ne.s32.totalorder %s329, %s332
    %p338 = scmp.eq.s32.totalorder %s21, 0
    %p339 = por %p337, %p338
    %p340 = scmp.ne.s32.totalorder %s329, %s332
    %p341 = scmp.eq.s32.totalorder %s26, 3
    %p342 = por %p340, %p341
    %p343 = scmp.ne.s32.totalorder %s332, %s333
    %p344 = scmp.eq.s32.totalorder %s26, 0
    %p345 = por %p343, %p344
    %p346 = scmp.ne.s32.totalorder %s332, %s333
    %p347 = scmp.eq.s32.totalorder %s27, 3
    %p348 = por %p346, %p347
    %p350 = scmp.ne.s32.totalorder %s333, %s349
    %p351 = scmp.eq.s32.totalorder %s27, 0
    %p352 = por %p350, %p351
    %s353 = ssub.s32 %s29, %s36
    %p354 = scmp.eq.s32.totalorder %s353, 0
    %s356 = sadd.s32 %s355, 1
    %s357 = scalar_select %p354, %s355, %s356
    %p360 = pneg %p354
    %p361 = scmp.eq.s32.totalorder %s21, 3
    %p362 = por %p360, %p361
    %p363 = scmp.ne.s32.totalorder %s355, %s358
    %p364 = scmp.eq.s32.totalorder %s21, 0
    %p365 = por %p363, %p364
    %p366 = scmp.ne.s32.totalorder %s355, %s358
    %p367 = scmp.eq.s32.totalorder %s26, 3
    %p368 = por %p366, %p367
    %p369 = scmp.ne.s32.totalorder %s358, %s359
    %p370 = scmp.eq.s32.totalorder %s26, 0
    %p371 = por %p369, %p370
    %p372 = scmp.ne.s32.totalorder %s358, %s359
    %p373 = scmp.eq.s32.totalorder %s27, 3
    %p374 = por %p372, %p373
    %p376 = scmp.ne.s32.totalorder %s359, %s375
    %p377 = scmp.eq.s32.totalorder %s27, 0
    %p378 = por %p376, %p377
    %s380 = sadd.s32 %s379, 1
    %p383 = scmp.eq.s32.totalorder %s21, 3
    %p384 = scmp.ne.s32.totalorder %s379, %s381
    %p385 = scmp.eq.s32.totalorder %s21, 0
    %p386 = por %p384, %p385
    %p387 = scmp.ne.s32.totalorder %s379, %s381
    %p388 = scmp.eq.s32.totalorder %s26, 3
    %p389 = por %p387, %p388
    %p390 = scmp.ne.s32.totalorder %s381, %s382
    %p391 = scmp.eq.s32.totalorder %s26, 0
    %p392 = por %p390, %p391
    %p393 = scmp.ne.s32.totalorder %s381, %s382
    %p394 = scmp.eq.s32.totalorder %s27, 3
    %p395 = por %p393, %p394
    %p397 = scmp.ne.s32.totalorder %s382, %s396
    %p398 = scmp.eq.s32.totalorder %s27, 0
    %p399 = por %p397, %p398
    %s401 = sadd.s32 %s400, 1
    %p404 = scmp.eq.s32.totalorder %s21, 3
    %p405 = scmp.ne.s32.totalorder %s400, %s402
    %p406 = scmp.eq.s32.totalorder %s21, 0
    %p407 = por %p405, %p406
    %p408 = scmp.ne.s32.totalorder %s400, %s402
    %p409 = scmp.eq.s32.totalorder %s26, 3
    %p410 = por %p408, %p409
    %p411 = scmp.ne.s32.totalorder %s402, %s403
    %p412 = scmp.eq.s32.totalorder %s26, 0
    %p413 = por %p411, %p412
    %p414 = scmp.ne.s32.totalorder %s402, %s403
    %p415 = scmp.eq.s32.totalorder %s27, 3
    %p416 = por %p414, %p415
    %p418 = scmp.ne.s32.totalorder %s403, %s417
    %p419 = scmp.eq.s32.totalorder %s27, 0
    %p420 = por %p418, %p419
    %s421 = ssub.s32 %s28, %s40
    %p422 = scmp.eq.s32.totalorder %s421, 0
    %s424 = sadd.s32 %s423, 1
    %s425 = scalar_select %p422, %s423, %s424
    %p428 = pneg %p422
    %p429 = scmp.eq.s32.totalorder %s21, 3
    %p430 = por %p428, %p429
    %p431 = scmp.ne.s32.totalorder %s423, %s426
    %p432 = scmp.eq.s32.totalorder %s21, 0
    %p433 = por %p431, %p432
    %p434 = scmp.ne.s32.totalorder %s423, %s426
    %p435 = scmp.eq.s32.totalorder %s26, 3
    %p436 = por %p434, %p435
    %p437 = scmp.ne.s32.totalorder %s426, %s427
    %p438 = scmp.eq.s32.totalorder %s26, 0
    %p439 = por %p437, %p438
    %p440 = scmp.ne.s32.totalorder %s426, %s427
    %p441 = scmp.eq.s32.totalorder %s27, 3
    %p442 = por %p440, %p441
    %p444 = scmp.ne.s32.totalorder %s427, %s443
    %p445 = scmp.eq.s32.totalorder %s27, 0
    %p446 = por %p444, %p445
    %p447 = scmp.le.s32.totalorder 1, %s21
    %p448 = scmp.lt.s32.totalorder %s21, 5
    %p449 = pnand %p447, %p448
    %p450 = pneg %p449
    // Predicated region
    $region9: #{visual_transformer_forward.3} parent=5 // pred_check
      _
    $region10: #{visual_transformer_forward.3} parent=5 // pred_check_branch
      %452 = sbr.rel (%p449) target = $region12
    $region11: #{visual_transformer_forward.3} parent=5 // pred_region
      %s453 = ssub.s32 %s21, 1
      // Predicated region
      $region13: #{visual_transformer_forward.3} parent=11 // pred_check
        %p454 = pneg %p392
      $region14: #{visual_transformer_forward.3} parent=11 // pred_check_branch
        %456 = sbr.rel (%p454) target = $region16
      $region15: #{visual_transformer_forward.3} parent=11 // pred_region
        _
      $region16: #{visual_transformer_forward.3} parent=11 // pred_fallthru
        _
      // Predicated region
      $region17: #{visual_transformer_forward.3} parent=11 // pred_check
        %p457 = pneg %p413
      $region18: #{visual_transformer_forward.3} parent=11 // pred_check_branch
        %459 = sbr.rel (%p457) target = $region20
      $region19: #{visual_transformer_forward.3} parent=11 // pred_region
        _
      $region20: #{visual_transformer_forward.3} parent=11 // pred_fallthru
        _
    $region12: #{visual_transformer_forward.3} parent=5 // pred_fallthru
      _
    %p460 = scmp.lt.s32.totalorder %s21, 4
    // Predicated region
    $region21: #{visual_transformer_forward.3} parent=5 // pred_check
      %p461 = pneg %p460
    $region22: #{visual_transformer_forward.3} parent=5 // pred_check_branch
      %463 = sbr.rel (%p461) target = $region24
    $region23: #{visual_transformer_forward.3} parent=5 // pred_region
      // Predicated region
      $region25: #{visual_transformer_forward.3} parent=23 // pred_check
        %p464 = pneg %p53
      $region26: #{visual_transformer_forward.3} parent=23 // pred_check_branch
        %466 = sbr.rel (%p464) target = $region28
      $region27: #{visual_transformer_forward.3} parent=23 // pred_region
        %s467 = smul.u32 3, %s28
        %p468 = scmp.lt.s32.totalorder %s467, 5
        %s469 = scalar_select %p468, %s467, 5
        %s470 = smul.addr %s469, 8
        %s471 = scalar_lea.vmem %s0, %s470
        %s472 = smul.u32 3, %s28
      $region28: #{visual_transformer_forward.3} parent=23 // pred_fallthru
        _
      // Predicated region
      $region29: #{visual_transformer_forward.3} parent=23 // pred_check
        %p473 = pneg %p79
      $region30: #{visual_transformer_forward.3} parent=23 // pred_check_branch
        %475 = sbr.rel (%p473) target = $region32
      $region31: #{visual_transformer_forward.3} parent=23 // pred_region
        %p476 = scmp.lt.s32.totalorder %s29, 1
        %s477 = scalar_select %p476, %s29, 1
        %s478 = scalar_lea.vmem %s1, %s477
      $region32: #{visual_transformer_forward.3} parent=23 // pred_fallthru
        _
      // Predicated region
      $region33: #{visual_transformer_forward.3} parent=23 // pred_check
        %p479 = pneg %p105
      $region34: #{visual_transformer_forward.3} parent=23 // pred_check_branch
        %481 = sbr.rel (%p479) target = $region36
      $region35: #{visual_transformer_forward.3} parent=23 // pred_region
        %p482 = scmp.lt.s32.totalorder %s29, 1
        %s483 = scalar_select %p482, %s29, 1
        %s484 = scalar_lea.vmem %s2, %s483
      $region36: #{visual_transformer_forward.3} parent=23 // pred_fallthru
        _
      // Predicated region
      $region37: #{visual_transformer_forward.3} parent=23 // pred_check
        %p485 = pneg %p131
      $region38: #{visual_transformer_forward.3} parent=23 // pred_check_branch
        %487 = sbr.rel (%p485) target = $region40
      $region39: #{visual_transformer_forward.3} parent=23 // pred_region
        %p488 = scmp.lt.s32.totalorder %s29, 1
        %s489 = scalar_select %p488, %s29, 1
        %s490 = smul.addr %s489, 4
        %s491 = smul.addr %s490, 4
        %s492 = scalar_lea.vmem %s3, %s491
      $region40: #{visual_transformer_forward.3} parent=23 // pred_fallthru
        _
      // Predicated region
      $region41: #{visual_transformer_forward.3} parent=23 // pred_check
        %p493 = pneg %p157
      $region42: #{visual_transformer_forward.3} parent=23 // pred_check_branch
        %495 = sbr.rel (%p493) target = $region44
      $region43: #{visual_transformer_forward.3} parent=23 // pred_region
        %p496 = scmp.lt.s32.totalorder %s29, 1
        %s497 = scalar_select %p496, %s29, 1
        %s498 = scalar_lea.vmem %s4, %s497
      $region44: #{visual_transformer_forward.3} parent=23 // pred_fallthru
        _
      // Predicated region
      $region45: #{visual_transformer_forward.3} parent=23 // pred_check
        %p499 = pneg %p183
      $region46: #{visual_transformer_forward.3} parent=23 // pred_check_branch
        %501 = sbr.rel (%p499) target = $region48
      $region47: #{visual_transformer_forward.3} parent=23 // pred_region
        %p502 = scmp.lt.s32.totalorder %s29, 1
        %s503 = scalar_select %p502, %s29, 1
        %s504 = smul.addr %s503, 4
        %s505 = smul.addr %s504, 4
        %s506 = scalar_lea.vmem %s5, %s505
      $region48: #{visual_transformer_forward.3} parent=23 // pred_fallthru
        _
      // Predicated region
      $region49: #{visual_transformer_forward.3} parent=23 // pred_check
        %p507 = pneg %p209
      $region50: #{visual_transformer_forward.3} parent=23 // pred_check_branch
        %509 = sbr.rel (%p507) target = $region52
      $region51: #{visual_transformer_forward.3} parent=23 // pred_region
        %p510 = scmp.lt.s32.totalorder %s29, 1
        %s511 = scalar_select %p510, %s29, 1
        %s512 = scalar_lea.vmem %s6, %s511
      $region52: #{visual_transformer_forward.3} parent=23 // pred_fallthru
        _
      // Predicated region
      $region53: #{visual_transformer_forward.3} parent=23 // pred_check
        %p513 = pneg %p235
      $region54: #{visual_transformer_forward.3} parent=23 // pred_check_branch
        %515 = sbr.rel (%p513) target = $region56
      $region55: #{visual_transformer_forward.3} parent=23 // pred_region
        %p516 = scmp.lt.s32.totalorder %s29, 1
        %s517 = scalar_select %p516, %s29, 1
        %s518 = scalar_lea.vmem %s7, %s517
      $region56: #{visual_transformer_forward.3} parent=23 // pred_fallthru
        _
      // Predicated region
      $region57: #{visual_transformer_forward.3} parent=23 // pred_check
        %p519 = pneg %p261
      $region58: #{visual_transformer_forward.3} parent=23 // pred_check_branch
        %521 = sbr.rel (%p519) target = $region60
      $region59: #{visual_transformer_forward.3} parent=23 // pred_region
        %p522 = scmp.lt.s32.totalorder %s29, 1
        %s523 = scalar_select %p522, %s29, 1
        %s524 = scalar_lea.vmem %s8, %s523
      $region60: #{visual_transformer_forward.3} parent=23 // pred_fallthru
        _
      // Predicated region
      $region61: #{visual_transformer_forward.3} parent=23 // pred_check
        %p525 = pneg %p287
      $region62: #{visual_transformer_forward.3} parent=23 // pred_check_branch
        %527 = sbr.rel (%p525) target = $region64
      $region63: #{visual_transformer_forward.3} parent=23 // pred_region
        %p528 = scmp.lt.s32.totalorder %s29, 1
        %s529 = scalar_select %p528, %s29, 1
        %s530 = smul.addr %s529, 4
        %s531 = smul.addr %s530, 4
        %s532 = scalar_lea.vmem %s9, %s531
      $region64: #{visual_transformer_forward.3} parent=23 // pred_fallthru
        _
      // Predicated region
      $region65: #{visual_transformer_forward.3} parent=23 // pred_check
        %p533 = pneg %p313
      $region66: #{visual_transformer_forward.3} parent=23 // pred_check_branch
        %535 = sbr.rel (%p533) target = $region68
      $region67: #{visual_transformer_forward.3} parent=23 // pred_region
        %p536 = scmp.lt.s32.totalorder %s29, 1
        %s537 = scalar_select %p536, %s29, 1
        %s538 = scalar_lea.vmem %s10, %s537
      $region68: #{visual_transformer_forward.3} parent=23 // pred_fallthru
        _
      // Predicated region
      $region69: #{visual_transformer_forward.3} parent=23 // pred_check
        %p539 = pneg %p339
      $region70: #{visual_transformer_forward.3} parent=23 // pred_check_branch
        %541 = sbr.rel (%p539) target = $region72
      $region71: #{visual_transformer_forward.3} parent=23 // pred_region
        %p542 = scmp.lt.s32.totalorder %s29, 1
        %s543 = scalar_select %p542, %s29, 1
        %s544 = smul.addr %s543, 16
        %s545 = smul.addr %s544, 4
        %s546 = scalar_lea.vmem %s11, %s545
      $region72: #{visual_transformer_forward.3} parent=23 // pred_fallthru
        _
      // Predicated region
      $region73: #{visual_transformer_forward.3} parent=23 // pred_check
        %p547 = pneg %p365
      $region74: #{visual_transformer_forward.3} parent=23 // pred_check_branch
        %549 = sbr.rel (%p547) target = $region76
      $region75: #{visual_transformer_forward.3} parent=23 // pred_region
        %p550 = scmp.lt.s32.totalorder %s29, 1
        %s551 = scalar_select %p550, %s29, 1
        %s552 = scalar_lea.vmem %s12, %s551
      $region76: #{visual_transformer_forward.3} parent=23 // pred_fallthru
        _
    $region24: #{visual_transformer_forward.3} parent=5 // pred_fallthru
      _
    %p553 = scmp.le.s32.totalorder 1, %s21
    %p554 = scmp.lt.s32.totalorder %s21, 5
    %p555 = pnand %p553, %p554
    %p556 = pneg %p555
    // Predicated region
    $region77: #{visual_transformer_forward.3} parent=5 // pred_check
      _
    $region78: #{visual_transformer_forward.3} parent=5 // pred_check_branch
      %558 = sbr.rel (%p555) target = $region80
    $region79: #{visual_transformer_forward.3} parent=5 // pred_region
      %s559 = ssub.s32 %s21, 1
      %s560 = smul.u32 3, %s30
      %p561 = scmp.lt.s32.totalorder %s560, 5
      %s562 = scalar_select %p561, %s560, 5
      %s563 = smul.addr %s562, 8
      %s564 = scalar_lea.vmem %s0, %s563
      %p565 = pneg %p59
      %p566 = pneg %p56
      %p567 = scmp.lt.s32.totalorder %s31, 1
      %s568 = scalar_select %p567, %s31, 1
      %s569 = scalar_lea.vmem %s1, %s568
      %p570 = pneg %p85
      %p571 = pneg %p82
      %p572 = scmp.lt.s32.totalorder %s31, 1
      %s573 = scalar_select %p572, %s31, 1
      %s574 = scalar_lea.vmem %s2, %s573
      %p575 = pneg %p111
      %p576 = pneg %p108
      %p577 = scmp.lt.s32.totalorder %s31, 1
      %s578 = scalar_select %p577, %s31, 1
      %s579 = smul.addr %s578, 4
      %s580 = smul.addr %s579, 4
      %s581 = scalar_lea.vmem %s3, %s580
      %p582 = pneg %p137
      %p583 = pneg %p134
      %p584 = scmp.lt.s32.totalorder %s31, 1
      %s585 = scalar_select %p584, %s31, 1
      %s586 = scalar_lea.vmem %s4, %s585
      %p587 = pneg %p163
      %p588 = pneg %p160
      %p589 = scmp.lt.s32.totalorder %s31, 1
      %s590 = scalar_select %p589, %s31, 1
      %s591 = smul.addr %s590, 4
      %s592 = smul.addr %s591, 4
      %s593 = scalar_lea.vmem %s5, %s592
      %p594 = pneg %p189
      %p595 = pneg %p186
      %p596 = scmp.lt.s32.totalorder %s31, 1
      %s597 = scalar_select %p596, %s31, 1
      %s598 = scalar_lea.vmem %s6, %s597
      %p599 = pneg %p215
      %p600 = pneg %p212
      %p601 = scmp.lt.s32.totalorder %s31, 1
      %s602 = scalar_select %p601, %s31, 1
      %s603 = scalar_lea.vmem %s7, %s602
      %p604 = pneg %p241
      %p605 = pneg %p238
      %p606 = scmp.lt.s32.totalorder %s31, 1
      %s607 = scalar_select %p606, %s31, 1
      %s608 = scalar_lea.vmem %s8, %s607
      %p609 = pneg %p267
      %p610 = pneg %p264
      %p611 = scmp.lt.s32.totalorder %s31, 1
      %s612 = scalar_select %p611, %s31, 1
      %s613 = smul.addr %s612, 4
      %s614 = smul.addr %s613, 4
      %s615 = scalar_lea.vmem %s9, %s614
      %p616 = pneg %p293
      %p617 = pneg %p290
      %p618 = scmp.lt.s32.totalorder %s31, 1
      %s619 = scalar_select %p618, %s31, 1
      %s620 = scalar_lea.vmem %s10, %s619
      %p621 = pneg %p319
      %p622 = pneg %p316
      %p623 = scmp.lt.s32.totalorder %s31, 1
      %s624 = scalar_select %p623, %s31, 1
      %s625 = smul.addr %s624, 16
      %s626 = smul.addr %s625, 4
      %s627 = scalar_lea.vmem %s11, %s626
      %p628 = pneg %p345
      %p629 = pneg %p342
      %p630 = scmp.lt.s32.totalorder %s31, 1
      %s631 = scalar_select %p630, %s31, 1
      %s632 = scalar_lea.vmem %s12, %s631
      %p633 = pneg %p371
      %p634 = pneg %p368
      %p635 = pneg %p392
      %p636 = pneg %p389
      %p637 = pneg %p413
      %p638 = pneg %p410
      %p639 = pneg %p439
      %p640 = pneg %p436
      %s641 = smul.u32 3, %s30
      %p642 = scmp.lt.s32.totalorder %s641, 5
      %s643 = scalar_select %p642, %s641, 5
      %s644 = smul.addr %s643, 8
      %s645 = scalar_lea.vmem %s15, %s644
      %s646 = smul.u32 3, %s30
      %p647 = scmp.lt.s32.totalorder %s646, 5
      %s648 = scalar_select %p647, %s646, 5
      %s649 = smul.addr %s648, 8
      %s650 = scalar_lea.vmem %s0, %s649
      %s651 = smul.u32 3, %s30
      %p652 = scmp.lt.s32.totalorder %s31, 1
      %s653 = scalar_select %p652, %s31, 1
      %s654 = scalar_lea.vmem %s1, %s653
      %p655 = scmp.lt.s32.totalorder %s31, 1
      %s656 = scalar_select %p655, %s31, 1
      %s657 = scalar_lea.vmem %s2, %s656
      %p658 = scmp.lt.s32.totalorder %s31, 1
      %s659 = scalar_select %p658, %s31, 1
      %s660 = smul.addr %s659, 4
      %s661 = smul.addr %s660, 4
      %s662 = scalar_lea.vmem %s3, %s661
      %p663 = scmp.lt.s32.totalorder %s31, 1
      %s664 = scalar_select %p663, %s31, 1
      %s665 = scalar_lea.vmem %s4, %s664
      %p666 = scmp.lt.s32.totalorder %s31, 1
      %s667 = scalar_select %p666, %s31, 1
      %s668 = smul.addr %s667, 4
      %s669 = smul.addr %s668, 4
      %s670 = scalar_lea.vmem %s5, %s669
      %p671 = scmp.lt.s32.totalorder %s31, 1
      %s672 = scalar_select %p671, %s31, 1
      %s673 = scalar_lea.vmem %s6, %s672
      %p674 = scmp.lt.s32.totalorder %s31, 1
      %s675 = scalar_select %p674, %s31, 1
      %s676 = scalar_lea.vmem %s7, %s675
      %p677 = scmp.lt.s32.totalorder %s31, 1
      %s678 = scalar_select %p677, %s31, 1
      %s679 = scalar_lea.vmem %s8, %s678
      %p680 = scmp.lt.s32.totalorder %s31, 1
      %s681 = scalar_select %p680, %s31, 1
      %s682 = smul.addr %s681, 4
      %s683 = smul.addr %s682, 4
      %s684 = scalar_lea.vmem %s9, %s683
      %p685 = scmp.lt.s32.totalorder %s31, 1
      %s686 = scalar_select %p685, %s31, 1
      %s687 = scalar_lea.vmem %s10, %s686
      %p688 = scmp.lt.s32.totalorder %s31, 1
      %s689 = scalar_select %p688, %s31, 1
      %s690 = smul.addr %s689, 16
      %s691 = smul.addr %s690, 4
      %s692 = scalar_lea.vmem %s11, %s691
      %p693 = scmp.lt.s32.totalorder %s31, 1
      %s694 = scalar_select %p693, %s31, 1
      %s695 = scalar_lea.vmem %s12, %s694
      %s696 = smul.u32 3, %s30
      %p697 = scmp.lt.s32.totalorder %s696, 5
      %s698 = scalar_select %p697, %s696, 5
      %s699 = smul.addr %s698, 8
      %s700 = scalar_lea.vmem %s15, %s699
      %s701 = smul.u32 3, %s30
      %p703 = scmp.eq.s32.totalorder %s31, 0
      // Predicated region
      $region81: #{visual_transformer_forward.3} parent=79 // pred_check
        %p704 = pneg %p703
      $region82: #{visual_transformer_forward.3} parent=79 // pred_check_branch
        %706 = sbr.rel (%p704) target = $region84
      $region83: #{visual_transformer_forward.3} parent=79 // pred_region
        %v707 = vld [vmem:[%s650] sm:$0xff]
        %v708 = vld [vmem:[%s650 + $0x8] sm:$0xff]
        %v709 = vld [vmem:[%s650 + $0x10] sm:$0xff]
        %vm710 = vcmask 261120
        %711 = vst.msk [vmem:[%s700] sm:$0xff] %vm710, %v707
        %712 = vst.msk [vmem:[%s700 + $0x8] sm:$0xff] %vm710, %v708
        %713 = vst.msk [vmem:[%s700 + $0x10] sm:$0xff] %vm710, %v709
      $region84: #{visual_transformer_forward.3} parent=79 // pred_fallthru
        _
      %v714 = vld [vmem:[%s700] sm:$0xff]
      %v715 = vld [vmem:[%s700 + $0x8] sm:$0xff]
      %v716 = vld [vmem:[%s700 + $0x10] sm:$0xff]
      %v717 = vld [vmem:[%s654] sm:$0x1]
      %v718 = vld [vmem:[%s657] sm:$0x1]
      %vm719 = vcmask 261120
      %v720 = vsel %vm719, %v714, 0.0
      %721 = vadd.xlane.f32.xlu0 %v720
      %v722 = vpop.xlane.xlu0 %721
      %v723 = vsel %vm719, %v715, 0.0
      %724 = vadd.xlane.f32.xlu0 %v723
      %v725 = vpop.xlane.xlu0 %724
      %v726 = vsel %vm719, %v716, 0.0
      %727 = vadd.xlane.f32.xlu0 %v726
      %v728 = vpop.xlane.xlu0 %727
      %v729 = vrcp.pop 32.0
      %v730 = vmul.f32 %v722, %v729
      %v731 = vmul.f32 %v725, %v729
      %v732 = vmul.f32 %v728, %v729
      %v733 = vsub.f32 %v714, %v730
      %v734 = vsub.f32 %v715, %v731
      %v735 = vsub.f32 %v716, %v732
      %v736 = vmul.f32 %v733, %v733
      %v737 = vmul.f32 %v734, %v734
      %v738 = vmul.f32 %v735, %v735
      %v739 = vsel %vm719, %v736, 0.0
      %740 = vadd.xlane.f32.xlu0 %v739
      %v741 = vpop.xlane.xlu0 %740
      %v742 = vsel %vm719, %v737, 0.0
      %743 = vadd.xlane.f32.xlu0 %v742
      %v744 = vpop.xlane.xlu0 %743
      %v745 = vsel %vm719, %v738, 0.0
      %746 = vadd.xlane.f32.xlu0 %v745
      %v747 = vpop.xlane.xlu0 %746
      %v748 = vmul.f32 %v741, %v729
      %v749 = vmul.f32 %v744, %v729
      %v750 = vmul.f32 %v747, %v729
      %v751 = vadd.f32 %v748, 1e-05
      %v752 = vadd.f32 %v749, 1e-05
      %v753 = vadd.f32 %v750, 1e-05
      %v754 = vrsqrt.pop %v751
      %v755 = vrsqrt.pop %v752
      %v756 = vrsqrt.pop %v753
      %v757 = vmul.f32 %v733, %v754
      %v758 = vmul.f32 %v734, %v755
      %v759 = vmul.f32 %v735, %v756
      %v761 = vlaneseq
      %v762 = vshrl.u32 %v761, 7
      %v763 = vsub.s32 0, %v762
      %v764 = vrot.slane %v717, %v763
      %v766 = vmul.f32 %v757, %v764
      %v767 = vmul.f32 %v758, %v764
      %v768 = vmul.f32 %v759, %v764
      %v770 = vlaneseq
      %v771 = vshrl.u32 %v770, 7
      %v772 = vsub.s32 0, %v771
      %v773 = vrot.slane %v718, %v772
      %v775 = vadd.f32 %v766, %v773
      %v776 = vadd.f32 %v767, %v773
      %v777 = vadd.f32 %v768, %v773
      %v778 = vpack.c.bf16 %v776, %v775
      %v779 = vpack.c.bf16 %v777, %v777
      %v780 = vld [vmem:[%s662] sm:$0xf]
      %v781 = vld [vmem:[%s662 + $0x4] sm:$0xf]
      %v782 = vld [vmem:[%s662 + $0x8] sm:$0xf]
      %v783 = vld [vmem:[%s662 + $0xc] sm:$0xf]
      %v784 = vld [vmem:[%s665] sm:$0x1]
      %v786 = vlaneseq
      %v787 = vshrl.u32 %v786, 7
      %v788 = vsub.s32 0, %v787
      %v789 = vrot.slane %v784, %v788
      %v795 = vunpack.c.l.b16 %v780
      %v796 = vunpack.c.l.b16 %v781
      %v797 = vunpack.c.l.b16 %v782
      %v798 = vunpack.c.l.b16 %v783
      %v799 = vpack.c.b16 %v796, %v795
      %v800 = vpack.c.b16 %v798, %v797
      %v804 = vsel %vm719, %v778, 0
      %v807 = vsel %vm719, %v779, 0
      %809 = vmatprep.subr.bf16.mxu0 0
      %810 = vmatpush1.bf16.msra.mxu0 0
      %811 = vmatprep.subr.bf16.mxu0 0
      %812 = vmatpush1.bf16.msra.mxu0 0
      %813 = vmatprep.subr.bf16.mxu0 0
      %814 = vmatpush1.bf16.msra.mxu0 0
      %815 = vmatprep.subr.bf16.mxu0 0
      %816 = vmatpush1.bf16.msra.mxu0 0
      %817 = vmatprep.subr.bf16.mxu0 0
      %818 = vmatpush1.bf16.msra.mxu0 0
      %819 = vmatprep.subr.bf16.mxu0 0
      %820 = vmatpush1.bf16.msra.mxu0 0
      %821 = vmatprep.subr.bf16.mxu0 0
      %822 = vmatpush1.bf16.msra.mxu0 %v800
      %823 = vmatprep.subr.bf16.mxu0 0
      %824 = vmatpush1.bf16.msra.mxu0 %v799
      %825 = vmatprep.subr.bf16.mxu0 0
      %826 = vmatpush2.bf16.msra.mxu0 0
      %827 = vmatprep.subr.bf16.mxu0 0
      %828 = vmatpush2.bf16.msra.mxu0 0
      %829 = vmatprep.subr.bf16.mxu0 0
      %830 = vmatpush2.bf16.msra.mxu0 0
      %831 = vmatprep.subr.bf16.mxu0 0
      %832 = vmatpush2.bf16.msra.mxu0 0
      %833 = vmatprep.subr.bf16.mxu0 0
      %834 = vmatpush2.bf16.msra.mxu0 0
      %835 = vmatprep.subr.bf16.mxu0 0
      %836 = vmatpush2.bf16.msra.mxu0 0
      %837 = vmatprep.subr.bf16.mxu0 0
      %838 = vmatpush2.bf16.msra.mxu0 0
      %839 = vmatprep.subr.bf16.mxu0 0
      %840 = vmatpush2.bf16.msra.mxu0 0
      %841 = vmatprep.mubr.bf16.mxu0 0
      %842 = vmatmul.mubr.bf16.gmra.mxu0 %v804
      %v843 = vpop.f32.mrf.mxu0
      %v844 = vadd.f32 %v789, %v843
      %v845 = vpop.f32.mrf.mxu0
      %v846 = vpop.f32.mrf.mxu0
      %v847 = vadd.f32 %v789, %v846
      %v848 = vpop.f32.mrf.mxu0
      %849 = vmatprep.mubr.bf16.mxu0 0
      %850 = vmatmul.mubr.bf16.gmra.mxu0 %v807
      %v851 = vpop.f32.mrf.mxu0
      %v852 = vadd.f32 %v789, %v851
      %v853 = vpop.f32.mrf.mxu0
      %v854 = vpop.f32.mrf.mxu0
      %v855 = vpop.f32.mrf.mxu0
      %856 = vdwg.mxu0
      %vm857 = vcmask 785408
      %858 = vst.msk [vmem:[#allocation2] sm:$0xff] %vm857, %v844
      %859 = vst.msk [vmem:[#allocation2 + $0x8] sm:$0xff] %vm857, %v847
      %860 = vst.msk [vmem:[#allocation2 + $0x10] sm:$0xff] %vm857, %v852
      %v861 = vlaneseq
      %v862 = vand.u32 %v861, 127
      %vm863 = vcmp.lt.s32.totalorder %v862, 17
      %v864 = vsel %vm863, 0.0, -1e+30
      %v865 = vld [vmem:[%s670] sm:$0xf]
      %v866 = vld [vmem:[%s670 + $0x4] sm:$0xf]
      %v867 = vld [vmem:[%s670 + $0x8] sm:$0xf]
      %v868 = vld [vmem:[%s670 + $0xc] sm:$0xf]
      %v869 = vld [vmem:[%s673] sm:$0x1]
      %v870 = vld [vmem:[#allocation2] sm:$0xff]
      %v871 = vld [vmem:[#allocation2 + $0x8] sm:$0xff]
      %v872 = vld [vmem:[#allocation2 + $0x10] sm:$0xff]
      %v873 = vmul.f32 %v870, 0.35355338
      %v874 = vmul.f32 %v871, 0.35355338
      %v875 = vmul.f32 %v872, 0.35355338
      %v876 = vpack.c.bf16 %v874, %v873
      %v877 = vpack.c.bf16 %v875, %v875
      %v878 = vpack.c.bf16 %v871, %v870
      %v879 = vpack.c.bf16 %v872, %v872
      %882 = vrot.lane.b32.xlu0 %v878, 96
      %v883 = vpop.permute.xlu0 %882
      %884 = vrot.lane.b32.xlu0 %v879, 96
      %v885 = vpop.permute.xlu0 %884
      %vm886 = vcmask 64512
      %v888 = vsel %vm886, %v876, 0
      %v891 = vsel %vm886, %v877, 0
      %v894 = vsel %vm886, %v883, 0
      %v897 = vsel %vm886, %v885, 0
      %899 = vmatprep.subr.bf16.mxu0 0
      %900 = vmatpush1.bf16.xpose.msra.mxu0 0
      %901 = vmatprep.subr.bf16.mxu0 0
      %902 = vmatpush1.bf16.xpose.msra.mxu0 0
      %903 = vmatprep.subr.bf16.mxu0 0
      %904 = vmatpush1.bf16.xpose.msra.mxu0 0
      %905 = vmatprep.subr.bf16.mxu0 0
      %906 = vmatpush1.bf16.xpose.msra.mxu0 0
      %907 = vmatprep.subr.bf16.mxu0 0
      %908 = vmatpush1.bf16.xpose.msra.mxu0 0
      %909 = vmatprep.subr.bf16.mxu0 0
      %910 = vmatpush1.bf16.xpose.msra.mxu0 0
      %911 = vmatprep.subr.bf16.mxu0 0
      %912 = vmatpush1.bf16.xpose.msra.mxu0 %v897
      %913 = vmatprep.subr.bf16.mxu0 0
      %914 = vmatpush1.bf16.xpose.msra.mxu0 %v894
      %915 = vmatprep.subr.bf16.mxu0 0
      %916 = vmatpush2.bf16.xpose.msra.mxu0 0
      %917 = vmatprep.subr.bf16.mxu0 0
      %918 = vmatpush2.bf16.xpose.msra.mxu0 0
      %919 = vmatprep.subr.bf16.mxu0 0
      %920 = vmatpush2.bf16.xpose.msra.mxu0 0
      %921 = vmatprep.subr.bf16.mxu0 0
      %922 = vmatpush2.bf16.xpose.msra.mxu0 0
      %923 = vmatprep.subr.bf16.mxu0 0
      %924 = vmatpush2.bf16.xpose.msra.mxu0 0
      %925 = vmatprep.subr.bf16.mxu0 0
      %926 = vmatpush2.bf16.xpose.msra.mxu0 0
      %927 = vmatprep.subr.bf16.mxu0 0
      %928 = vmatpush2.bf16.xpose.msra.mxu0 0
      %929 = vmatprep.subr.bf16.mxu0 0
      %930 = vmatpush2.bf16.xpose.msra.mxu0 0
      %931 = vmatprep.mubr.bf16.mxu0 0
      %932 = vmatmul.mubr.bf16.gmra.mxu0 %v888
      %v933 = vpop.f32.mrf.mxu0
      %v934 = vadd.f32 %v864, %v933
      %v935 = vpop.f32.mrf.mxu0
      %v936 = vpop.f32.mrf.mxu0
      %v937 = vadd.f32 %v864, %v936
      %v938 = vpop.f32.mrf.mxu0
      %939 = vmatprep.mubr.bf16.mxu0 0
      %940 = vmatmul.mubr.bf16.gmra.mxu0 %v891
      %v941 = vpop.f32.mrf.mxu0
      %v942 = vadd.f32 %v864, %v941
      %v943 = vpop.f32.mrf.mxu0
      %v944 = vpop.f32.mrf.mxu0
      %v945 = vpop.f32.mrf.mxu0
      %946 = vdwg.mxu0
      %vm947 = vcmask 195584
      %v948 = vsel %vm947, %v934, -inf
      %949 = vmax.xlane.f32.xlu0 %v948
      %v950 = vpop.xlane.xlu0 %949
      %v951 = vsel %vm947, %v937, -inf
      %952 = vmax.xlane.f32.xlu0 %v951
      %v953 = vpop.xlane.xlu0 %952
      %v954 = vsel %vm947, %v942, -inf
      %955 = vmax.xlane.f32.xlu0 %v954
      %v956 = vpop.xlane.xlu0 %955
      %v957 = vsub.f32 %v934, %v950
      %v958 = vsub.f32 %v937, %v953
      %v959 = vsub.f32 %v942, %v956
      %v960 = vmul.f32 %v957, 1.442695
      %v961 = vpow.pop %v960
      %v962 = vmul.f32 %v958, 1.442695
      %v963 = vpow.pop %v962
      %v964 = vmul.f32 %v959, 1.442695
      %v965 = vpow.pop %v964
      %v966 = vsel %vm947, %v961, 0.0
      %967 = vadd.xlane.f32.xlu0 %v966
      %v968 = vpop.xlane.xlu0 %967
      %v969 = vsel %vm947, %v963, 0.0
      %970 = vadd.xlane.f32.xlu0 %v969
      %v971 = vpop.xlane.xlu0 %970
      %v972 = vsel %vm947, %v965, 0.0
      %973 = vadd.xlane.f32.xlu0 %v972
      %v974 = vpop.xlane.xlu0 %973
      %v975 = vrcp.pop %v968
      %v976 = vrcp.pop %v971
      %v977 = vrcp.pop %v974
      %v978 = vmul.f32 %v961, %v975
      %v979 = vmul.f32 %v963, %v976
      %v980 = vmul.f32 %v965, %v977
      %v981 = vpack.c.bf16 %v979, %v978
      %v982 = vpack.c.bf16 %v980, %v980
      %983 = vrot.lane.b32.xlu0 %v878, 64
      %v984 = vpop.permute.xlu0 %983
      %985 = vrot.lane.b32.xlu0 %v879, 64
      %v986 = vpop.permute.xlu0 %985
      %v989 = vsel %vm947, %v981, 0
      %v992 = vsel %vm947, %v982, 0
      %vm994 = vcmask 1043456
      %v996 = vsel %vm994, %v986, 0
      %998 = vmatprep.subr.bf16.mxu0 0
      %999 = vmatpush1.bf16.msra.mxu0 0
      %1000 = vmatprep.subr.bf16.mxu0 0
      %1001 = vmatpush1.bf16.msra.mxu0 0
      %1002 = vmatprep.subr.bf16.mxu0 0
      %1003 = vmatpush1.bf16.msra.mxu0 0
      %1004 = vmatprep.subr.bf16.mxu0 0
      %1005 = vmatpush1.bf16.msra.mxu0 0
      %1006 = vmatprep.subr.bf16.mxu0 0
      %1007 = vmatpush1.bf16.msra.mxu0 0
      %1008 = vmatprep.subr.bf16.mxu0 0
      %1009 = vmatpush1.bf16.msra.mxu0 0
      %1010 = vmatprep.subr.bf16.mxu0 0
      %1011 = vmatpush1.bf16.msra.mxu0 %v996
      %1012 = vmatprep.subr.bf16.mxu0 0
      %1013 = vmatpush1.bf16.msra.mxu0 %v984
      %1014 = vmatprep.subr.bf16.mxu0 0
      %1015 = vmatpush2.bf16.msra.mxu0 0
      %1016 = vmatprep.subr.bf16.mxu0 0
      %1017 = vmatpush2.bf16.msra.mxu0 0
      %1018 = vmatprep.subr.bf16.mxu0 0
      %1019 = vmatpush2.bf16.msra.mxu0 0
      %1020 = vmatprep.subr.bf16.mxu0 0
      %1021 = vmatpush2.bf16.msra.mxu0 0
      %1022 = vmatprep.subr.bf16.mxu0 0
      %1023 = vmatpush2.bf16.msra.mxu0 0
      %1024 = vmatprep.subr.bf16.mxu0 0
      %1025 = vmatpush2.bf16.msra.mxu0 0
      %1026 = vmatprep.subr.bf16.mxu0 0
      %1027 = vmatpush2.bf16.msra.mxu0 0
      %1028 = vmatprep.subr.bf16.mxu0 0
      %1029 = vmatpush2.bf16.msra.mxu0 0
      %1030 = vmatprep.mubr.bf16.mxu0 0
      %1031 = vmatmul.mubr.bf16.gmra.mxu0 %v989
      %v1032 = vpop.f32.mrf.mxu0
      %v1033 = vadd.f32 0.0, %v1032
      %v1034 = vpop.f32.mrf.mxu0
      %v1035 = vpop.f32.mrf.mxu0
      %v1036 = vadd.f32 0.0, %v1035
      %v1037 = vpop.f32.mrf.mxu0
      %1038 = vmatprep.mubr.bf16.mxu0 0
      %1039 = vmatmul.mubr.bf16.gmra.mxu0 %v992
      %v1040 = vpop.f32.mrf.mxu0
      %v1041 = vadd.f32 0.0, %v1040
      %v1042 = vpop.f32.mrf.mxu0
      %v1043 = vpop.f32.mrf.mxu0
      %v1044 = vpop.f32.mrf.mxu0
      %1045 = vdwg.mxu0
      %1048 = vrot.lane.b32.xlu0 %v876, 120
      %v1049 = vpop.permute.xlu0 %1048
      %1050 = vrot.lane.b32.xlu0 %v877, 120
      %v1051 = vpop.permute.xlu0 %1050
      %1052 = vrot.lane.b32.xlu0 %v878, 88
      %v1053 = vpop.permute.xlu0 %1052
      %1054 = vrot.lane.b32.xlu0 %v879, 88
      %v1055 = vpop.permute.xlu0 %1054
      %v1057 = vsel %vm886, %v1049, 0
      %v1060 = vsel %vm886, %v1051, 0
      %v1063 = vsel %vm886, %v1053, 0
      %v1066 = vsel %vm886, %v1055, 0
      %1068 = vmatprep.subr.bf16.mxu0 0
      %1069 = vmatpush1.bf16.xpose.msra.mxu0 0
      %1070 = vmatprep.subr.bf16.mxu0 0
      %1071 = vmatpush1.bf16.xpose.msra.mxu0 0
      %1072 = vmatprep.subr.bf16.mxu0 0
      %1073 = vmatpush1.bf16.xpose.msra.mxu0 0
      %1074 = vmatprep.subr.bf16.mxu0 0
      %1075 = vmatpush1.bf16.xpose.msra.mxu0 0
      %1076 = vmatprep.subr.bf16.mxu0 0
      %1077 = vmatpush1.bf16.xpose.msra.mxu0 0
      %1078 = vmatprep.subr.bf16.mxu0 0
      %1079 = vmatpush1.bf16.xpose.msra.mxu0 0
      %1080 = vmatprep.subr.bf16.mxu0 0
      %1081 = vmatpush1.bf16.xpose.msra.mxu0 %v1066
      %1082 = vmatprep.subr.bf16.mxu0 0
      %1083 = vmatpush1.bf16.xpose.msra.mxu0 %v1063
      %1084 = vmatprep.subr.bf16.mxu0 0
      %1085 = vmatpush2.bf16.xpose.msra.mxu0 0
      %1086 = vmatprep.subr.bf16.mxu0 0
      %1087 = vmatpush2.bf16.xpose.msra.mxu0 0
      %1088 = vmatprep.subr.bf16.mxu0 0
      %1089 = vmatpush2.bf16.xpose.msra.mxu0 0
      %1090 = vmatprep.subr.bf16.mxu0 0
      %1091 = vmatpush2.bf16.xpose.msra.mxu0 0
      %1092 = vmatprep.subr.bf16.mxu0 0
      %1093 = vmatpush2.bf16.xpose.msra.mxu0 0
      %1094 = vmatprep.subr.bf16.mxu0 0
      %1095 = vmatpush2.bf16.xpose.msra.mxu0 0
      %1096 = vmatprep.subr.bf16.mxu0 0
      %1097 = vmatpush2.bf16.xpose.msra.mxu0 0
      %1098 = vmatprep.subr.bf16.mxu0 0
      %1099 = vmatpush2.bf16.xpose.msra.mxu0 0
      %1100 = vmatprep.mubr.bf16.mxu0 0
      %1101 = vmatmul.mubr.bf16.gmra.mxu0 %v1057
      %v1102 = vpop.f32.mrf.mxu0
      %v1103 = vadd.f32 %v864, %v1102
      %v1104 = vpop.f32.mrf.mxu0
      %v1105 = vpop.f32.mrf.mxu0
      %v1106 = vadd.f32 %v864, %v1105
      %v1107 = vpop.f32.mrf.mxu0
      %1108 = vmatprep.mubr.bf16.mxu0 0
      %1109 = vmatmul.mubr.bf16.gmra.mxu0 %v1060
      %v1110 = vpop.f32.mrf.mxu0
      %v1111 = vadd.f32 %v864, %v1110
      %v1112 = vpop.f32.mrf.mxu0
      %v1113 = vpop.f32.mrf.mxu0
      %v1114 = vpop.f32.mrf.mxu0
      %1115 = vdwg.mxu0
      %v1116 = vsel %vm947, %v1103, -inf
      %1117 = vmax.xlane.f32.xlu0 %v1116
      %v1118 = vpop.xlane.xlu0 %1117
      %v1119 = vsel %vm947, %v1106, -inf
      %1120 = vmax.xlane.f32.xlu0 %v1119
      %v1121 = vpop.xlane.xlu0 %1120
      %v1122 = vsel %vm947, %v1111, -inf
      %1123 = vmax.xlane.f32.xlu0 %v1122
      %v1124 = vpop.xlane.xlu0 %1123
      %v1125 = vsub.f32 %v1103, %v1118
      %v1126 = vsub.f32 %v1106, %v1121
      %v1127 = vsub.f32 %v1111, %v1124
      %v1128 = vmul.f32 %v1125, 1.442695
      %v1129 = vpow.pop %v1128
      %v1130 = vmul.f32 %v1126, 1.442695
      %v1131 = vpow.pop %v1130
      %v1132 = vmul.f32 %v1127, 1.442695
      %v1133 = vpow.pop %v1132
      %v1134 = vsel %vm947, %v1129, 0.0
      %1135 = vadd.xlane.f32.xlu0 %v1134
      %v1136 = vpop.xlane.xlu0 %1135
      %v1137 = vsel %vm947, %v1131, 0.0
      %1138 = vadd.xlane.f32.xlu0 %v1137
      %v1139 = vpop.xlane.xlu0 %1138
      %v1140 = vsel %vm947, %v1133, 0.0
      %1141 = vadd.xlane.f32.xlu0 %v1140
      %v1142 = vpop.xlane.xlu0 %1141
      %v1143 = vrcp.pop %v1136
      %v1144 = vrcp.pop %v1139
      %v1145 = vrcp.pop %v1142
      %v1146 = vmul.f32 %v1129, %v1143
      %v1147 = vmul.f32 %v1131, %v1144
      %v1148 = vmul.f32 %v1133, %v1145
      %v1149 = vpack.c.bf16 %v1147, %v1146
      %v1150 = vpack.c.bf16 %v1148, %v1148
      %1151 = vrot.lane.b32.xlu0 %v878, 56
      %v1152 = vpop.permute.xlu0 %1151
      %1153 = vrot.lane.b32.xlu0 %v879, 56
      %v1154 = vpop.permute.xlu0 %1153
      %v1157 = vsel %vm947, %v1149, 0
      %v1160 = vsel %vm947, %v1150, 0
      %v1163 = vsel %vm994, %v1154, 0
      %1165 = vmatprep.subr.bf16.mxu0 0
      %1166 = vmatpush1.bf16.msra.mxu0 0
      %1167 = vmatprep.subr.bf16.mxu0 0
      %1168 = vmatpush1.bf16.msra.mxu0 0
      %1169 = vmatprep.subr.bf16.mxu0 0
      %1170 = vmatpush1.bf16.msra.mxu0 0
      %1171 = vmatprep.subr.bf16.mxu0 0
      %1172 = vmatpush1.bf16.msra.mxu0 0
      %1173 = vmatprep.subr.bf16.mxu0 0
      %1174 = vmatpush1.bf16.msra.mxu0 0
      %1175 = vmatprep.subr.bf16.mxu0 0
      %1176 = vmatpush1.bf16.msra.mxu0 0
      %1177 = vmatprep.subr.bf16.mxu0 0
      %1178 = vmatpush1.bf16.msra.mxu0 %v1163
      %1179 = vmatprep.subr.bf16.mxu0 0
      %1180 = vmatpush1.bf16.msra.mxu0 %v1152
      %1181 = vmatprep.subr.bf16.mxu0 0
      %1182 = vmatpush2.bf16.msra.mxu0 0
      %1183 = vmatprep.subr.bf16.mxu0 0
      %1184 = vmatpush2.bf16.msra.mxu0 0
      %1185 = vmatprep.subr.bf16.mxu0 0
      %1186 = vmatpush2.bf16.msra.mxu0 0
      %1187 = vmatprep.subr.bf16.mxu0 0
      %1188 = vmatpush2.bf16.msra.mxu0 0
      %1189 = vmatprep.subr.bf16.mxu0 0
      %1190 = vmatpush2.bf16.msra.mxu0 0
      %1191 = vmatprep.subr.bf16.mxu0 0
      %1192 = vmatpush2.bf16.msra.mxu0 0
      %1193 = vmatprep.subr.bf16.mxu0 0
      %1194 = vmatpush2.bf16.msra.mxu0 0
      %1195 = vmatprep.subr.bf16.mxu0 0
      %1196 = vmatpush2.bf16.msra.mxu0 0
      %1197 = vmatprep.mubr.bf16.mxu0 0
      %1198 = vmatmul.mubr.bf16.gmra.mxu0 %v1157
      %v1199 = vpop.f32.mrf.mxu0
      %v1200 = vadd.f32 0.0, %v1199
      %v1201 = vpop.f32.mrf.mxu0
      %v1202 = vpop.f32.mrf.mxu0
      %v1203 = vadd.f32 0.0, %v1202
      %v1204 = vpop.f32.mrf.mxu0
      %1205 = vmatprep.mubr.bf16.mxu0 0
      %1206 = vmatmul.mubr.bf16.gmra.mxu0 %v1160
      %v1207 = vpop.f32.mrf.mxu0
      %v1208 = vadd.f32 0.0, %v1207
      %v1209 = vpop.f32.mrf.mxu0
      %v1210 = vpop.f32.mrf.mxu0
      %v1211 = vpop.f32.mrf.mxu0
      %1212 = vdwg.mxu0
      %1213 = vrot.lane.b32.xlu0 %v876, 112
      %v1214 = vpop.permute.xlu0 %1213
      %1215 = vrot.lane.b32.xlu0 %v877, 112
      %v1216 = vpop.permute.xlu0 %1215
      %1217 = vrot.lane.b32.xlu0 %v878, 80
      %v1218 = vpop.permute.xlu0 %1217
      %1219 = vrot.lane.b32.xlu0 %v879, 80
      %v1220 = vpop.permute.xlu0 %1219
      %v1222 = vsel %vm886, %v1214, 0
      %v1225 = vsel %vm886, %v1216, 0
      %v1228 = vsel %vm886, %v1218, 0
      %v1231 = vsel %vm886, %v1220, 0
      %1233 = vmatprep.subr.bf16.mxu0 0
      %1234 = vmatpush1.bf16.xpose.msra.mxu0 0
      %1235 = vmatprep.subr.bf16.mxu0 0
      %1236 = vmatpush1.bf16.xpose.msra.mxu0 0
      %1237 = vmatprep.subr.bf16.mxu0 0
      %1238 = vmatpush1.bf16.xpose.msra.mxu0 0
      %1239 = vmatprep.subr.bf16.mxu0 0
      %1240 = vmatpush1.bf16.xpose.msra.mxu0 0
      %1241 = vmatprep.subr.bf16.mxu0 0
      %1242 = vmatpush1.bf16.xpose.msra.mxu0 0
      %1243 = vmatprep.subr.bf16.mxu0 0
      %1244 = vmatpush1.bf16.xpose.msra.mxu0 0
      %1245 = vmatprep.subr.bf16.mxu0 0
      %1246 = vmatpush1.bf16.xpose.msra.mxu0 %v1231
      %1247 = vmatprep.subr.bf16.mxu0 0
      %1248 = vmatpush1.bf16.xpose.msra.mxu0 %v1228
      %1249 = vmatprep.subr.bf16.mxu0 0
      %1250 = vmatpush2.bf16.xpose.msra.mxu0 0
      %1251 = vmatprep.subr.bf16.mxu0 0
      %1252 = vmatpush2.bf16.xpose.msra.mxu0 0
      %1253 = vmatprep.subr.bf16.mxu0 0
      %1254 = vmatpush2.bf16.xpose.msra.mxu0 0
      %1255 = vmatprep.subr.bf16.mxu0 0
      %1256 = vmatpush2.bf16.xpose.msra.mxu0 0
      %1257 = vmatprep.subr.bf16.mxu0 0
      %1258 = vmatpush2.bf16.xpose.msra.mxu0 0
      %1259 = vmatprep.subr.bf16.mxu0 0
      %1260 = vmatpush2.bf16.xpose.msra.mxu0 0
      %1261 = vmatprep.subr.bf16.mxu0 0
      %1262 = vmatpush2.bf16.xpose.msra.mxu0 0
      %1263 = vmatprep.subr.bf16.mxu0 0
      %1264 = vmatpush2.bf16.xpose.msra.mxu0 0
      %1265 = vmatprep.mubr.bf16.mxu0 0
      %1266 = vmatmul.mubr.bf16.gmra.mxu0 %v1222
      %v1267 = vpop.f32.mrf.mxu0
      %v1268 = vadd.f32 %v864, %v1267
      %v1269 = vpop.f32.mrf.mxu0
      %v1270 = vpop.f32.mrf.mxu0
      %v1271 = vadd.f32 %v864, %v1270
      %v1272 = vpop.f32.mrf.mxu0
      %1273 = vmatprep.mubr.bf16.mxu0 0
      %1274 = vmatmul.mubr.bf16.gmra.mxu0 %v1225
      %v1275 = vpop.f32.mrf.mxu0
      %v1276 = vadd.f32 %v864, %v1275
      %v1277 = vpop.f32.mrf.mxu0
      %v1278 = vpop.f32.mrf.mxu0
      %v1279 = vpop.f32.mrf.mxu0
      %1280 = vdwg.mxu0
      %v1281 = vsel %vm947, %v1268, -inf
      %1282 = vmax.xlane.f32.xlu0 %v1281
      %v1283 = vpop.xlane.xlu0 %1282
      %v1284 = vsel %vm947, %v1271, -inf
      %1285 = vmax.xlane.f32.xlu0 %v1284
      %v1286 = vpop.xlane.xlu0 %1285
      %v1287 = vsel %vm947, %v1276, -inf
      %1288 = vmax.xlane.f32.xlu0 %v1287
      %v1289 = vpop.xlane.xlu0 %1288
      %v1290 = vsub.f32 %v1268, %v1283
      %v1291 = vsub.f32 %v1271, %v1286
      %v1292 = vsub.f32 %v1276, %v1289
      %v1293 = vmul.f32 %v1290, 1.442695
      %v1294 = vpow.pop %v1293
      %v1295 = vmul.f32 %v1291, 1.442695
      %v1296 = vpow.pop %v1295
      %v1297 = vmul.f32 %v1292, 1.442695
      %v1298 = vpow.pop %v1297
      %v1299 = vsel %vm947, %v1294, 0.0
      %1300 = vadd.xlane.f32.xlu0 %v1299
      %v1301 = vpop.xlane.xlu0 %1300
      %v1302 = vsel %vm947, %v1296, 0.0
      %1303 = vadd.xlane.f32.xlu0 %v1302
      %v1304 = vpop.xlane.xlu0 %1303
      %v1305 = vsel %vm947, %v1298, 0.0
      %1306 = vadd.xlane.f32.xlu0 %v1305
      %v1307 = vpop.xlane.xlu0 %1306
      %v1308 = vrcp.pop %v1301
      %v1309 = vrcp.pop %v1304
      %v1310 = vrcp.pop %v1307
      %v1311 = vmul.f32 %v1294, %v1308
      %v1312 = vmul.f32 %v1296, %v1309
      %v1313 = vmul.f32 %v1298, %v1310
      %v1314 = vpack.c.bf16 %v1312, %v1311
      %v1315 = vpack.c.bf16 %v1313, %v1313
      %1316 = vrot.lane.b32.xlu0 %v878, 48
      %v1317 = vpop.permute.xlu0 %1316
      %1318 = vrot.lane.b32.xlu0 %v879, 48
      %v1319 = vpop.permute.xlu0 %1318
      %v1322 = vsel %vm947, %v1314, 0
      %v1325 = vsel %vm947, %v1315, 0
      %v1328 = vsel %vm994, %v1319, 0
      %1330 = vmatprep.subr.bf16.mxu0 0
      %1331 = vmatpush1.bf16.msra.mxu0 0
      %1332 = vmatprep.subr.bf16.mxu0 0
      %1333 = vmatpush1.bf16.msra.mxu0 0
      %1334 = vmatprep.subr.bf16.mxu0 0
      %1335 = vmatpush1.bf16.msra.mxu0 0
      %1336 = vmatprep.subr.bf16.mxu0 0
      %1337 = vmatpush1.bf16.msra.mxu0 0
      %1338 = vmatprep.subr.bf16.mxu0 0
      %1339 = vmatpush1.bf16.msra.mxu0 0
      %1340 = vmatprep.subr.bf16.mxu0 0
      %1341 = vmatpush1.bf16.msra.mxu0 0
      %1342 = vmatprep.subr.bf16.mxu0 0
      %1343 = vmatpush1.bf16.msra.mxu0 %v1328
      %1344 = vmatprep.subr.bf16.mxu0 0
      %1345 = vmatpush1.bf16.msra.mxu0 %v1317
      %1346 = vmatprep.subr.bf16.mxu0 0
      %1347 = vmatpush2.bf16.msra.mxu0 0
      %1348 = vmatprep.subr.bf16.mxu0 0
      %1349 = vmatpush2.bf16.msra.mxu0 0
      %1350 = vmatprep.subr.bf16.mxu0 0
      %1351 = vmatpush2.bf16.msra.mxu0 0
      %1352 = vmatprep.subr.bf16.mxu0 0
      %1353 = vmatpush2.bf16.msra.mxu0 0
      %1354 = vmatprep.subr.bf16.mxu0 0
      %1355 = vmatpush2.bf16.msra.mxu0 0
      %1356 = vmatprep.subr.bf16.mxu0 0
      %1357 = vmatpush2.bf16.msra.mxu0 0
      %1358 = vmatprep.subr.bf16.mxu0 0
      %1359 = vmatpush2.bf16.msra.mxu0 0
      %1360 = vmatprep.subr.bf16.mxu0 0
      %1361 = vmatpush2.bf16.msra.mxu0 0
      %1362 = vmatprep.mubr.bf16.mxu0 0
      %1363 = vmatmul.mubr.bf16.gmra.mxu0 %v1322
      %v1364 = vpop.f32.mrf.mxu0
      %v1365 = vadd.f32 0.0, %v1364
      %v1366 = vpop.f32.mrf.mxu0
      %v1367 = vpop.f32.mrf.mxu0
      %v1368 = vadd.f32 0.0, %v1367
      %v1369 = vpop.f32.mrf.mxu0
      %1370 = vmatprep.mubr.bf16.mxu0 0
      %1371 = vmatmul.mubr.bf16.gmra.mxu0 %v1325
      %v1372 = vpop.f32.mrf.mxu0
      %v1373 = vadd.f32 0.0, %v1372
      %v1374 = vpop.f32.mrf.mxu0
      %v1375 = vpop.f32.mrf.mxu0
      %v1376 = vpop.f32.mrf.mxu0
      %1377 = vdwg.mxu0
      %1378 = vrot.lane.b32.xlu0 %v876, 104
      %v1379 = vpop.permute.xlu0 %1378
      %1380 = vrot.lane.b32.xlu0 %v877, 104
      %v1381 = vpop.permute.xlu0 %1380
      %1382 = vrot.lane.b32.xlu0 %v878, 72
      %v1383 = vpop.permute.xlu0 %1382
      %1384 = vrot.lane.b32.xlu0 %v879, 72
      %v1385 = vpop.permute.xlu0 %1384
      %v1387 = vsel %vm886, %v1379, 0
      %v1390 = vsel %vm886, %v1381, 0
      %v1393 = vsel %vm886, %v1383, 0
      %v1396 = vsel %vm886, %v1385, 0
      %1398 = vmatprep.subr.bf16.mxu0 0
      %1399 = vmatpush1.bf16.xpose.msra.mxu0 0
      %1400 = vmatprep.subr.bf16.mxu0 0
      %1401 = vmatpush1.bf16.xpose.msra.mxu0 0
      %1402 = vmatprep.subr.bf16.mxu0 0
      %1403 = vmatpush1.bf16.xpose.msra.mxu0 0
      %1404 = vmatprep.subr.bf16.mxu0 0
      %1405 = vmatpush1.bf16.xpose.msra.mxu0 0
      %1406 = vmatprep.subr.bf16.mxu0 0
      %1407 = vmatpush1.bf16.xpose.msra.mxu0 0
      %1408 = vmatprep.subr.bf16.mxu0 0
      %1409 = vmatpush1.bf16.xpose.msra.mxu0 0
      %1410 = vmatprep.subr.bf16.mxu0 0
      %1411 = vmatpush1.bf16.xpose.msra.mxu0 %v1396
      %1412 = vmatprep.subr.bf16.mxu0 0
      %1413 = vmatpush1.bf16.xpose.msra.mxu0 %v1393
      %1414 = vmatprep.subr.bf16.mxu0 0
      %1415 = vmatpush2.bf16.xpose.msra.mxu0 0
      %1416 = vmatprep.subr.bf16.mxu0 0
      %1417 = vmatpush2.bf16.xpose.msra.mxu0 0
      %1418 = vmatprep.subr.bf16.mxu0 0
      %1419 = vmatpush2.bf16.xpose.msra.mxu0 0
      %1420 = vmatprep.subr.bf16.mxu0 0
      %1421 = vmatpush2.bf16.xpose.msra.mxu0 0
      %1422 = vmatprep.subr.bf16.mxu0 0
      %1423 = vmatpush2.bf16.xpose.msra.mxu0 0
      %1424 = vmatprep.subr.bf16.mxu0 0
      %1425 = vmatpush2.bf16.xpose.msra.mxu0 0
      %1426 = vmatprep.subr.bf16.mxu0 0
      %1427 = vmatpush2.bf16.xpose.msra.mxu0 0
      %1428 = vmatprep.subr.bf16.mxu0 0
      %1429 = vmatpush2.bf16.xpose.msra.mxu0 0
      %1430 = vmatprep.mubr.bf16.mxu0 0
      %1431 = vmatmul.mubr.bf16.gmra.mxu0 %v1387
      %v1432 = vpop.f32.mrf.mxu0
      %v1433 = vadd.f32 %v864, %v1432
      %v1434 = vpop.f32.mrf.mxu0
      %v1435 = vpop.f32.mrf.mxu0
      %v1436 = vadd.f32 %v864, %v1435
      %v1437 = vpop.f32.mrf.mxu0
      %1438 = vmatprep.mubr.bf16.mxu0 0
      %1439 = vmatmul.mubr.bf16.gmra.mxu0 %v1390
      %v1440 = vpop.f32.mrf.mxu0
      %v1441 = vadd.f32 %v864, %v1440
      %v1442 = vpop.f32.mrf.mxu0
      %v1443 = vpop.f32.mrf.mxu0
      %v1444 = vpop.f32.mrf.mxu0
      %1445 = vdwg.mxu0
      %v1446 = vsel %vm947, %v1433, -inf
      %1447 = vmax.xlane.f32.xlu0 %v1446
      %v1448 = vpop.xlane.xlu0 %1447
      %v1449 = vsel %vm947, %v1436, -inf
      %1450 = vmax.xlane.f32.xlu0 %v1449
      %v1451 = vpop.xlane.xlu0 %1450
      %v1452 = vsel %vm947, %v1441, -inf
      %1453 = vmax.xlane.f32.xlu0 %v1452
      %v1454 = vpop.xlane.xlu0 %1453
      %v1455 = vsub.f32 %v1433, %v1448
      %v1456 = vsub.f32 %v1436, %v1451
      %v1457 = vsub.f32 %v1441, %v1454
      %v1458 = vmul.f32 %v1455, 1.442695
      %v1459 = vpow.pop %v1458
      %v1460 = vmul.f32 %v1456, 1.442695
      %v1461 = vpow.pop %v1460
      %v1462 = vmul.f32 %v1457, 1.442695
      %v1463 = vpow.pop %v1462
      %v1464 = vsel %vm947, %v1459, 0.0
      %1465 = vadd.xlane.f32.xlu0 %v1464
      %v1466 = vpop.xlane.xlu0 %1465
      %v1467 = vsel %vm947, %v1461, 0.0
      %1468 = vadd.xlane.f32.xlu0 %v1467
      %v1469 = vpop.xlane.xlu0 %1468
      %v1470 = vsel %vm947, %v1463, 0.0
      %1471 = vadd.xlane.f32.xlu0 %v1470
      %v1472 = vpop.xlane.xlu0 %1471
      %v1473 = vrcp.pop %v1466
      %v1474 = vrcp.pop %v1469
      %v1475 = vrcp.pop %v1472
      %v1476 = vmul.f32 %v1459, %v1473
      %v1477 = vmul.f32 %v1461, %v1474
      %v1478 = vmul.f32 %v1463, %v1475
      %v1479 = vpack.c.bf16 %v1477, %v1476
      %v1480 = vpack.c.bf16 %v1478, %v1478
      %1481 = vrot.lane.b32.xlu0 %v878, 40
      %v1482 = vpop.permute.xlu0 %1481
      %1483 = vrot.lane.b32.xlu0 %v879, 40
      %v1484 = vpop.permute.xlu0 %1483
      %v1487 = vsel %vm947, %v1479, 0
      %v1490 = vsel %vm947, %v1480, 0
      %v1493 = vsel %vm994, %v1484, 0
      %1495 = vmatprep.subr.bf16.mxu0 0
      %1496 = vmatpush1.bf16.msra.mxu0 0
      %1497 = vmatprep.subr.bf16.mxu0 0
      %1498 = vmatpush1.bf16.msra.mxu0 0
      %1499 = vmatprep.subr.bf16.mxu0 0
      %1500 = vmatpush1.bf16.msra.mxu0 0
      %1501 = vmatprep.subr.bf16.mxu0 0
      %1502 = vmatpush1.bf16.msra.mxu0 0
      %1503 = vmatprep.subr.bf16.mxu0 0
      %1504 = vmatpush1.bf16.msra.mxu0 0
      %1505 = vmatprep.subr.bf16.mxu0 0
      %1506 = vmatpush1.bf16.msra.mxu0 0
      %1507 = vmatprep.subr.bf16.mxu0 0
      %1508 = vmatpush1.bf16.msra.mxu0 %v1493
      %1509 = vmatprep.subr.bf16.mxu0 0
      %1510 = vmatpush1.bf16.msra.mxu0 %v1482
      %1511 = vmatprep.subr.bf16.mxu0 0
      %1512 = vmatpush2.bf16.msra.mxu0 0
      %1513 = vmatprep.subr.bf16.mxu0 0
      %1514 = vmatpush2.bf16.msra.mxu0 0
      %1515 = vmatprep.subr.bf16.mxu0 0
      %1516 = vmatpush2.bf16.msra.mxu0 0
      %1517 = vmatprep.subr.bf16.mxu0 0
      %1518 = vmatpush2.bf16.msra.mxu0 0
      %1519 = vmatprep.subr.bf16.mxu0 0
      %1520 = vmatpush2.bf16.msra.mxu0 0
      %1521 = vmatprep.subr.bf16.mxu0 0
      %1522 = vmatpush2.bf16.msra.mxu0 0
      %1523 = vmatprep.subr.bf16.mxu0 0
      %1524 = vmatpush2.bf16.msra.mxu0 0
      %1525 = vmatprep.subr.bf16.mxu0 0
      %1526 = vmatpush2.bf16.msra.mxu0 0
      %1527 = vmatprep.mubr.bf16.mxu0 0
      %1528 = vmatmul.mubr.bf16.gmra.mxu0 %v1487
      %v1529 = vpop.f32.mrf.mxu0
      %v1530 = vadd.f32 0.0, %v1529
      %v1531 = vpop.f32.mrf.mxu0
      %v1532 = vpop.f32.mrf.mxu0
      %v1533 = vadd.f32 0.0, %v1532
      %v1534 = vpop.f32.mrf.mxu0
      %1535 = vmatprep.mubr.bf16.mxu0 0
      %1536 = vmatmul.mubr.bf16.gmra.mxu0 %v1490
      %v1537 = vpop.f32.mrf.mxu0
      %v1538 = vadd.f32 0.0, %v1537
      %v1539 = vpop.f32.mrf.mxu0
      %v1540 = vpop.f32.mrf.mxu0
      %v1541 = vpop.f32.mrf.mxu0
      %1542 = vdwg.mxu0
      %1546 = vrot.lane.b32.xlu0 %v1200, 8
      %v1547 = vpop.permute.xlu0 %1546
      %1548 = vrot.lane.b32.xlu0 %v1203, 8
      %v1549 = vpop.permute.xlu0 %1548
      %1550 = vrot.lane.b32.xlu0 %v1208, 8
      %v1551 = vpop.permute.xlu0 %1550
      %1558 = vrot.lane.b32.xlu0 %v1365, 16
      %v1559 = vpop.permute.xlu0 %1558
      %1560 = vrot.lane.b32.xlu0 %v1368, 16
      %v1561 = vpop.permute.xlu0 %1560
      %1562 = vrot.lane.b32.xlu0 %v1373, 16
      %v1563 = vpop.permute.xlu0 %1562
      %1570 = vrot.lane.b32.xlu0 %v1530, 24
      %v1571 = vpop.permute.xlu0 %1570
      %1572 = vrot.lane.b32.xlu0 %v1533, 24
      %v1573 = vpop.permute.xlu0 %1572
      %1574 = vrot.lane.b32.xlu0 %v1538, 24
      %v1575 = vpop.permute.xlu0 %1574
      %v1579 = vsel %vm886, %v1033, %v1547
      %v1580 = vsel %vm886, %v1036, %v1549
      %v1581 = vsel %vm886, %v1041, %v1551
      %vm1582 = vcmask 130048
      %v1583 = vsel %vm1582, %v1579, %v1559
      %v1584 = vsel %vm1582, %v1580, %v1561
      %v1585 = vsel %vm1582, %v1581, %v1563
      %v1586 = vsel %vm947, %v1583, %v1571
      %v1587 = vsel %vm947, %v1584, %v1573
      %v1588 = vsel %vm947, %v1585, %v1575
      %v1589 = vpack.c.bf16 %v1587, %v1586
      %v1590 = vpack.c.bf16 %v1588, %v1588
      %v1592 = vlaneseq
      %v1593 = vshrl.u32 %v1592, 7
      %v1594 = vsub.s32 0, %v1593
      %v1595 = vrot.slane %v869, %v1594
      %v1601 = vunpack.c.l.b16 %v865
      %v1602 = vunpack.c.l.b16 %v866
      %v1603 = vunpack.c.l.b16 %v867
      %v1604 = vunpack.c.l.b16 %v868
      %v1605 = vpack.c.b16 %v1602, %v1601
      %v1606 = vpack.c.b16 %v1604, %v1603
      %v1610 = vsel %vm719, %v1589, 0
      %v1613 = vsel %vm719, %v1590, 0
      %1615 = vmatprep.subr.bf16.mxu0 0
      %1616 = vmatpush1.bf16.msra.mxu0 0
      %1617 = vmatprep.subr.bf16.mxu0 0
      %1618 = vmatpush1.bf16.msra.mxu0 0
      %1619 = vmatprep.subr.bf16.mxu0 0
      %1620 = vmatpush1.bf16.msra.mxu0 0
      %1621 = vmatprep.subr.bf16.mxu0 0
      %1622 = vmatpush1.bf16.msra.mxu0 0
      %1623 = vmatprep.subr.bf16.mxu0 0
      %1624 = vmatpush1.bf16.msra.mxu0 0
      %1625 = vmatprep.subr.bf16.mxu0 0
      %1626 = vmatpush1.bf16.msra.mxu0 0
      %1627 = vmatprep.subr.bf16.mxu0 0
      %1628 = vmatpush1.bf16.msra.mxu0 %v1606
      %1629 = vmatprep.subr.bf16.mxu0 0
      %1630 = vmatpush1.bf16.msra.mxu0 %v1605
      %1631 = vmatprep.subr.bf16.mxu0 0
      %1632 = vmatpush2.bf16.msra.mxu0 0
      %1633 = vmatprep.subr.bf16.mxu0 0
      %1634 = vmatpush2.bf16.msra.mxu0 0
      %1635 = vmatprep.subr.bf16.mxu0 0
      %1636 = vmatpush2.bf16.msra.mxu0 0
      %1637 = vmatprep.subr.bf16.mxu0 0
      %1638 = vmatpush2.bf16.msra.mxu0 0
      %1639 = vmatprep.subr.bf16.mxu0 0
      %1640 = vmatpush2.bf16.msra.mxu0 0
      %1641 = vmatprep.subr.bf16.mxu0 0
      %1642 = vmatpush2.bf16.msra.mxu0 0
      %1643 = vmatprep.subr.bf16.mxu0 0
      %1644 = vmatpush2.bf16.msra.mxu0 0
      %1645 = vmatprep.subr.bf16.mxu0 0
      %1646 = vmatpush2.bf16.msra.mxu0 0
      %1647 = vmatprep.mubr.bf16.mxu0 0
      %1648 = vmatmul.mubr.bf16.gmra.mxu0 %v1610
      %v1649 = vpop.f32.mrf.mxu0
      %v1650 = vadd.f32 %v1595, %v1649
      %v1651 = vpop.f32.mrf.mxu0
      %v1652 = vpop.f32.mrf.mxu0
      %v1653 = vadd.f32 %v1595, %v1652
      %v1654 = vpop.f32.mrf.mxu0
      %1655 = vmatprep.mubr.bf16.mxu0 0
      %1656 = vmatmul.mubr.bf16.gmra.mxu0 %v1613
      %v1657 = vpop.f32.mrf.mxu0
      %v1658 = vadd.f32 %v1595, %v1657
      %v1659 = vpop.f32.mrf.mxu0
      %v1660 = vpop.f32.mrf.mxu0
      %v1661 = vpop.f32.mrf.mxu0
      %1662 = vdwg.mxu0
      %1663 = vst.msk [vmem:[#allocation3] sm:$0xff] %vm719, %v1650
      %1664 = vst.msk [vmem:[#allocation3 + $0x8] sm:$0xff] %vm719, %v1653
      %1665 = vst.msk [vmem:[#allocation3 + $0x10] sm:$0xff] %vm719, %v1658
      %v1666 = vld [vmem:[#allocation3] sm:$0xff]
      %v1667 = vld [vmem:[#allocation3 + $0x8] sm:$0xff]
      %v1668 = vld [vmem:[#allocation3 + $0x10] sm:$0xff]
      %v1669 = vadd.f32 %v714, %v1666
      %v1670 = vadd.f32 %v715, %v1667
      %v1671 = vadd.f32 %v716, %v1668
      %v1672 = vld [vmem:[%s676] sm:$0x1]
      %v1673 = vld [vmem:[%s679] sm:$0x1]
      %v1674 = vsel %vm719, %v1669, 0.0
      %1675 = vadd.xlane.f32.xlu0 %v1674
      %v1676 = vpop.xlane.xlu0 %1675
      %v1677 = vsel %vm719, %v1670, 0.0
      %1678 = vadd.xlane.f32.xlu0 %v1677
      %v1679 = vpop.xlane.xlu0 %1678
      %v1680 = vsel %vm719, %v1671, 0.0
      %1681 = vadd.xlane.f32.xlu0 %v1680
      %v1682 = vpop.xlane.xlu0 %1681
      %v1683 = vmul.f32 %v1676, %v729
      %v1684 = vmul.f32 %v1679, %v729
      %v1685 = vmul.f32 %v1682, %v729
      %v1686 = vsub.f32 %v1669, %v1683
      %v1687 = vsub.f32 %v1670, %v1684
      %v1688 = vsub.f32 %v1671, %v1685
      %v1689 = vmul.f32 %v1686, %v1686
      %v1690 = vmul.f32 %v1687, %v1687
      %v1691 = vmul.f32 %v1688, %v1688
      %v1692 = vsel %vm719, %v1689, 0.0
      %1693 = vadd.xlane.f32.xlu0 %v1692
      %v1694 = vpop.xlane.xlu0 %1693
      %v1695 = vsel %vm719, %v1690, 0.0
      %1696 = vadd.xlane.f32.xlu0 %v1695
      %v1697 = vpop.xlane.xlu0 %1696
      %v1698 = vsel %vm719, %v1691, 0.0
      %1699 = vadd.xlane.f32.xlu0 %v1698
      %v1700 = vpop.xlane.xlu0 %1699
      %v1701 = vmul.f32 %v1694, %v729
      %v1702 = vmul.f32 %v1697, %v729
      %v1703 = vmul.f32 %v1700, %v729
      %v1704 = vadd.f32 %v1701, 1e-05
      %v1705 = vadd.f32 %v1702, 1e-05
      %v1706 = vadd.f32 %v1703, 1e-05
      %v1707 = vrsqrt.pop %v1704
      %v1708 = vrsqrt.pop %v1705
      %v1709 = vrsqrt.pop %v1706
      %v1710 = vmul.f32 %v1686, %v1707
      %v1711 = vmul.f32 %v1687, %v1708
      %v1712 = vmul.f32 %v1688, %v1709
      %v1714 = vlaneseq
      %v1715 = vshrl.u32 %v1714, 7
      %v1716 = vsub.s32 0, %v1715
      %v1717 = vrot.slane %v1672, %v1716
      %v1719 = vmul.f32 %v1710, %v1717
      %v1720 = vmul.f32 %v1711, %v1717
      %v1721 = vmul.f32 %v1712, %v1717
      %v1723 = vlaneseq
      %v1724 = vshrl.u32 %v1723, 7
      %v1725 = vsub.s32 0, %v1724
      %v1726 = vrot.slane %v1673, %v1725
      %v1728 = vadd.f32 %v1719, %v1726
      %v1729 = vadd.f32 %v1720, %v1726
      %v1730 = vadd.f32 %v1721, %v1726
      %v1731 = vpack.c.bf16 %v1729, %v1728
      %v1732 = vpack.c.bf16 %v1730, %v1730
      %v1733 = vld [vmem:[%s684] sm:$0xf]
      %v1734 = vld [vmem:[%s684 + $0x4] sm:$0xf]
      %v1735 = vld [vmem:[%s684 + $0x8] sm:$0xf]
      %v1736 = vld [vmem:[%s684 + $0xc] sm:$0xf]
      %v1737 = vld [vmem:[%s687] sm:$0x1]
      %v1739 = vlaneseq
      %v1740 = vshrl.u32 %v1739, 7
      %v1741 = vsub.s32 0, %v1740
      %v1742 = vrot.slane %v1737, %v1741
      %v1748 = vunpack.c.l.b16 %v1733
      %v1749 = vunpack.c.l.b16 %v1734
      %v1750 = vunpack.c.l.b16 %v1735
      %v1751 = vunpack.c.l.b16 %v1736
      %v1752 = vpack.c.b16 %v1749, %v1748
      %v1753 = vpack.c.b16 %v1751, %v1750
      %v1757 = vsel %vm719, %v1731, 0
      %v1760 = vsel %vm719, %v1732, 0
      %1762 = vmatprep.subr.bf16.mxu0 0
      %1763 = vmatpush1.bf16.msra.mxu0 0
      %1764 = vmatprep.subr.bf16.mxu0 0
      %1765 = vmatpush1.bf16.msra.mxu0 0
      %1766 = vmatprep.subr.bf16.mxu0 0
      %1767 = vmatpush1.bf16.msra.mxu0 0
      %1768 = vmatprep.subr.bf16.mxu0 0
      %1769 = vmatpush1.bf16.msra.mxu0 0
      %1770 = vmatprep.subr.bf16.mxu0 0
      %1771 = vmatpush1.bf16.msra.mxu0 0
      %1772 = vmatprep.subr.bf16.mxu0 0
      %1773 = vmatpush1.bf16.msra.mxu0 0
      %1774 = vmatprep.subr.bf16.mxu0 0
      %1775 = vmatpush1.bf16.msra.mxu0 %v1753
      %1776 = vmatprep.subr.bf16.mxu0 0
      %1777 = vmatpush1.bf16.msra.mxu0 %v1752
      %1778 = vmatprep.subr.bf16.mxu0 0
      %1779 = vmatpush2.bf16.msra.mxu0 0
      %1780 = vmatprep.subr.bf16.mxu0 0
      %1781 = vmatpush2.bf16.msra.mxu0 0
      %1782 = vmatprep.subr.bf16.mxu0 0
      %1783 = vmatpush2.bf16.msra.mxu0 0
      %1784 = vmatprep.subr.bf16.mxu0 0
      %1785 = vmatpush2.bf16.msra.mxu0 0
      %1786 = vmatprep.subr.bf16.mxu0 0
      %1787 = vmatpush2.bf16.msra.mxu0 0
      %1788 = vmatprep.subr.bf16.mxu0 0
      %1789 = vmatpush2.bf16.msra.mxu0 0
      %1790 = vmatprep.subr.bf16.mxu0 0
      %1791 = vmatpush2.bf16.msra.mxu0 0
      %1792 = vmatprep.subr.bf16.mxu0 0
      %1793 = vmatpush2.bf16.msra.mxu0 0
      %1794 = vmatprep.mubr.bf16.mxu0 0
      %1795 = vmatmul.mubr.bf16.gmra.mxu0 %v1757
      %v1796 = vpop.f32.mrf.mxu0
      %v1797 = vadd.f32 %v1742, %v1796
      %v1798 = vpop.f32.mrf.mxu0
      %v1799 = vpop.f32.mrf.mxu0
      %v1800 = vadd.f32 %v1742, %v1799
      %v1801 = vpop.f32.mrf.mxu0
      %1802 = vmatprep.mubr.bf16.mxu0 0
      %1803 = vmatmul.mubr.bf16.gmra.mxu0 %v1760
      %v1804 = vpop.f32.mrf.mxu0
      %v1805 = vadd.f32 %v1742, %v1804
      %v1806 = vpop.f32.mrf.mxu0
      %v1807 = vpop.f32.mrf.mxu0
      %v1808 = vpop.f32.mrf.mxu0
      %1809 = vdwg.mxu0
      %v1810 = vmul.f32 %v1797, 1.702
      %v1811 = vmul.f32 %v1800, 1.702
      %v1812 = vmul.f32 %v1805, 1.702
      %v1813 = vxor.u32 %v1810, 2147483648
      %v1814 = vxor.u32 %v1811, 2147483648
      %v1815 = vxor.u32 %v1812, 2147483648
      %v1816 = vmul.f32 %v1813, 1.442695
      %v1817 = vpow.pop %v1816
      %v1818 = vmul.f32 %v1814, 1.442695
      %v1819 = vpow.pop %v1818
      %v1820 = vmul.f32 %v1815, 1.442695
      %v1821 = vpow.pop %v1820
      %v1822 = vadd.f32 %v1817, 1.0
      %v1823 = vadd.f32 %v1819, 1.0
      %v1824 = vadd.f32 %v1821, 1.0
      %v1825 = vrcp.pop %v1822
      %v1826 = vmul.f32 1.0, %v1825
      %v1827 = vrcp.pop %v1823
      %v1828 = vmul.f32 1.0, %v1827
      %v1829 = vrcp.pop %v1824
      %v1830 = vmul.f32 1.0, %v1829
      %v1831 = vmul.f32 %v1797, %v1826
      %v1832 = vmul.f32 %v1800, %v1828
      %v1833 = vmul.f32 %v1805, %v1830
      %v1834 = vpack.c.bf16 %v1832, %v1831
      %v1835 = vpack.c.bf16 %v1833, %v1833
      %v1836 = vld [vmem:[%s692] sm:$0xf]
      %v1837 = vld [vmem:[%s692 + $0x4] sm:$0xf]
      %v1838 = vld [vmem:[%s692 + $0x8] sm:$0xf]
      %v1839 = vld [vmem:[%s692 + $0xc] sm:$0xf]
      %v1840 = vld [vmem:[%s692 + $0x10] sm:$0xf]
      %v1841 = vld [vmem:[%s692 + $0x14] sm:$0xf]
      %v1842 = vld [vmem:[%s692 + $0x18] sm:$0xf]
      %v1843 = vld [vmem:[%s692 + $0x1c] sm:$0xf]
      %v1844 = vld [vmem:[%s692 + $0x20] sm:$0xf]
      %v1845 = vld [vmem:[%s692 + $0x24] sm:$0xf]
      %v1846 = vld [vmem:[%s692 + $0x28] sm:$0xf]
      %v1847 = vld [vmem:[%s692 + $0x2c] sm:$0xf]
      %v1848 = vld [vmem:[%s692 + $0x30] sm:$0xf]
      %v1849 = vld [vmem:[%s692 + $0x34] sm:$0xf]
      %v1850 = vld [vmem:[%s692 + $0x38] sm:$0xf]
      %v1851 = vld [vmem:[%s692 + $0x3c] sm:$0xf]
      %v1868 = vunpack.c.l.b16 %v1836
      %v1869 = vunpack.c.l.b16 %v1837
      %v1870 = vunpack.c.l.b16 %v1838
      %v1871 = vunpack.c.l.b16 %v1839
      %v1872 = vunpack.c.l.b16 %v1840
      %v1873 = vunpack.c.l.b16 %v1841
      %v1874 = vunpack.c.l.b16 %v1842
      %v1875 = vunpack.c.l.b16 %v1843
      %v1876 = vunpack.c.l.b16 %v1844
      %v1877 = vunpack.c.l.b16 %v1845
      %v1878 = vunpack.c.l.b16 %v1846
      %v1879 = vunpack.c.l.b16 %v1847
      %v1880 = vunpack.c.l.b16 %v1848
      %v1881 = vunpack.c.l.b16 %v1849
      %v1882 = vunpack.c.l.b16 %v1850
      %v1883 = vunpack.c.l.b16 %v1851
      %v1884 = vpack.c.b16 %v1869, %v1868
      %v1885 = vpack.c.b16 %v1871, %v1870
      %v1886 = vpack.c.b16 %v1873, %v1872
      %v1887 = vpack.c.b16 %v1875, %v1874
      %v1888 = vpack.c.b16 %v1877, %v1876
      %v1889 = vpack.c.b16 %v1879, %v1878
      %v1890 = vpack.c.b16 %v1881, %v1880
      %v1891 = vpack.c.b16 %v1883, %v1882
      %1900 = vmatprep.subr.bf16.mxu0 0
      %1901 = vmatpush1.bf16.msra.mxu0 %v1891
      %1902 = vmatprep.subr.bf16.mxu0 0
      %1903 = vmatpush1.bf16.msra.mxu0 %v1890
      %1904 = vmatprep.subr.bf16.mxu0 0
      %1905 = vmatpush1.bf16.msra.mxu0 %v1889
      %1906 = vmatprep.subr.bf16.mxu0 0
      %1907 = vmatpush1.bf16.msra.mxu0 %v1888
      %1908 = vmatprep.subr.bf16.mxu0 0
      %1909 = vmatpush1.bf16.msra.mxu0 %v1887
      %1910 = vmatprep.subr.bf16.mxu0 0
      %1911 = vmatpush1.bf16.msra.mxu0 %v1886
      %1912 = vmatprep.subr.bf16.mxu0 0
      %1913 = vmatpush1.bf16.msra.mxu0 %v1885
      %1914 = vmatprep.subr.bf16.mxu0 0
      %1915 = vmatpush1.bf16.msra.mxu0 %v1884
      %1916 = vmatprep.subr.bf16.mxu0 0
      %1917 = vmatpush2.bf16.msra.mxu0 0
      %1918 = vmatprep.subr.bf16.mxu0 0
      %1919 = vmatpush2.bf16.msra.mxu0 0
      %1920 = vmatprep.subr.bf16.mxu0 0
      %1921 = vmatpush2.bf16.msra.mxu0 0
      %1922 = vmatprep.subr.bf16.mxu0 0
      %1923 = vmatpush2.bf16.msra.mxu0 0
      %1924 = vmatprep.subr.bf16.mxu0 0
      %1925 = vmatpush2.bf16.msra.mxu0 0
      %1926 = vmatprep.subr.bf16.mxu0 0
      %1927 = vmatpush2.bf16.msra.mxu0 0
      %1928 = vmatprep.subr.bf16.mxu0 0
      %1929 = vmatpush2.bf16.msra.mxu0 0
      %1930 = vmatprep.subr.bf16.mxu0 0
      %1931 = vmatpush2.bf16.msra.mxu0 0
      %1932 = vmatprep.mubr.bf16.mxu0 0
      %1933 = vmatmul.mubr.bf16.gmra.mxu0 %v1834
      %v1934 = vpop.f32.mrf.mxu0
      %v1935 = vadd.f32 0.0, %v1934
      %v1936 = vpop.f32.mrf.mxu0
      %v1937 = vpop.f32.mrf.mxu0
      %v1938 = vadd.f32 0.0, %v1937
      %v1939 = vpop.f32.mrf.mxu0
      %1940 = vmatprep.mubr.bf16.mxu0 0
      %1941 = vmatmul.mubr.bf16.gmra.mxu0 %v1835
      %v1942 = vpop.f32.mrf.mxu0
      %v1943 = vadd.f32 0.0, %v1942
      %v1944 = vpop.f32.mrf.mxu0
      %v1945 = vpop.f32.mrf.mxu0
      %v1946 = vpop.f32.mrf.mxu0
      %1947 = vdwg.mxu0
      %v1948 = vadd.f32 %v1669, %v1935
      %v1949 = vadd.f32 %v1670, %v1938
      %v1950 = vadd.f32 %v1671, %v1943
      %v1951 = vld [vmem:[%s695] sm:$0x1]
      %v1953 = vlaneseq
      %v1954 = vshrl.u32 %v1953, 7
      %v1955 = vsub.s32 0, %v1954
      %v1956 = vrot.slane %v1951, %v1955
      %v1958 = vadd.f32 %v1948, %v1956
      %v1959 = vadd.f32 %v1949, %v1956
      %v1960 = vadd.f32 %v1950, %v1956
      %p1961 = scmp.lt.s32.totalorder %s31, 1
      // Predicated region
      $region85: #{visual_transformer_forward.3} parent=79 // pred_check
        %p1962 = pneg %p1961
      $region86: #{visual_transformer_forward.3} parent=79 // pred_check_branch
        %1964 = sbr.rel (%p1962) target = $region88
      $region87: #{visual_transformer_forward.3} parent=79 // pred_region
        %1965 = vst.msk [vmem:[%s700] sm:$0xff] %vm719, %v1958
        %1966 = vst.msk [vmem:[%s700 + $0x8] sm:$0xff] %vm719, %v1959
        %1967 = vst.msk [vmem:[%s700 + $0x10] sm:$0xff] %vm719, %v1960
      $region88: #{visual_transformer_forward.3} parent=79 // pred_fallthru
        _
      %p1968 = scmp.eq.s32.totalorder %s31, 1
      // Predicated region
      $region89: #{visual_transformer_forward.3} parent=79 // pred_check
        %p1969 = pneg %p1968
      $region90: #{visual_transformer_forward.3} parent=79 // pred_check_branch
        %1971 = sbr.rel (%p1969) target = $region92
      $region91: #{visual_transformer_forward.3} parent=79 // pred_region
        %v1972 = vld [vmem:[%s13] sm:$0x1]
        %v1973 = vld [vmem:[%s14] sm:$0x1]
        %v1974 = vsel %vm719, %v1958, 0.0
        %1975 = vadd.xlane.f32.xlu0 %v1974
        %v1976 = vpop.xlane.xlu0 %1975
        %v1977 = vsel %vm719, %v1959, 0.0
        %1978 = vadd.xlane.f32.xlu0 %v1977
        %v1979 = vpop.xlane.xlu0 %1978
        %v1980 = vsel %vm719, %v1960, 0.0
        %1981 = vadd.xlane.f32.xlu0 %v1980
        %v1982 = vpop.xlane.xlu0 %1981
        %v1983 = vmul.f32 %v1976, %v729
        %v1984 = vmul.f32 %v1979, %v729
        %v1985 = vmul.f32 %v1982, %v729
        %v1986 = vsub.f32 %v1958, %v1983
        %v1987 = vsub.f32 %v1959, %v1984
        %v1988 = vsub.f32 %v1960, %v1985
        %v1989 = vmul.f32 %v1986, %v1986
        %v1990 = vmul.f32 %v1987, %v1987
        %v1991 = vmul.f32 %v1988, %v1988
        %v1992 = vsel %vm719, %v1989, 0.0
        %1993 = vadd.xlane.f32.xlu0 %v1992
        %v1994 = vpop.xlane.xlu0 %1993
        %v1995 = vsel %vm719, %v1990, 0.0
        %1996 = vadd.xlane.f32.xlu0 %v1995
        %v1997 = vpop.xlane.xlu0 %1996
        %v1998 = vsel %vm719, %v1991, 0.0
        %1999 = vadd.xlane.f32.xlu0 %v1998
        %v2000 = vpop.xlane.xlu0 %1999
        %v2001 = vmul.f32 %v1994, %v729
        %v2002 = vmul.f32 %v1997, %v729
        %v2003 = vmul.f32 %v2000, %v729
        %v2004 = vadd.f32 %v2001, 1e-05
        %v2005 = vadd.f32 %v2002, 1e-05
        %v2006 = vadd.f32 %v2003, 1e-05
        %v2007 = vrsqrt.pop %v2004
        %v2008 = vrsqrt.pop %v2005
        %v2009 = vrsqrt.pop %v2006
        %v2010 = vmul.f32 %v1986, %v2007
        %v2011 = vmul.f32 %v1987, %v2008
        %v2012 = vmul.f32 %v1988, %v2009
        %v2014 = vlaneseq
        %v2015 = vshrl.u32 %v2014, 7
        %v2016 = vsub.s32 0, %v2015
        %v2017 = vrot.slane %v1972, %v2016
        %v2019 = vmul.f32 %v2010, %v2017
        %v2020 = vmul.f32 %v2011, %v2017
        %v2021 = vmul.f32 %v2012, %v2017
        %v2023 = vlaneseq
        %v2024 = vshrl.u32 %v2023, 7
        %v2025 = vsub.s32 0, %v2024
        %v2026 = vrot.slane %v1973, %v2025
        %v2028 = vadd.f32 %v2019, %v2026
        %v2029 = vadd.f32 %v2020, %v2026
        %v2030 = vadd.f32 %v2021, %v2026
        %2031 = vst.msk [vmem:[%s700] sm:$0xff] %vm719, %v2028
        %2032 = vst.msk [vmem:[%s700 + $0x8] sm:$0xff] %vm719, %v2029
        %2033 = vst.msk [vmem:[%s700 + $0x10] sm:$0xff] %vm719, %v2030
      $region92: #{visual_transformer_forward.3} parent=79 // pred_fallthru
        _
      %s2034 = smul.u32 3, %s30
      %p2035 = scmp.lt.s32.totalorder %s2034, 5
      %s2036 = scalar_select %p2035, %s2034, 5
      %s2037 = smul.addr %s2036, 8
      %s2038 = scalar_lea.vmem %s15, %s2037
      // Predicated region
      $region93: #{visual_transformer_forward.3} parent=79 // pred_check
        %p2039 = pneg %p436
      $region94: #{visual_transformer_forward.3} parent=79 // pred_check_branch
        %2041 = sbr.rel (%p2039) target = $region96
      $region95: #{visual_transformer_forward.3} parent=79 // pred_region
        %s2042 = smul.u32 3, %s30
      $region96: #{visual_transformer_forward.3} parent=79 // pred_fallthru
        _
    $region80: #{visual_transformer_forward.3} parent=5 // pred_fallthru
      _
    %p2043 = scmp.le.s32.totalorder 2, %s21
    // Predicated region
    $region97: #{visual_transformer_forward.3} parent=5 // pred_check
      %p2044 = pneg %p2043
    $region98: #{visual_transformer_forward.3} parent=5 // pred_check_branch
      %2046 = sbr.rel (%p2044) target = $region100
    $region99: #{visual_transformer_forward.3} parent=5 // pred_region
      %s2047 = ssub.s32 %s21, 2
      // Predicated region
      $region101: #{visual_transformer_forward.3} parent=99 // pred_check
        %p2048 = pneg %p442
      $region102: #{visual_transformer_forward.3} parent=99 // pred_check_branch
        %2050 = sbr.rel (%p2048) target = $region104
      $region103: #{visual_transformer_forward.3} parent=99 // pred_region
        %s2051 = smul.u32 3, %s32
        %p2052 = scmp.lt.s32.totalorder %s2051, 5
        %s2053 = scalar_select %p2052, %s2051, 5
        %s2054 = smul.addr %s2053, 8
        %s2055 = scalar_lea.vmem %s15, %s2054
      $region104: #{visual_transformer_forward.3} parent=99 // pred_fallthru
        _
    $region100: #{visual_transformer_forward.3} parent=5 // pred_fallthru
      _
  $region6: #{visual_transformer_forward.3} parent=0 // loop_footer
    %s25 = sadd.s32 1, %s21
  $region7: #{visual_transformer_forward.3} parent=0 // loop_footer_branch
    %20 = sbr.rel target = $region3
  $region8: #{visual_transformer_forward.3} parent=0 // loop_exit
    _

</llo_original>
